<compile_context>
chip_gen: v7x
topology: tpu7x:2x2x1
jax: 0.10.0
libtpu: 0.0.40
codegen_flags: <defaults>
</compile_context>

<pallas_src>
import functools
import numpy as np

import jax
import jax.numpy as jnp
from jax.experimental import pallas as pl
from jax.experimental.pallas import tpu as pltpu

EPS = 1e-5


def _layernorm(x, w, b):
    # x: (S, E) f32, w/b: (1, E) f32
    mu = jnp.mean(x, axis=-1, keepdims=True)
    var = jnp.mean((x - mu) ** 2, axis=-1, keepdims=True)
    return (x - mu) * jax.lax.rsqrt(var + EPS) * w + b


def _mha(q_all, k_all, v_all, wo_hr, bo, heads, hd):
    """Head-batched scaled-dot-product attention + fused out-projection.

    q_all: (Sq, E) bf16 (1/sqrt(hd) already folded into the Q projection),
    k_all/v_all: (Sk, E) bf16, head h occupies columns [h*hd, (h+1)*hd).
    wo_hr: (heads, hd, E) bf16 out-proj weight, bo: (1, E) f32 out-proj bias.
    Returns (Sq, E) f32.
    """
    # (heads, S, hd) head-major operands (lane slices + leading-dim stack).
    q = jnp.stack([q_all[:, h * hd:(h + 1) * hd] for h in range(heads)], axis=0)
    k = jnp.stack([k_all[:, h * hd:(h + 1) * hd] for h in range(heads)], axis=0)
    v = jnp.stack([v_all[:, h * hd:(h + 1) * hd] for h in range(heads)], axis=0)

    # scores: (heads, Sq, Sk), f32 accumulation on the MXU
    s = jax.lax.dot_general(q, k, (((2,), (2,)), ((0,), (0,))),
                            preferred_element_type=jnp.float32)
    s = s - jnp.max(s, axis=-1, keepdims=True)
    p = jnp.exp(s)
    p = p * pl.reciprocal(jnp.sum(p, axis=-1, keepdims=True), approx=True)

    # P @ V: (heads, Sq, hd)
    o = jax.lax.dot_general(p.astype(jnp.bfloat16), v, (((2,), (1,)), ((0,), (0,))),
                            preferred_element_type=jnp.float32)

    # fused combine_heads + out_proj: batched dot against (heads, hd, E), then
    # reduce the head axis -> lane-dense (Sq, E) result.
    ctx = jax.lax.dot_general(o.astype(jnp.bfloat16), wo_hr, (((2,), (1,)), ((0,), (0,))),
                              preferred_element_type=jnp.float32)   # (heads, Sq, E)
    return jnp.sum(ctx, axis=0) + bo


# ---------------------------------------------------------------------------
# Fused decoder-layer kernel (one batch element per grid step)
# ---------------------------------------------------------------------------
def decoder_layer_kernel(x_ref, mem_ref,
                         ln1w, ln1b, w_in, b_in, wo1, bo1,
                         ln2w, ln2b, wq, bq, wkv, bkv, wo2, bo2,
                         ln3w, ln3b, wf1, bf1, wf2, bf2,
                         o_ref, *, heads):
    x = x_ref[0]            # (Sx, E) f32
    mem = mem_ref[0]        # (Sm, E) f32
    E = x.shape[-1]
    hd = E // heads

    # ---- self-attention sublayer ----
    y = _layernorm(x, ln1w[...], ln1b[...])
    proj = (jnp.dot(y.astype(jnp.bfloat16), w_in[...],
                    preferred_element_type=jnp.float32)
            + b_in[...]).astype(jnp.bfloat16)                    # (Sx, 3E)
    attn = _mha(proj[:, :E], proj[:, E:2 * E], proj[:, 2 * E:],
                wo1[...], bo1[...], heads, hd)
    x = x + attn                                   # residual (dropout == identity)

    # ---- cross-attention sublayer ----
    y = _layernorm(x, ln2w[...], ln2b[...])
    qp = (jnp.dot(y.astype(jnp.bfloat16), wq[...],
                  preferred_element_type=jnp.float32) + bq[...]).astype(jnp.bfloat16)
    kvp = (jnp.dot(mem.astype(jnp.bfloat16), wkv[...],
                   preferred_element_type=jnp.float32) + bkv[...]).astype(jnp.bfloat16)
    attn = _mha(qp, kvp[:, :E], kvp[:, E:], wo2[...], bo2[...], heads, hd)
    x = x + attn

    # ---- feed-forward sublayer ----
    y = _layernorm(x, ln3w[...], ln3b[...])
    h1 = jnp.dot(y.astype(jnp.bfloat16), wf1[...],
                 preferred_element_type=jnp.float32) + bf1[...]
    h1 = jnp.maximum(h1, 0.0)                      # ReLU
    h2 = jnp.dot(h1.astype(jnp.bfloat16), wf2[...],
                 preferred_element_type=jnp.float32) + bf2[...]
    o_ref[0] = x + h2


# ---------------------------------------------------------------------------
# One-time parameter preparation (hoisted out of the per-call path)
# ---------------------------------------------------------------------------
_MATMUL_WEIGHT_IDX = (2, 4, 8, 10, 12, 16, 18)   # matmul weight matrices -> bf16


def prepare_params(params, heads):
    """Fold 1/sqrt(hd) into the Q projections, reshape the attention out-proj
    weights to (heads, hd, E), and cast matmul weight matrices to bf16."""
    p = list(params)
    E = p[2].shape[0]
    hd = E // heads
    scale = 1.0 / float(np.sqrt(hd))
    # self-attn in_proj: scale the Q columns (first E of 3E) of weight and bias
    p[2] = p[2].at[:, :E].multiply(scale)
    p[3] = p[3].at[:, :E].multiply(scale)
    # cross-attn query_proj
    p[8] = p[8] * scale
    p[9] = p[9] * scale
    # out_proj weights -> (heads, hd, E) for the fused head contraction
    p[4] = p[4].reshape(heads, hd, E)
    p[12] = p[12].reshape(heads, hd, E)
    # bf16 matmul operands (f32 accumulation via preferred_element_type)
    for i in _MATMUL_WEIGHT_IDX:
        p[i] = p[i].astype(jnp.bfloat16)
    return tuple(p)


def _vmem_spec():
    # whole (unblocked) parameter array, resident in VMEM for every grid step
    return pl.BlockSpec(memory_space=pltpu.MemorySpace.VMEM)


def run_decoder_layer(x, memory, prepared_params, heads):
    B, Sx, E = x.shape
    Sm = memory.shape[1]
    in_specs = [pl.BlockSpec((1, Sx, E), lambda b: (b, 0, 0)),
                pl.BlockSpec((1, Sm, E), lambda b: (b, 0, 0))]
    in_specs += [_vmem_spec()] * len(prepared_params)
    return pl.pallas_call(
        functools.partial(decoder_layer_kernel, heads=heads),
        out_shape=jax.ShapeDtypeStruct((B, Sx, E), jnp.float32),
        grid=(B,),
        in_specs=in_specs,
        out_specs=pl.BlockSpec((1, Sx, E), lambda b: (b, 0, 0)),
        compiler_params=pltpu.CompilerParams(
            dimension_semantics=("parallel",),
            vmem_limit_bytes=16 * 1024 * 1024),
    )(x, memory, *prepared_params)


# ---------------------------------------------------------------------------
# Pure-JAX (f32) reference mirroring the PyTorch module
# ---------------------------------------------------------------------------
def ref_decoder_layer(x, memory, p, heads):
    (ln1w, ln1b, w_in, b_in, wo1, bo1,
     ln2w, ln2b, wq, bq, wkv, bkv, wo2, bo2,
     ln3w, ln3b, wf1, bf1, wf2, bf2) = p
    B, Sx, E = x.shape
    hd = E // heads

    def ln(t, w, b):
        mu = t.mean(-1, keepdims=True)
        var = ((t - mu) ** 2).mean(-1, keepdims=True)
        return (t - mu) / jnp.sqrt(var + EPS) * w[0] + b[0]

    def mha(q_all, k_all, v_all):
        Sq, Sk = q_all.shape[1], k_all.shape[1]
        q = q_all.reshape(B, Sq, heads, hd).transpose(0, 2, 1, 3)
        k = k_all.reshape(B, Sk, heads, hd).transpose(0, 2, 1, 3)
        v = v_all.reshape(B, Sk, heads, hd).transpose(0, 2, 1, 3)
        s = jnp.einsum("bhqd,bhkd->bhqk", q, k) / np.sqrt(hd)
        pr = jax.nn.softmax(s, axis=-1)
        o = jnp.einsum("bhqk,bhkd->bhqd", pr, v)
        return o.transpose(0, 2, 1, 3).reshape(B, Sq, E)

    # self-attention
    y = ln(x, ln1w, ln1b)
    proj = y @ w_in + b_in[0]
    x = x + (mha(proj[..., :E], proj[..., E:2 * E], proj[..., 2 * E:]) @ wo1 + bo1[0])
    # cross-attention
    y = ln(x, ln2w, ln2b)
    qp = y @ wq + bq[0]
    kvp = memory @ wkv + bkv[0]
    x = x + (mha(qp, kvp[..., :E], kvp[..., E:]) @ wo2 + bo2[0])
    # feed-forward
    y = ln(x, ln3w, ln3b)
    h1 = jnp.maximum(y @ wf1 + bf1[0], 0.0)
    x = x + (h1 @ wf2 + bf2[0])
    return x


# ---------------------------------------------------------------------------
# Deterministic parameter init (f32 masters; prepare_params makes kernel copies)
# Linear weights are stored pre-transposed as (in_dim, out_dim).
# ---------------------------------------------------------------------------
def init_params(key, E, F):
    ks = jax.random.split(key, 20)
    se = 1.0 / np.sqrt(E)
    sf = 1.0 / np.sqrt(F)

    def n(i, shape, s):
        return jax.random.normal(ks[i], shape, jnp.float32) * s

    return (
        1.0 + 0.1 * n(0, (1, E), 1.0),   # 0  ln1 weight
        0.05 * n(1, (1, E), 1.0),        # 1  ln1 bias
        n(2, (E, 3 * E), se),            # 2  self-attn in_proj W^T
        0.02 * n(3, (1, 3 * E), 1.0),    # 3  self-attn in_proj b
        n(4, (E, E), se),                # 4  self-attn out_proj W^T
        0.02 * n(5, (1, E), 1.0),        # 5  self-attn out_proj b
        1.0 + 0.1 * n(6, (1, E), 1.0),   # 6  ln2 weight
        0.05 * n(7, (1, E), 1.0),        # 7  ln2 bias
        n(8, (E, E), se),                # 8  cross-attn query_proj W^T
        0.02 * n(9, (1, E), 1.0),        # 9  cross-attn query_proj b
        n(10, (E, 2 * E), se),           # 10 cross-attn value_proj W^T (K|V)
        0.02 * n(11, (1, 2 * E), 1.0),   # 11 cross-attn value_proj b
        n(12, (E, E), se),               # 12 cross-attn out_proj W^T
        0.02 * n(13, (1, E), 1.0),       # 13 cross-attn out_proj b
        1.0 + 0.1 * n(14, (1, E), 1.0),  # 14 ln3 weight
        0.05 * n(15, (1, E), 1.0),       # 15 ln3 bias
        n(16, (E, F), se),               # 16 ffn inner W^T
        0.02 * n(17, (1, F), 1.0),       # 17 ffn inner b
        n(18, (F, E), sf),               # 18 ffn outer W^T
        0.02 * n(19, (1, E), 1.0),       # 19 ffn outer b
    )


if __name__ == "__main__":
    # small, lane-dense shapes: batch=2, tgt seq=16, memory seq=32,
    # embed=128, ffn=256, heads=4 (head_dim=32)
    B, SX, SM, E, F, HEADS = 2, 16, 32, 128, 256, 4

    key = jax.random.PRNGKey(0)
    key, kx, km = jax.random.split(key, 3)
    x = jax.random.normal(kx, (B, SX, E), jnp.float32)
    memory = jax.random.normal(km, (B, SM, E), jnp.float32)

    params = init_params(key, E, F)
    prepped = prepare_params(params, HEADS)        # one-time weight prep (bf16 etc.)

    run = jax.jit(functools.partial(run_decoder_layer, heads=HEADS))
    out = run(x, memory, prepped)
    out = jax.block_until_ready(out)

    ref = ref_decoder_layer(x, memory, params, HEADS)
    # bf16 matmul inputs with f32 accumulation -> slightly looser tolerance
    np.testing.assert_allclose(np.asarray(out), np.asarray(ref), atol=3e-2, rtol=3e-2)

    print("KERNEL_OK")
</pallas_src>

<mosaic_0001>
module attributes {stable_mosaic.version = 11 : i64} {
  func.func @decoder_layer_kernel(%arg0: i32, %arg1: memref<1x16x128xf32, #tpu.memory_space<vmem>>, %arg2: memref<1x32x128xf32, #tpu.memory_space<vmem>>, %arg3: memref<1x128xf32, #tpu.memory_space<vmem>>, %arg4: memref<1x128xf32, #tpu.memory_space<vmem>>, %arg5: memref<128x384xbf16, #tpu.memory_space<vmem>>, %arg6: memref<1x384xf32, #tpu.memory_space<vmem>>, %arg7: memref<4x32x128xbf16, #tpu.memory_space<vmem>>, %arg8: memref<1x128xf32, #tpu.memory_space<vmem>>, %arg9: memref<1x128xf32, #tpu.memory_space<vmem>>, %arg10: memref<1x128xf32, #tpu.memory_space<vmem>>, %arg11: memref<128x128xbf16, #tpu.memory_space<vmem>>, %arg12: memref<1x128xf32, #tpu.memory_space<vmem>>, %arg13: memref<128x256xbf16, #tpu.memory_space<vmem>>, %arg14: memref<1x256xf32, #tpu.memory_space<vmem>>, %arg15: memref<4x32x128xbf16, #tpu.memory_space<vmem>>, %arg16: memref<1x128xf32, #tpu.memory_space<vmem>>, %arg17: memref<1x128xf32, #tpu.memory_space<vmem>>, %arg18: memref<1x128xf32, #tpu.memory_space<vmem>>, %arg19: memref<128x256xbf16, #tpu.memory_space<vmem>>, %arg20: memref<1x256xf32, #tpu.memory_space<vmem>>, %arg21: memref<256x128xbf16, #tpu.memory_space<vmem>>, %arg22: memref<1x128xf32, #tpu.memory_space<vmem>>, %arg23: memref<1x16x128xf32, #tpu.memory_space<vmem>>) attributes {dimension_semantics = [#tpu.dimension_semantics<parallel>], iteration_bounds = array<i64: 2>, scalar_prefetch = 0 : i64, scratch_operands = 0 : i64, tpu.core_type = #tpu.core_type<tc>, window_params = [{transform_indices = @transform_0, window_bounds = array<i64: 1, 16, 128>}, {transform_indices = @transform_1, window_bounds = array<i64: 1, 32, 128>}, {pipeline_mode = #tpu.pipeline_mode<synchronous>, transform_indices = @transform_2, window_bounds = array<i64: 1, 128>}, {pipeline_mode = #tpu.pipeline_mode<synchronous>, transform_indices = @transform_3, window_bounds = array<i64: 1, 128>}, {pipeline_mode = #tpu.pipeline_mode<synchronous>, transform_indices = @transform_4, window_bounds = array<i64: 128, 384>}, {pipeline_mode = #tpu.pipeline_mode<synchronous>, transform_indices = @transform_5, window_bounds = array<i64: 1, 384>}, {pipeline_mode = #tpu.pipeline_mode<synchronous>, transform_indices = @transform_6, window_bounds = array<i64: 4, 32, 128>}, {pipeline_mode = #tpu.pipeline_mode<synchronous>, transform_indices = @transform_7, window_bounds = array<i64: 1, 128>}, {pipeline_mode = #tpu.pipeline_mode<synchronous>, transform_indices = @transform_8, window_bounds = array<i64: 1, 128>}, {pipeline_mode = #tpu.pipeline_mode<synchronous>, transform_indices = @transform_9, window_bounds = array<i64: 1, 128>}, {pipeline_mode = #tpu.pipeline_mode<synchronous>, transform_indices = @transform_10, window_bounds = array<i64: 128, 128>}, {pipeline_mode = #tpu.pipeline_mode<synchronous>, transform_indices = @transform_11, window_bounds = array<i64: 1, 128>}, {pipeline_mode = #tpu.pipeline_mode<synchronous>, transform_indices = @transform_12, window_bounds = array<i64: 128, 256>}, {pipeline_mode = #tpu.pipeline_mode<synchronous>, transform_indices = @transform_13, window_bounds = array<i64: 1, 256>}, {pipeline_mode = #tpu.pipeline_mode<synchronous>, transform_indices = @transform_14, window_bounds = array<i64: 4, 32, 128>}, {pipeline_mode = #tpu.pipeline_mode<synchronous>, transform_indices = @transform_15, window_bounds = array<i64: 1, 128>}, {pipeline_mode = #tpu.pipeline_mode<synchronous>, transform_indices = @transform_16, window_bounds = array<i64: 1, 128>}, {pipeline_mode = #tpu.pipeline_mode<synchronous>, transform_indices = @transform_17, window_bounds = array<i64: 1, 128>}, {pipeline_mode = #tpu.pipeline_mode<synchronous>, transform_indices = @transform_18, window_bounds = array<i64: 128, 256>}, {pipeline_mode = #tpu.pipeline_mode<synchronous>, transform_indices = @transform_19, window_bounds = array<i64: 1, 256>}, {pipeline_mode = #tpu.pipeline_mode<synchronous>, transform_indices = @transform_20, window_bounds = array<i64: 256, 128>}, {pipeline_mode = #tpu.pipeline_mode<synchronous>, transform_indices = @transform_21, window_bounds = array<i64: 1, 128>}, {transform_indices = @transform_22, window_bounds = array<i64: 1, 16, 128>}]} {
    %c0 = arith.constant 0 : index
    %c0_0 = arith.constant 0 : index
    %c0_1 = arith.constant 0 : index
    %0 = vector.load %arg1[%c0, %c0_0, %c0_1] : memref<1x16x128xf32, #tpu.memory_space<vmem>>, vector<1x16x128xf32>
    %1 = vector.shape_cast %0 : vector<1x16x128xf32> to vector<16x128xf32>
    %c0_2 = arith.constant 0 : index
    %c0_3 = arith.constant 0 : index
    %c0_4 = arith.constant 0 : index
    %2 = vector.load %arg2[%c0_2, %c0_3, %c0_4] : memref<1x32x128xf32, #tpu.memory_space<vmem>>, vector<1x32x128xf32>
    %3 = vector.shape_cast %2 : vector<1x32x128xf32> to vector<32x128xf32>
    %c0_5 = arith.constant 0 : index
    %c0_6 = arith.constant 0 : index
    %4 = vector.load %arg3[%c0_5, %c0_6] : memref<1x128xf32, #tpu.memory_space<vmem>>, vector<1x128xf32>
    %c0_7 = arith.constant 0 : index
    %c0_8 = arith.constant 0 : index
    %5 = vector.load %arg4[%c0_7, %c0_8] : memref<1x128xf32, #tpu.memory_space<vmem>>, vector<1x128xf32>
    %cst = arith.constant dense<0.000000e+00> : vector<16xf32>
    %6 = vector.multi_reduction <add>, %1, %cst [1] : vector<16x128xf32> to vector<16xf32>
    %7 = vector.shape_cast %6 : vector<16xf32> to vector<16x1xf32>
    %cst_9 = arith.constant 1.280000e+02 : f32
    %8 = vector.broadcast %cst_9 : f32 to vector<16x1xf32>
    %9 = arith.divf %7, %8 : vector<16x1xf32>
    %10 = vector.broadcast %9 : vector<16x1xf32> to vector<16x128xf32>
    %11 = arith.subf %1, %10 : vector<16x128xf32>
    %12 = arith.mulf %11, %11 : vector<16x128xf32>
    %cst_10 = arith.constant dense<0.000000e+00> : vector<16xf32>
    %13 = vector.multi_reduction <add>, %12, %cst_10 [1] : vector<16x128xf32> to vector<16xf32>
    %14 = vector.shape_cast %13 : vector<16xf32> to vector<16x1xf32>
    %cst_11 = arith.constant 1.280000e+02 : f32
    %15 = vector.broadcast %cst_11 : f32 to vector<16x1xf32>
    %16 = arith.divf %14, %15 : vector<16x1xf32>
    %17 = vector.broadcast %9 : vector<16x1xf32> to vector<16x128xf32>
    %18 = arith.subf %1, %17 : vector<16x128xf32>
    %cst_12 = arith.constant 9.99999974E-6 : f32
    %19 = vector.broadcast %cst_12 : f32 to vector<16x1xf32>
    %20 = arith.addf %16, %19 : vector<16x1xf32>
    %21 = math.rsqrt %20 : vector<16x1xf32>
    %22 = vector.broadcast %21 : vector<16x1xf32> to vector<16x128xf32>
    %23 = arith.mulf %18, %22 : vector<16x128xf32>
    %24 = vector.broadcast %4 : vector<1x128xf32> to vector<16x128xf32>
    %25 = arith.mulf %23, %24 : vector<16x128xf32>
    %26 = vector.broadcast %5 : vector<1x128xf32> to vector<16x128xf32>
    %27 = arith.addf %25, %26 : vector<16x128xf32>
    %28 = arith.truncf %27 : vector<16x128xf32> to vector<16x128xbf16>
    %c0_13 = arith.constant 0 : index
    %c0_14 = arith.constant 0 : index
    %29 = vector.load %arg5[%c0_13, %c0_14] : memref<128x384xbf16, #tpu.memory_space<vmem>>, vector<128x384xbf16>
    %cst_15 = arith.constant dense<0.000000e+00> : vector<16x384xf32>
    %30 = tpu.matmul %28, %29, %cst_15 {dimension_numbers = #tpu.dot_dimension_numbers<[1], [0], [0], [1], [0, 0, 1, 1], [], []>} : vector<16x128xbf16>, vector<128x384xbf16>, vector<16x384xf32> -> vector<16x384xf32>
    %c0_16 = arith.constant 0 : index
    %c0_17 = arith.constant 0 : index
    %31 = vector.load %arg6[%c0_16, %c0_17] : memref<1x384xf32, #tpu.memory_space<vmem>>, vector<1x384xf32>
    %32 = vector.broadcast %31 : vector<1x384xf32> to vector<16x384xf32>
    %33 = arith.addf %30, %32 : vector<16x384xf32>
    %34 = arith.truncf %33 : vector<16x384xf32> to vector<16x384xbf16>
    %35 = vector.extract_strided_slice %34 {offsets = [0, 0], sizes = [16, 128], strides = [1, 1]} : vector<16x384xbf16> to vector<16x128xbf16>
    %36 = vector.extract_strided_slice %34 {offsets = [0, 128], sizes = [16, 128], strides = [1, 1]} : vector<16x384xbf16> to vector<16x128xbf16>
    %37 = vector.extract_strided_slice %34 {offsets = [0, 256], sizes = [16, 128], strides = [1, 1]} : vector<16x384xbf16> to vector<16x128xbf16>
    %c0_18 = arith.constant 0 : index
    %c0_19 = arith.constant 0 : index
    %c0_20 = arith.constant 0 : index
    %38 = vector.load %arg7[%c0_18, %c0_19, %c0_20] : memref<4x32x128xbf16, #tpu.memory_space<vmem>>, vector<4x32x128xbf16>
    %c0_21 = arith.constant 0 : index
    %c0_22 = arith.constant 0 : index
    %39 = vector.load %arg8[%c0_21, %c0_22] : memref<1x128xf32, #tpu.memory_space<vmem>>, vector<1x128xf32>
    %40 = vector.extract_strided_slice %35 {offsets = [0, 0], sizes = [16, 32], strides = [1, 1]} : vector<16x128xbf16> to vector<16x32xbf16>
    %41 = vector.extract_strided_slice %35 {offsets = [0, 32], sizes = [16, 32], strides = [1, 1]} : vector<16x128xbf16> to vector<16x32xbf16>
    %42 = vector.extract_strided_slice %35 {offsets = [0, 64], sizes = [16, 32], strides = [1, 1]} : vector<16x128xbf16> to vector<16x32xbf16>
    %43 = vector.extract_strided_slice %35 {offsets = [0, 96], sizes = [16, 32], strides = [1, 1]} : vector<16x128xbf16> to vector<16x32xbf16>
    %44 = vector.shape_cast %40 : vector<16x32xbf16> to vector<1x16x32xbf16>
    %45 = vector.shape_cast %41 : vector<16x32xbf16> to vector<1x16x32xbf16>
    %46 = vector.shape_cast %42 : vector<16x32xbf16> to vector<1x16x32xbf16>
    %47 = vector.shape_cast %43 : vector<16x32xbf16> to vector<1x16x32xbf16>
    %48 = tpu.concatenate %44, %45, %46, %47 in 0 : vector<1x16x32xbf16>, vector<1x16x32xbf16>, vector<1x16x32xbf16>, vector<1x16x32xbf16> -> vector<4x16x32xbf16>
    %49 = vector.extract_strided_slice %36 {offsets = [0, 0], sizes = [16, 32], strides = [1, 1]} : vector<16x128xbf16> to vector<16x32xbf16>
    %50 = vector.extract_strided_slice %36 {offsets = [0, 32], sizes = [16, 32], strides = [1, 1]} : vector<16x128xbf16> to vector<16x32xbf16>
    %51 = vector.extract_strided_slice %36 {offsets = [0, 64], sizes = [16, 32], strides = [1, 1]} : vector<16x128xbf16> to vector<16x32xbf16>
    %52 = vector.extract_strided_slice %36 {offsets = [0, 96], sizes = [16, 32], strides = [1, 1]} : vector<16x128xbf16> to vector<16x32xbf16>
    %53 = vector.shape_cast %49 : vector<16x32xbf16> to vector<1x16x32xbf16>
    %54 = vector.shape_cast %50 : vector<16x32xbf16> to vector<1x16x32xbf16>
    %55 = vector.shape_cast %51 : vector<16x32xbf16> to vector<1x16x32xbf16>
    %56 = vector.shape_cast %52 : vector<16x32xbf16> to vector<1x16x32xbf16>
    %57 = tpu.concatenate %53, %54, %55, %56 in 0 : vector<1x16x32xbf16>, vector<1x16x32xbf16>, vector<1x16x32xbf16>, vector<1x16x32xbf16> -> vector<4x16x32xbf16>
    %58 = vector.extract_strided_slice %37 {offsets = [0, 0], sizes = [16, 32], strides = [1, 1]} : vector<16x128xbf16> to vector<16x32xbf16>
    %59 = vector.extract_strided_slice %37 {offsets = [0, 32], sizes = [16, 32], strides = [1, 1]} : vector<16x128xbf16> to vector<16x32xbf16>
    %60 = vector.extract_strided_slice %37 {offsets = [0, 64], sizes = [16, 32], strides = [1, 1]} : vector<16x128xbf16> to vector<16x32xbf16>
    %61 = vector.extract_strided_slice %37 {offsets = [0, 96], sizes = [16, 32], strides = [1, 1]} : vector<16x128xbf16> to vector<16x32xbf16>
    %62 = vector.shape_cast %58 : vector<16x32xbf16> to vector<1x16x32xbf16>
    %63 = vector.shape_cast %59 : vector<16x32xbf16> to vector<1x16x32xbf16>
    %64 = vector.shape_cast %60 : vector<16x32xbf16> to vector<1x16x32xbf16>
    %65 = vector.shape_cast %61 : vector<16x32xbf16> to vector<1x16x32xbf16>
    %66 = tpu.concatenate %62, %63, %64, %65 in 0 : vector<1x16x32xbf16>, vector<1x16x32xbf16>, vector<1x16x32xbf16>, vector<1x16x32xbf16> -> vector<4x16x32xbf16>
    %cst_23 = arith.constant dense<0.000000e+00> : vector<4x16x16xf32>
    %67 = tpu.matmul %48, %57, %cst_23 {dimension_numbers = #tpu.dot_dimension_numbers<[2], [2], [1], [1], [0, 0, 0, 1, 1, 1], [0], [0]>} : vector<4x16x32xbf16>, vector<4x16x32xbf16>, vector<4x16x16xf32> -> vector<4x16x16xf32>
    %cst_24 = arith.constant dense<0xFF800000> : vector<4x16xf32>
    %68 = vector.multi_reduction <maximumf>, %67, %cst_24 [2] : vector<4x16x16xf32> to vector<4x16xf32>
    %69 = vector.shape_cast %68 : vector<4x16xf32> to vector<4x16x1xf32>
    %70 = vector.broadcast %69 : vector<4x16x1xf32> to vector<4x16x16xf32>
    %71 = arith.subf %67, %70 : vector<4x16x16xf32>
    %72 = math.exp %71 : vector<4x16x16xf32>
    %cst_25 = arith.constant dense<0.000000e+00> : vector<4x16xf32>
    %73 = vector.multi_reduction <add>, %72, %cst_25 [2] : vector<4x16x16xf32> to vector<4x16xf32>
    %74 = vector.shape_cast %73 : vector<4x16xf32> to vector<4x16x1xf32>
    %75 = tpu.reciprocal %74 {approx = true} : vector<4x16x1xf32> -> vector<4x16x1xf32>
    %76 = vector.broadcast %75 : vector<4x16x1xf32> to vector<4x16x16xf32>
    %77 = arith.mulf %72, %76 : vector<4x16x16xf32>
    %78 = arith.truncf %77 : vector<4x16x16xf32> to vector<4x16x16xbf16>
    %cst_26 = arith.constant dense<0.000000e+00> : vector<4x16x32xf32>
    %79 = tpu.matmul %78, %66, %cst_26 {dimension_numbers = #tpu.dot_dimension_numbers<[2], [1], [1], [2], [0, 0, 0, 1, 1, 2], [0], [0]>} : vector<4x16x16xbf16>, vector<4x16x32xbf16>, vector<4x16x32xf32> -> vector<4x16x32xf32>
    %80 = arith.truncf %79 : vector<4x16x32xf32> to vector<4x16x32xbf16>
    %cst_27 = arith.constant dense<0.000000e+00> : vector<4x16x128xf32>
    %81 = tpu.matmul %80, %38, %cst_27 {dimension_numbers = #tpu.dot_dimension_numbers<[2], [1], [1], [2], [0, 0, 0, 1, 1, 2], [0], [0]>} : vector<4x16x32xbf16>, vector<4x32x128xbf16>, vector<4x16x128xf32> -> vector<4x16x128xf32>
    %cst_28 = arith.constant dense<0.000000e+00> : vector<16x128xf32>
    %82 = vector.multi_reduction <add>, %81, %cst_28 [0] : vector<4x16x128xf32> to vector<16x128xf32>
    %83 = vector.broadcast %39 : vector<1x128xf32> to vector<16x128xf32>
    %84 = arith.addf %82, %83 : vector<16x128xf32>
    %85 = arith.addf %1, %84 : vector<16x128xf32>
    %c0_29 = arith.constant 0 : index
    %c0_30 = arith.constant 0 : index
    %86 = vector.load %arg9[%c0_29, %c0_30] : memref<1x128xf32, #tpu.memory_space<vmem>>, vector<1x128xf32>
    %c0_31 = arith.constant 0 : index
    %c0_32 = arith.constant 0 : index
    %87 = vector.load %arg10[%c0_31, %c0_32] : memref<1x128xf32, #tpu.memory_space<vmem>>, vector<1x128xf32>
    %cst_33 = arith.constant dense<0.000000e+00> : vector<16xf32>
    %88 = vector.multi_reduction <add>, %85, %cst_33 [1] : vector<16x128xf32> to vector<16xf32>
    %89 = vector.shape_cast %88 : vector<16xf32> to vector<16x1xf32>
    %cst_34 = arith.constant 1.280000e+02 : f32
    %90 = vector.broadcast %cst_34 : f32 to vector<16x1xf32>
    %91 = arith.divf %89, %90 : vector<16x1xf32>
    %92 = vector.broadcast %91 : vector<16x1xf32> to vector<16x128xf32>
    %93 = arith.subf %85, %92 : vector<16x128xf32>
    %94 = arith.mulf %93, %93 : vector<16x128xf32>
    %cst_35 = arith.constant dense<0.000000e+00> : vector<16xf32>
    %95 = vector.multi_reduction <add>, %94, %cst_35 [1] : vector<16x128xf32> to vector<16xf32>
    %96 = vector.shape_cast %95 : vector<16xf32> to vector<16x1xf32>
    %cst_36 = arith.constant 1.280000e+02 : f32
    %97 = vector.broadcast %cst_36 : f32 to vector<16x1xf32>
    %98 = arith.divf %96, %97 : vector<16x1xf32>
    %99 = vector.broadcast %91 : vector<16x1xf32> to vector<16x128xf32>
    %100 = arith.subf %85, %99 : vector<16x128xf32>
    %cst_37 = arith.constant 9.99999974E-6 : f32
    %101 = vector.broadcast %cst_37 : f32 to vector<16x1xf32>
    %102 = arith.addf %98, %101 : vector<16x1xf32>
    %103 = math.rsqrt %102 : vector<16x1xf32>
    %104 = vector.broadcast %103 : vector<16x1xf32> to vector<16x128xf32>
    %105 = arith.mulf %100, %104 : vector<16x128xf32>
    %106 = vector.broadcast %86 : vector<1x128xf32> to vector<16x128xf32>
    %107 = arith.mulf %105, %106 : vector<16x128xf32>
    %108 = vector.broadcast %87 : vector<1x128xf32> to vector<16x128xf32>
    %109 = arith.addf %107, %108 : vector<16x128xf32>
    %110 = arith.truncf %109 : vector<16x128xf32> to vector<16x128xbf16>
    %c0_38 = arith.constant 0 : index
    %c0_39 = arith.constant 0 : index
    %111 = vector.load %arg11[%c0_38, %c0_39] : memref<128x128xbf16, #tpu.memory_space<vmem>>, vector<128x128xbf16>
    %cst_40 = arith.constant dense<0.000000e+00> : vector<16x128xf32>
    %112 = tpu.matmul %110, %111, %cst_40 {dimension_numbers = #tpu.dot_dimension_numbers<[1], [0], [0], [1], [0, 0, 1, 1], [], []>} : vector<16x128xbf16>, vector<128x128xbf16>, vector<16x128xf32> -> vector<16x128xf32>
    %c0_41 = arith.constant 0 : index
    %c0_42 = arith.constant 0 : index
    %113 = vector.load %arg12[%c0_41, %c0_42] : memref<1x128xf32, #tpu.memory_space<vmem>>, vector<1x128xf32>
    %114 = vector.broadcast %113 : vector<1x128xf32> to vector<16x128xf32>
    %115 = arith.addf %112, %114 : vector<16x128xf32>
    %116 = arith.truncf %115 : vector<16x128xf32> to vector<16x128xbf16>
    %117 = arith.truncf %3 : vector<32x128xf32> to vector<32x128xbf16>
    %c0_43 = arith.constant 0 : index
    %c0_44 = arith.constant 0 : index
    %118 = vector.load %arg13[%c0_43, %c0_44] : memref<128x256xbf16, #tpu.memory_space<vmem>>, vector<128x256xbf16>
    %cst_45 = arith.constant dense<0.000000e+00> : vector<32x256xf32>
    %119 = tpu.matmul %117, %118, %cst_45 {dimension_numbers = #tpu.dot_dimension_numbers<[1], [0], [0], [1], [0, 0, 1, 1], [], []>} : vector<32x128xbf16>, vector<128x256xbf16>, vector<32x256xf32> -> vector<32x256xf32>
    %c0_46 = arith.constant 0 : index
    %c0_47 = arith.constant 0 : index
    %120 = vector.load %arg14[%c0_46, %c0_47] : memref<1x256xf32, #tpu.memory_space<vmem>>, vector<1x256xf32>
    %121 = vector.broadcast %120 : vector<1x256xf32> to vector<32x256xf32>
    %122 = arith.addf %119, %121 : vector<32x256xf32>
    %123 = arith.truncf %122 : vector<32x256xf32> to vector<32x256xbf16>
    %124 = vector.extract_strided_slice %123 {offsets = [0, 0], sizes = [32, 128], strides = [1, 1]} : vector<32x256xbf16> to vector<32x128xbf16>
    %125 = vector.extract_strided_slice %123 {offsets = [0, 128], sizes = [32, 128], strides = [1, 1]} : vector<32x256xbf16> to vector<32x128xbf16>
    %c0_48 = arith.constant 0 : index
    %c0_49 = arith.constant 0 : index
    %c0_50 = arith.constant 0 : index
    %126 = vector.load %arg15[%c0_48, %c0_49, %c0_50] : memref<4x32x128xbf16, #tpu.memory_space<vmem>>, vector<4x32x128xbf16>
    %c0_51 = arith.constant 0 : index
    %c0_52 = arith.constant 0 : index
    %127 = vector.load %arg16[%c0_51, %c0_52] : memref<1x128xf32, #tpu.memory_space<vmem>>, vector<1x128xf32>
    %128 = vector.extract_strided_slice %116 {offsets = [0, 0], sizes = [16, 32], strides = [1, 1]} : vector<16x128xbf16> to vector<16x32xbf16>
    %129 = vector.extract_strided_slice %116 {offsets = [0, 32], sizes = [16, 32], strides = [1, 1]} : vector<16x128xbf16> to vector<16x32xbf16>
    %130 = vector.extract_strided_slice %116 {offsets = [0, 64], sizes = [16, 32], strides = [1, 1]} : vector<16x128xbf16> to vector<16x32xbf16>
    %131 = vector.extract_strided_slice %116 {offsets = [0, 96], sizes = [16, 32], strides = [1, 1]} : vector<16x128xbf16> to vector<16x32xbf16>
    %132 = vector.shape_cast %128 : vector<16x32xbf16> to vector<1x16x32xbf16>
    %133 = vector.shape_cast %129 : vector<16x32xbf16> to vector<1x16x32xbf16>
    %134 = vector.shape_cast %130 : vector<16x32xbf16> to vector<1x16x32xbf16>
    %135 = vector.shape_cast %131 : vector<16x32xbf16> to vector<1x16x32xbf16>
    %136 = tpu.concatenate %132, %133, %134, %135 in 0 : vector<1x16x32xbf16>, vector<1x16x32xbf16>, vector<1x16x32xbf16>, vector<1x16x32xbf16> -> vector<4x16x32xbf16>
    %137 = vector.extract_strided_slice %124 {offsets = [0, 0], sizes = [32, 32], strides = [1, 1]} : vector<32x128xbf16> to vector<32x32xbf16>
    %138 = vector.extract_strided_slice %124 {offsets = [0, 32], sizes = [32, 32], strides = [1, 1]} : vector<32x128xbf16> to vector<32x32xbf16>
    %139 = vector.extract_strided_slice %124 {offsets = [0, 64], sizes = [32, 32], strides = [1, 1]} : vector<32x128xbf16> to vector<32x32xbf16>
    %140 = vector.extract_strided_slice %124 {offsets = [0, 96], sizes = [32, 32], strides = [1, 1]} : vector<32x128xbf16> to vector<32x32xbf16>
    %141 = vector.shape_cast %137 : vector<32x32xbf16> to vector<1x32x32xbf16>
    %142 = vector.shape_cast %138 : vector<32x32xbf16> to vector<1x32x32xbf16>
    %143 = vector.shape_cast %139 : vector<32x32xbf16> to vector<1x32x32xbf16>
    %144 = vector.shape_cast %140 : vector<32x32xbf16> to vector<1x32x32xbf16>
    %145 = tpu.concatenate %141, %142, %143, %144 in 0 : vector<1x32x32xbf16>, vector<1x32x32xbf16>, vector<1x32x32xbf16>, vector<1x32x32xbf16> -> vector<4x32x32xbf16>
    %146 = vector.extract_strided_slice %125 {offsets = [0, 0], sizes = [32, 32], strides = [1, 1]} : vector<32x128xbf16> to vector<32x32xbf16>
    %147 = vector.extract_strided_slice %125 {offsets = [0, 32], sizes = [32, 32], strides = [1, 1]} : vector<32x128xbf16> to vector<32x32xbf16>
    %148 = vector.extract_strided_slice %125 {offsets = [0, 64], sizes = [32, 32], strides = [1, 1]} : vector<32x128xbf16> to vector<32x32xbf16>
    %149 = vector.extract_strided_slice %125 {offsets = [0, 96], sizes = [32, 32], strides = [1, 1]} : vector<32x128xbf16> to vector<32x32xbf16>
    %150 = vector.shape_cast %146 : vector<32x32xbf16> to vector<1x32x32xbf16>
    %151 = vector.shape_cast %147 : vector<32x32xbf16> to vector<1x32x32xbf16>
    %152 = vector.shape_cast %148 : vector<32x32xbf16> to vector<1x32x32xbf16>
    %153 = vector.shape_cast %149 : vector<32x32xbf16> to vector<1x32x32xbf16>
    %154 = tpu.concatenate %150, %151, %152, %153 in 0 : vector<1x32x32xbf16>, vector<1x32x32xbf16>, vector<1x32x32xbf16>, vector<1x32x32xbf16> -> vector<4x32x32xbf16>
    %cst_53 = arith.constant dense<0.000000e+00> : vector<4x16x32xf32>
    %155 = tpu.matmul %136, %145, %cst_53 {dimension_numbers = #tpu.dot_dimension_numbers<[2], [2], [1], [1], [0, 0, 0, 1, 1, 1], [0], [0]>} : vector<4x16x32xbf16>, vector<4x32x32xbf16>, vector<4x16x32xf32> -> vector<4x16x32xf32>
    %cst_54 = arith.constant dense<0xFF800000> : vector<4x16xf32>
    %156 = vector.multi_reduction <maximumf>, %155, %cst_54 [2] : vector<4x16x32xf32> to vector<4x16xf32>
    %157 = vector.shape_cast %156 : vector<4x16xf32> to vector<4x16x1xf32>
    %158 = vector.broadcast %157 : vector<4x16x1xf32> to vector<4x16x32xf32>
    %159 = arith.subf %155, %158 : vector<4x16x32xf32>
    %160 = math.exp %159 : vector<4x16x32xf32>
    %cst_55 = arith.constant dense<0.000000e+00> : vector<4x16xf32>
    %161 = vector.multi_reduction <add>, %160, %cst_55 [2] : vector<4x16x32xf32> to vector<4x16xf32>
    %162 = vector.shape_cast %161 : vector<4x16xf32> to vector<4x16x1xf32>
    %163 = tpu.reciprocal %162 {approx = true} : vector<4x16x1xf32> -> vector<4x16x1xf32>
    %164 = vector.broadcast %163 : vector<4x16x1xf32> to vector<4x16x32xf32>
    %165 = arith.mulf %160, %164 : vector<4x16x32xf32>
    %166 = arith.truncf %165 : vector<4x16x32xf32> to vector<4x16x32xbf16>
    %cst_56 = arith.constant dense<0.000000e+00> : vector<4x16x32xf32>
    %167 = tpu.matmul %166, %154, %cst_56 {dimension_numbers = #tpu.dot_dimension_numbers<[2], [1], [1], [2], [0, 0, 0, 1, 1, 2], [0], [0]>} : vector<4x16x32xbf16>, vector<4x32x32xbf16>, vector<4x16x32xf32> -> vector<4x16x32xf32>
    %168 = arith.truncf %167 : vector<4x16x32xf32> to vector<4x16x32xbf16>
    %cst_57 = arith.constant dense<0.000000e+00> : vector<4x16x128xf32>
    %169 = tpu.matmul %168, %126, %cst_57 {dimension_numbers = #tpu.dot_dimension_numbers<[2], [1], [1], [2], [0, 0, 0, 1, 1, 2], [0], [0]>} : vector<4x16x32xbf16>, vector<4x32x128xbf16>, vector<4x16x128xf32> -> vector<4x16x128xf32>
    %cst_58 = arith.constant dense<0.000000e+00> : vector<16x128xf32>
    %170 = vector.multi_reduction <add>, %169, %cst_58 [0] : vector<4x16x128xf32> to vector<16x128xf32>
    %171 = vector.broadcast %127 : vector<1x128xf32> to vector<16x128xf32>
    %172 = arith.addf %170, %171 : vector<16x128xf32>
    %173 = arith.addf %85, %172 : vector<16x128xf32>
    %c0_59 = arith.constant 0 : index
    %c0_60 = arith.constant 0 : index
    %174 = vector.load %arg17[%c0_59, %c0_60] : memref<1x128xf32, #tpu.memory_space<vmem>>, vector<1x128xf32>
    %c0_61 = arith.constant 0 : index
    %c0_62 = arith.constant 0 : index
    %175 = vector.load %arg18[%c0_61, %c0_62] : memref<1x128xf32, #tpu.memory_space<vmem>>, vector<1x128xf32>
    %cst_63 = arith.constant dense<0.000000e+00> : vector<16xf32>
    %176 = vector.multi_reduction <add>, %173, %cst_63 [1] : vector<16x128xf32> to vector<16xf32>
    %177 = vector.shape_cast %176 : vector<16xf32> to vector<16x1xf32>
    %cst_64 = arith.constant 1.280000e+02 : f32
    %178 = vector.broadcast %cst_64 : f32 to vector<16x1xf32>
    %179 = arith.divf %177, %178 : vector<16x1xf32>
    %180 = vector.broadcast %179 : vector<16x1xf32> to vector<16x128xf32>
    %181 = arith.subf %173, %180 : vector<16x128xf32>
    %182 = arith.mulf %181, %181 : vector<16x128xf32>
    %cst_65 = arith.constant dense<0.000000e+00> : vector<16xf32>
    %183 = vector.multi_reduction <add>, %182, %cst_65 [1] : vector<16x128xf32> to vector<16xf32>
    %184 = vector.shape_cast %183 : vector<16xf32> to vector<16x1xf32>
    %cst_66 = arith.constant 1.280000e+02 : f32
    %185 = vector.broadcast %cst_66 : f32 to vector<16x1xf32>
    %186 = arith.divf %184, %185 : vector<16x1xf32>
    %187 = vector.broadcast %179 : vector<16x1xf32> to vector<16x128xf32>
    %188 = arith.subf %173, %187 : vector<16x128xf32>
    %cst_67 = arith.constant 9.99999974E-6 : f32
    %189 = vector.broadcast %cst_67 : f32 to vector<16x1xf32>
    %190 = arith.addf %186, %189 : vector<16x1xf32>
    %191 = math.rsqrt %190 : vector<16x1xf32>
    %192 = vector.broadcast %191 : vector<16x1xf32> to vector<16x128xf32>
    %193 = arith.mulf %188, %192 : vector<16x128xf32>
    %194 = vector.broadcast %174 : vector<1x128xf32> to vector<16x128xf32>
    %195 = arith.mulf %193, %194 : vector<16x128xf32>
    %196 = vector.broadcast %175 : vector<1x128xf32> to vector<16x128xf32>
    %197 = arith.addf %195, %196 : vector<16x128xf32>
    %198 = arith.truncf %197 : vector<16x128xf32> to vector<16x128xbf16>
    %c0_68 = arith.constant 0 : index
    %c0_69 = arith.constant 0 : index
    %199 = vector.load %arg19[%c0_68, %c0_69] : memref<128x256xbf16, #tpu.memory_space<vmem>>, vector<128x256xbf16>
    %cst_70 = arith.constant dense<0.000000e+00> : vector<16x256xf32>
    %200 = tpu.matmul %198, %199, %cst_70 {dimension_numbers = #tpu.dot_dimension_numbers<[1], [0], [0], [1], [0, 0, 1, 1], [], []>} : vector<16x128xbf16>, vector<128x256xbf16>, vector<16x256xf32> -> vector<16x256xf32>
    %c0_71 = arith.constant 0 : index
    %c0_72 = arith.constant 0 : index
    %201 = vector.load %arg20[%c0_71, %c0_72] : memref<1x256xf32, #tpu.memory_space<vmem>>, vector<1x256xf32>
    %202 = vector.broadcast %201 : vector<1x256xf32> to vector<16x256xf32>
    %203 = arith.addf %200, %202 : vector<16x256xf32>
    %cst_73 = arith.constant 0.000000e+00 : f32
    %204 = vector.broadcast %cst_73 : f32 to vector<16x256xf32>
    %205 = arith.maximumf %203, %204 : vector<16x256xf32>
    %206 = arith.truncf %205 : vector<16x256xf32> to vector<16x256xbf16>
    %c0_74 = arith.constant 0 : index
    %c0_75 = arith.constant 0 : index
    %207 = vector.load %arg21[%c0_74, %c0_75] : memref<256x128xbf16, #tpu.memory_space<vmem>>, vector<256x128xbf16>
    %cst_76 = arith.constant dense<0.000000e+00> : vector<16x128xf32>
    %208 = tpu.matmul %206, %207, %cst_76 {dimension_numbers = #tpu.dot_dimension_numbers<[1], [0], [0], [1], [0, 0, 1, 1], [], []>} : vector<16x256xbf16>, vector<256x128xbf16>, vector<16x128xf32> -> vector<16x128xf32>
    %c0_77 = arith.constant 0 : index
    %c0_78 = arith.constant 0 : index
    %209 = vector.load %arg22[%c0_77, %c0_78] : memref<1x128xf32, #tpu.memory_space<vmem>>, vector<1x128xf32>
    %210 = vector.broadcast %209 : vector<1x128xf32> to vector<16x128xf32>
    %211 = arith.addf %208, %210 : vector<16x128xf32>
    %212 = arith.addf %173, %211 : vector<16x128xf32>
    %c0_79 = arith.constant 0 : index
    %c0_80 = arith.constant 0 : index
    %c0_81 = arith.constant 0 : index
    %213 = vector.load %arg23[%c0_79, %c0_80, %c0_81] : memref<1x16x128xf32, #tpu.memory_space<vmem>>, vector<1x16x128xf32>
    %214 = vector.shape_cast %213 : vector<1x16x128xf32> to vector<16x128xf32>
    %215 = vector.shape_cast %212 : vector<16x128xf32> to vector<1x16x128xf32>
    tpu.vector_store %arg23[%c0_79, %c0_80, %c0_81], %215 {strides = array<i32>} : memref<1x16x128xf32, #tpu.memory_space<vmem>>, vector<1x16x128xf32>,
    return
  }
  func.func @transform_0(%arg0: i32) -> (i32, i32, i32) {
    %c0_i32 = arith.constant 0 : i32
    %c0_i32_0 = arith.constant 0 : i32
    %c0_i32_1 = arith.constant 0 : i32
    return %arg0, %c0_i32, %c0_i32_0 : i32, i32, i32
  }
  func.func @transform_1(%arg0: i32) -> (i32, i32, i32) {
    %c0_i32 = arith.constant 0 : i32
    %c0_i32_0 = arith.constant 0 : i32
    %c0_i32_1 = arith.constant 0 : i32
    return %arg0, %c0_i32, %c0_i32_0 : i32, i32, i32
  }
  func.func @transform_2(%arg0: i32) -> (i32, i32) {
    %c0_i32 = arith.constant 0 : i32
    %c0_i32_0 = arith.constant 0 : i32
    %c0_i32_1 = arith.constant 0 : i32
    return %c0_i32, %c0_i32_0 : i32, i32
  }
  func.func @transform_3(%arg0: i32) -> (i32, i32) {
    %c0_i32 = arith.constant 0 : i32
    %c0_i32_0 = arith.constant 0 : i32
    %c0_i32_1 = arith.constant 0 : i32
    return %c0_i32, %c0_i32_0 : i32, i32
  }
  func.func @transform_4(%arg0: i32) -> (i32, i32) {
    %c0_i32 = arith.constant 0 : i32
    %c0_i32_0 = arith.constant 0 : i32
    %c0_i32_1 = arith.constant 0 : i32
    return %c0_i32, %c0_i32_0 : i32, i32
  }
  func.func @transform_5(%arg0: i32) -> (i32, i32) {
    %c0_i32 = arith.constant 0 : i32
    %c0_i32_0 = arith.constant 0 : i32
    %c0_i32_1 = arith.constant 0 : i32
    return %c0_i32, %c0_i32_0 : i32, i32
  }
  func.func @transform_6(%arg0: i32) -> (i32, i32, i32) {
    %c0_i32 = arith.constant 0 : i32
    %c0_i32_0 = arith.constant 0 : i32
    %c0_i32_1 = arith.constant 0 : i32
    %c0_i32_2 = arith.constant 0 : i32
    return %c0_i32, %c0_i32_0, %c0_i32_1 : i32, i32, i32
  }
  func.func @transform_7(%arg0: i32) -> (i32, i32) {
    %c0_i32 = arith.constant 0 : i32
    %c0_i32_0 = arith.constant 0 : i32
    %c0_i32_1 = arith.constant 0 : i32
    return %c0_i32, %c0_i32_0 : i32, i32
  }
  func.func @transform_8(%arg0: i32) -> (i32, i32) {
    %c0_i32 = arith.constant 0 : i32
    %c0_i32_0 = arith.constant 0 : i32
    %c0_i32_1 = arith.constant 0 : i32
    return %c0_i32, %c0_i32_0 : i32, i32
  }
  func.func @transform_9(%arg0: i32) -> (i32, i32) {
    %c0_i32 = arith.constant 0 : i32
    %c0_i32_0 = arith.constant 0 : i32
    %c0_i32_1 = arith.constant 0 : i32
    return %c0_i32, %c0_i32_0 : i32, i32
  }
  func.func @transform_10(%arg0: i32) -> (i32, i32) {
    %c0_i32 = arith.constant 0 : i32
    %c0_i32_0 = arith.constant 0 : i32
    %c0_i32_1 = arith.constant 0 : i32
    return %c0_i32, %c0_i32_0 : i32, i32
  }
  func.func @transform_11(%arg0: i32) -> (i32, i32) {
    %c0_i32 = arith.constant 0 : i32
    %c0_i32_0 = arith.constant 0 : i32
    %c0_i32_1 = arith.constant 0 : i32
    return %c0_i32, %c0_i32_0 : i32, i32
  }
  func.func @transform_12(%arg0: i32) -> (i32, i32) {
    %c0_i32 = arith.constant 0 : i32
    %c0_i32_0 = arith.constant 0 : i32
    %c0_i32_1 = arith.constant 0 : i32
    return %c0_i32, %c0_i32_0 : i32, i32
  }
  func.func @transform_13(%arg0: i32) -> (i32, i32) {
    %c0_i32 = arith.constant 0 : i32
    %c0_i32_0 = arith.constant 0 : i32
    %c0_i32_1 = arith.constant 0 : i32
    return %c0_i32, %c0_i32_0 : i32, i32
  }
  func.func @transform_14(%arg0: i32) -> (i32, i32, i32) {
    %c0_i32 = arith.constant 0 : i32
    %c0_i32_0 = arith.constant 0 : i32
    %c0_i32_1 = arith.constant 0 : i32
    %c0_i32_2 = arith.constant 0 : i32
    return %c0_i32, %c0_i32_0, %c0_i32_1 : i32, i32, i32
  }
  func.func @transform_15(%arg0: i32) -> (i32, i32) {
    %c0_i32 = arith.constant 0 : i32
    %c0_i32_0 = arith.constant 0 : i32
    %c0_i32_1 = arith.constant 0 : i32
    return %c0_i32, %c0_i32_0 : i32, i32
  }
  func.func @transform_16(%arg0: i32) -> (i32, i32) {
    %c0_i32 = arith.constant 0 : i32
    %c0_i32_0 = arith.constant 0 : i32
    %c0_i32_1 = arith.constant 0 : i32
    return %c0_i32, %c0_i32_0 : i32, i32
  }
  func.func @transform_17(%arg0: i32) -> (i32, i32) {
    %c0_i32 = arith.constant 0 : i32
    %c0_i32_0 = arith.constant 0 : i32
    %c0_i32_1 = arith.constant 0 : i32
    return %c0_i32, %c0_i32_0 : i32, i32
  }
  func.func @transform_18(%arg0: i32) -> (i32, i32) {
    %c0_i32 = arith.constant 0 : i32
    %c0_i32_0 = arith.constant 0 : i32
    %c0_i32_1 = arith.constant 0 : i32
    return %c0_i32, %c0_i32_0 : i32, i32
  }
  func.func @transform_19(%arg0: i32) -> (i32, i32) {
    %c0_i32 = arith.constant 0 : i32
    %c0_i32_0 = arith.constant 0 : i32
    %c0_i32_1 = arith.constant 0 : i32
    return %c0_i32, %c0_i32_0 : i32, i32
  }
  func.func @transform_20(%arg0: i32) -> (i32, i32) {
    %c0_i32 = arith.constant 0 : i32
    %c0_i32_0 = arith.constant 0 : i32
    %c0_i32_1 = arith.constant 0 : i32
    return %c0_i32, %c0_i32_0 : i32, i32
  }
  func.func @transform_21(%arg0: i32) -> (i32, i32) {
    %c0_i32 = arith.constant 0 : i32
    %c0_i32_0 = arith.constant 0 : i32
    %c0_i32_1 = arith.constant 0 : i32
    return %c0_i32, %c0_i32_0 : i32, i32
  }
  func.func @transform_22(%arg0: i32) -> (i32, i32, i32) {
    %c0_i32 = arith.constant 0 : i32
    %c0_i32_0 = arith.constant 0 : i32
    %c0_i32_1 = arith.constant 0 : i32
    return %arg0, %c0_i32, %c0_i32_0 : i32, i32, i32
  }
}

</mosaic_0001>

<llo_original>
// kernel: run_decoder_layer.1
$region0: #{run_decoder_layer.1}
  #allocation0 [shape = 'u32[]', space=smem, size = 0x4, offset = 0x4, fixed_abs, tag = 'smem constant byte address 0x4 - core index']
  #allocation1 [shape = 'u32[144,128]{1,0:T(1,128)}', space=vmem, size = 0x12000, scoped, tag = 'internal scratch']
  %s0 = inlined_call_operand.hbm [shape: f32[2,16,128], index: 0, kind: input, shape index: {}]
  %s1 = inlined_call_operand.hbm [shape: f32[2,32,128], index: 1, kind: input, shape index: {}]
  %s2 = inlined_call_operand.hbm [shape: f32[1,128], index: 2, kind: input, shape index: {}]
  %s3 = inlined_call_operand.vmem [shape: f32[1,128], index: 3, kind: input, shape index: {}]
  %s4 = inlined_call_operand.hbm [shape: bf16[128,384], index: 4, kind: input, shape index: {}]
  %s5 = inlined_call_operand.vmem [shape: f32[1,384], index: 5, kind: input, shape index: {}]
  %s6 = inlined_call_operand.hbm [shape: bf16[4,32,128], index: 6, kind: input, shape index: {}]
  %s7 = inlined_call_operand.vmem [shape: f32[1,128], index: 7, kind: input, shape index: {}]
  %s8 = inlined_call_operand.vmem [shape: f32[1,128], index: 8, kind: input, shape index: {}]
  %s9 = inlined_call_operand.vmem [shape: f32[1,128], index: 9, kind: input, shape index: {}]
  %s10 = inlined_call_operand.hbm [shape: bf16[128,128], index: 10, kind: input, shape index: {}]
  %s11 = inlined_call_operand.vmem [shape: f32[1,128], index: 11, kind: input, shape index: {}]
  %s12 = inlined_call_operand.hbm [shape: bf16[128,256], index: 12, kind: input, shape index: {}]
  %s13 = inlined_call_operand.vmem [shape: f32[1,256], index: 13, kind: input, shape index: {}]
  %s14 = inlined_call_operand.hbm [shape: bf16[4,32,128], index: 14, kind: input, shape index: {}]
  %s15 = inlined_call_operand.vmem [shape: f32[1,128], index: 15, kind: input, shape index: {}]
  %s16 = inlined_call_operand.vmem [shape: f32[1,128], index: 16, kind: input, shape index: {}]
  %s17 = inlined_call_operand.vmem [shape: f32[1,128], index: 17, kind: input, shape index: {}]
  %s18 = inlined_call_operand.hbm [shape: bf16[128,256], index: 18, kind: input, shape index: {}]
  %s19 = inlined_call_operand.vmem [shape: f32[1,256], index: 19, kind: input, shape index: {}]
  %s20 = inlined_call_operand.hbm [shape: bf16[256,128], index: 20, kind: input, shape index: {}]
  %s21 = inlined_call_operand.vmem [shape: f32[1,128], index: 21, kind: input, shape index: {}]
  %s22 = inlined_call_operand.hbm [shape: f32[2,16,128], index: 22, kind: output, shape index: {}]
  %s23 = sld [smem:[#allocation0]]
  $region161: #{run_decoder_layer.1} parent=0
    _
  %s25 = ssub.s32 1, %s23
  %s26 = scalar_select 0, %s25, %s23
  $region1: #{run_decoder_layer.1} parent=0
    #allocation2 [shape = 'u8[16384]{0}', space=vmem, size = 0x4000, scoped, tag = 'input window, operand 0']
    #allocation3 [shape = 's32[2]{0}', space=sflag, size = 0x8, scoped, tag = 'scoped memory for run_decoder_layer.1']
    #allocation4 [shape = 's32[2]{0}', space=sflag, size = 0x8, scoped, tag = 'scoped memory for run_decoder_layer.1']
    #allocation5 [shape = 'u8[32768]{0}', space=vmem, size = 0x8000, scoped, tag = 'input window, operand 1']
    #allocation6 [shape = 's32[2]{0}', space=sflag, size = 0x8, scoped, tag = 'scoped memory for run_decoder_layer.1']
    #allocation7 [shape = 'u8[512]{0}', space=vmem, size = 0x400, scoped, tag = 'input window, operand 2, single buffered']
    #allocation8 [shape = 'u8[98304]{0}', space=vmem, size = 0x18000, scoped, tag = 'input window, operand 4, single buffered']
    #allocation9 [shape = 's32[1]{0}', space=sflag, size = 0x4, scoped, tag = 'scoped memory for run_decoder_layer.1']
    #allocation10 [shape = 'u8[32768]{0}', space=vmem, size = 0x8000, scoped, tag = 'input window, operand 6, single buffered']
    #allocation11 [shape = 'u8[32768]{0}', space=vmem, size = 0x8000, scoped, tag = 'input window, operand 10, single buffered']
    #allocation12 [shape = 's32[1]{0}', space=sflag, size = 0x4, scoped, tag = 'scoped memory for run_decoder_layer.1']
    #allocation13 [shape = 'u8[65536]{0}', space=vmem, size = 0x10000, scoped, tag = 'input window, operand 12, single buffered']
    #allocation14 [shape = 'u8[32768]{0}', space=vmem, size = 0x8000, scoped, tag = 'input window, operand 14, single buffered']
    #allocation15 [shape = 's32[1]{0}', space=sflag, size = 0x4, scoped, tag = 'scoped memory for run_decoder_layer.1']
    #allocation16 [shape = 'u8[65536]{0}', space=vmem, size = 0x10000, scoped, tag = 'input window, operand 18, single buffered']
    #allocation17 [shape = 'u8[65536]{0}', space=vmem, size = 0x10000, scoped, tag = 'input window, operand 20, single buffered']
    #allocation18 [shape = 's32[1]{0}', space=sflag, size = 0x4, scoped, tag = 'scoped memory for run_decoder_layer.1']
    #allocation19 [shape = 'u8[16384]{0}', space=vmem, size = 0x4000, scoped, tag = 'output window, operand 0']
    %27 = vsyncpa [#allocation3], 0
    %s28 = scalar_lea.sflag [#allocation3], 1
    %29 = vsyncpa %s28, 0
    %30 = vsyncpa [#allocation6], 0
    %s31 = scalar_lea.sflag [#allocation6], 1
    %32 = vsyncpa %s31, 0
    %33 = vsyncpa [#allocation9], 0
    %34 = vsyncpa [#allocation12], 0
    %35 = vsyncpa [#allocation15], 0
    %36 = vsyncpa [#allocation18], 0
    %37 = vsyncpa [#allocation4], 0
    %s38 = scalar_lea.sflag [#allocation4], 1
    %39 = vsyncpa %s38, 0
    loop: start=0, step=1, limit=4
    $region2: #{run_decoder_layer.1} parent=1 // loop_pre_header
      _
    $region3: #{run_decoder_layer.1} parent=1 // loop_header
      %s41 = sphi 0, %s45
      %p42 = scmp.ge.s32.totalorder %s41, 4
      %s51 = sphi 0, %s53
      %s54 = sphi 0, %s51
      %s55 = sphi 0, %s54
      %s71 = sphi 0, %s55
      %s77 = sphi 0, %s79
      %s80 = sphi 0, %s77
      %s81 = sphi 0, %s80
      %s97 = sphi 0, %s81
      %s101 = sphi 0, %s101
      %s103 = sphi 0, %s101
      %s104 = sphi 0, %s103
      %s118 = sphi 0, %s104
      %s122 = sphi 0, %s122
      %s124 = sphi 0, %s122
      %s125 = sphi 0, %s124
      %s139 = sphi 0, %s125
      %s143 = sphi 0, %s143
      %s145 = sphi 0, %s143
      %s146 = sphi 0, %s145
      %s160 = sphi 0, %s146
      %s164 = sphi 0, %s164
      %s166 = sphi 0, %s164
      %s167 = sphi 0, %s166
      %s181 = sphi 0, %s167
      %s185 = sphi 0, %s185
      %s187 = sphi 0, %s185
      %s188 = sphi 0, %s187
      %s202 = sphi 0, %s188
      %s206 = sphi 0, %s206
      %s208 = sphi 0, %s206
      %s209 = sphi 0, %s208
      %s223 = sphi 0, %s209
      %s227 = sphi 0, %s227
      %s229 = sphi 0, %s227
      %s230 = sphi 0, %s229
      %s244 = sphi 0, %s230
      %s248 = sphi 0, %s248
      %s250 = sphi 0, %s248
      %s251 = sphi 0, %s250
      %s265 = sphi 0, %s251
      %s269 = sphi 0, %s269
      %s271 = sphi 0, %s269
      %s272 = sphi 0, %s271
      %s286 = sphi 0, %s272
      %s290 = sphi 0, %s290
      %s292 = sphi 0, %s290
      %s293 = sphi 0, %s292
      %s307 = sphi 0, %s293
      %s311 = sphi 0, %s311
      %s313 = sphi 0, %s311
      %s314 = sphi 0, %s313
      %s328 = sphi 0, %s314
      %s332 = sphi 0, %s332
      %s334 = sphi 0, %s332
      %s335 = sphi 0, %s334
      %s349 = sphi 0, %s335
      %s353 = sphi 0, %s353
      %s355 = sphi 0, %s353
      %s356 = sphi 0, %s355
      %s370 = sphi 0, %s356
      %s374 = sphi 0, %s374
      %s376 = sphi 0, %s374
      %s377 = sphi 0, %s376
      %s391 = sphi 0, %s377
      %s395 = sphi 0, %s395
      %s397 = sphi 0, %s395
      %s398 = sphi 0, %s397
      %s412 = sphi 0, %s398
      %s416 = sphi 0, %s416
      %s418 = sphi 0, %s416
      %s419 = sphi 0, %s418
      %s433 = sphi 0, %s419
      %s437 = sphi 0, %s437
      %s439 = sphi 0, %s437
      %s440 = sphi 0, %s439
      %s454 = sphi 0, %s440
      %s458 = sphi 0, %s458
      %s460 = sphi 0, %s458
      %s461 = sphi 0, %s460
      %s475 = sphi 0, %s461
      %s479 = sphi 0, %s479
      %s481 = sphi 0, %s479
      %s482 = sphi 0, %s481
      %s496 = sphi 0, %s482
      %s500 = sphi 0, %s500
      %s502 = sphi 0, %s500
      %s503 = sphi 0, %s502
      %s517 = sphi 0, %s503
      %s523 = sphi 0, %s525
      %s526 = sphi 0, %s523
      %s527 = sphi 0, %s526
      %s543 = sphi 0, %s527
    $region4: #{run_decoder_layer.1} parent=1 // loop_header_branch
      %44 = sbr.rel (%p42) target = $region8
    $region5: #{run_decoder_layer.1} parent=1 // loop_body
      %s46 = ssub.s32 %s41, 1
      %s47 = ssub.s32 %s41, 2
      %s48 = sadd.s32 %s41, 1
      %s49 = ssub.s32 %s41, %s48
      %p50 = scmp.eq.s32.totalorder %s49, 0
      %s52 = sadd.s32 %s51, 1
      %s53 = scalar_select %p50, %s51, %s52
      %p56 = pneg %p50
      %p57 = scmp.eq.s32.totalorder %s41, 1
      %p58 = por %p56, %p57
      %p59 = scmp.ne.s32.totalorder %s51, %s54
      %p60 = scmp.eq.s32.totalorder %s41, 0
      %p61 = por %p59, %p60
      %p62 = scmp.ne.s32.totalorder %s51, %s54
      %p63 = scmp.eq.s32.totalorder %s46, 1
      %p64 = por %p62, %p63
      %p65 = scmp.ne.s32.totalorder %s54, %s55
      %p66 = scmp.eq.s32.totalorder %s46, 0
      %p67 = por %p65, %p66
      %p68 = scmp.ne.s32.totalorder %s54, %s55
      %p69 = scmp.eq.s32.totalorder %s47, 1
      %p70 = por %p68, %p69
      %p72 = scmp.ne.s32.totalorder %s55, %s71
      %p73 = scmp.eq.s32.totalorder %s47, 0
      %p74 = por %p72, %p73
      %s75 = ssub.s32 %s41, %s48
      %p76 = scmp.eq.s32.totalorder %s75, 0
      %s78 = sadd.s32 %s77, 1
      %s79 = scalar_select %p76, %s77, %s78
      %p82 = pneg %p76
      %p83 = scmp.eq.s32.totalorder %s41, 1
      %p84 = por %p82, %p83
      %p85 = scmp.ne.s32.totalorder %s77, %s80
      %p86 = scmp.eq.s32.totalorder %s41, 0
      %p87 = por %p85, %p86
      %p88 = scmp.ne.s32.totalorder %s77, %s80
      %p89 = scmp.eq.s32.totalorder %s46, 1
      %p90 = por %p88, %p89
      %p91 = scmp.ne.s32.totalorder %s80, %s81
      %p92 = scmp.eq.s32.totalorder %s46, 0
      %p93 = por %p91, %p92
      %p94 = scmp.ne.s32.totalorder %s80, %s81
      %p95 = scmp.eq.s32.totalorder %s47, 1
      %p96 = por %p94, %p95
      %p98 = scmp.ne.s32.totalorder %s81, %s97
      %p99 = scmp.eq.s32.totalorder %s47, 0
      %p100 = por %p98, %p99
      %s102 = sadd.s32 %s101, 1
      %p105 = scmp.eq.s32.totalorder %s41, 1
      %p106 = scmp.ne.s32.totalorder %s101, %s103
      %p107 = scmp.eq.s32.totalorder %s41, 0
      %p108 = por %p106, %p107
      %p109 = scmp.ne.s32.totalorder %s101, %s103
      %p110 = scmp.eq.s32.totalorder %s46, 1
      %p111 = por %p109, %p110
      %p112 = scmp.ne.s32.totalorder %s103, %s104
      %p113 = scmp.eq.s32.totalorder %s46, 0
      %p114 = por %p112, %p113
      %p115 = scmp.ne.s32.totalorder %s103, %s104
      %p116 = scmp.eq.s32.totalorder %s47, 1
      %p117 = por %p115, %p116
      %p119 = scmp.ne.s32.totalorder %s104, %s118
      %p120 = scmp.eq.s32.totalorder %s47, 0
      %p121 = por %p119, %p120
      %s123 = sadd.s32 %s122, 1
      %p126 = scmp.eq.s32.totalorder %s41, 1
      %p127 = scmp.ne.s32.totalorder %s122, %s124
      %p128 = scmp.eq.s32.totalorder %s41, 0
      %p129 = por %p127, %p128
      %p130 = scmp.ne.s32.totalorder %s122, %s124
      %p131 = scmp.eq.s32.totalorder %s46, 1
      %p132 = por %p130, %p131
      %p133 = scmp.ne.s32.totalorder %s124, %s125
      %p134 = scmp.eq.s32.totalorder %s46, 0
      %p135 = por %p133, %p134
      %p136 = scmp.ne.s32.totalorder %s124, %s125
      %p137 = scmp.eq.s32.totalorder %s47, 1
      %p138 = por %p136, %p137
      %p140 = scmp.ne.s32.totalorder %s125, %s139
      %p141 = scmp.eq.s32.totalorder %s47, 0
      %p142 = por %p140, %p141
      %s144 = sadd.s32 %s143, 1
      %p147 = scmp.eq.s32.totalorder %s41, 1
      %p148 = scmp.ne.s32.totalorder %s143, %s145
      %p149 = scmp.eq.s32.totalorder %s41, 0
      %p150 = por %p148, %p149
      %p151 = scmp.ne.s32.totalorder %s143, %s145
      %p152 = scmp.eq.s32.totalorder %s46, 1
      %p153 = por %p151, %p152
      %p154 = scmp.ne.s32.totalorder %s145, %s146
      %p155 = scmp.eq.s32.totalorder %s46, 0
      %p156 = por %p154, %p155
      %p157 = scmp.ne.s32.totalorder %s145, %s146
      %p158 = scmp.eq.s32.totalorder %s47, 1
      %p159 = por %p157, %p158
      %p161 = scmp.ne.s32.totalorder %s146, %s160
      %p162 = scmp.eq.s32.totalorder %s47, 0
      %p163 = por %p161, %p162
      %s165 = sadd.s32 %s164, 1
      %p168 = scmp.eq.s32.totalorder %s41, 1
      %p169 = scmp.ne.s32.totalorder %s164, %s166
      %p170 = scmp.eq.s32.totalorder %s41, 0
      %p171 = por %p169, %p170
      %p172 = scmp.ne.s32.totalorder %s164, %s166
      %p173 = scmp.eq.s32.totalorder %s46, 1
      %p174 = por %p172, %p173
      %p175 = scmp.ne.s32.totalorder %s166, %s167
      %p176 = scmp.eq.s32.totalorder %s46, 0
      %p177 = por %p175, %p176
      %p178 = scmp.ne.s32.totalorder %s166, %s167
      %p179 = scmp.eq.s32.totalorder %s47, 1
      %p180 = por %p178, %p179
      %p182 = scmp.ne.s32.totalorder %s167, %s181
      %p183 = scmp.eq.s32.totalorder %s47, 0
      %p184 = por %p182, %p183
      %s186 = sadd.s32 %s185, 1
      %p189 = scmp.eq.s32.totalorder %s41, 1
      %p190 = scmp.ne.s32.totalorder %s185, %s187
      %p191 = scmp.eq.s32.totalorder %s41, 0
      %p192 = por %p190, %p191
      %p193 = scmp.ne.s32.totalorder %s185, %s187
      %p194 = scmp.eq.s32.totalorder %s46, 1
      %p195 = por %p193, %p194
      %p196 = scmp.ne.s32.totalorder %s187, %s188
      %p197 = scmp.eq.s32.totalorder %s46, 0
      %p198 = por %p196, %p197
      %p199 = scmp.ne.s32.totalorder %s187, %s188
      %p200 = scmp.eq.s32.totalorder %s47, 1
      %p201 = por %p199, %p200
      %p203 = scmp.ne.s32.totalorder %s188, %s202
      %p204 = scmp.eq.s32.totalorder %s47, 0
      %p205 = por %p203, %p204
      %s207 = sadd.s32 %s206, 1
      %p210 = scmp.eq.s32.totalorder %s41, 1
      %p211 = scmp.ne.s32.totalorder %s206, %s208
      %p212 = scmp.eq.s32.totalorder %s41, 0
      %p213 = por %p211, %p212
      %p214 = scmp.ne.s32.totalorder %s206, %s208
      %p215 = scmp.eq.s32.totalorder %s46, 1
      %p216 = por %p214, %p215
      %p217 = scmp.ne.s32.totalorder %s208, %s209
      %p218 = scmp.eq.s32.totalorder %s46, 0
      %p219 = por %p217, %p218
      %p220 = scmp.ne.s32.totalorder %s208, %s209
      %p221 = scmp.eq.s32.totalorder %s47, 1
      %p222 = por %p220, %p221
      %p224 = scmp.ne.s32.totalorder %s209, %s223
      %p225 = scmp.eq.s32.totalorder %s47, 0
      %p226 = por %p224, %p225
      %s228 = sadd.s32 %s227, 1
      %p231 = scmp.eq.s32.totalorder %s41, 1
      %p232 = scmp.ne.s32.totalorder %s227, %s229
      %p233 = scmp.eq.s32.totalorder %s41, 0
      %p234 = por %p232, %p233
      %p235 = scmp.ne.s32.totalorder %s227, %s229
      %p236 = scmp.eq.s32.totalorder %s46, 1
      %p237 = por %p235, %p236
      %p238 = scmp.ne.s32.totalorder %s229, %s230
      %p239 = scmp.eq.s32.totalorder %s46, 0
      %p240 = por %p238, %p239
      %p241 = scmp.ne.s32.totalorder %s229, %s230
      %p242 = scmp.eq.s32.totalorder %s47, 1
      %p243 = por %p241, %p242
      %p245 = scmp.ne.s32.totalorder %s230, %s244
      %p246 = scmp.eq.s32.totalorder %s47, 0
      %p247 = por %p245, %p246
      %s249 = sadd.s32 %s248, 1
      %p252 = scmp.eq.s32.totalorder %s41, 1
      %p253 = scmp.ne.s32.totalorder %s248, %s250
      %p254 = scmp.eq.s32.totalorder %s41, 0
      %p255 = por %p253, %p254
      %p256 = scmp.ne.s32.totalorder %s248, %s250
      %p257 = scmp.eq.s32.totalorder %s46, 1
      %p258 = por %p256, %p257
      %p259 = scmp.ne.s32.totalorder %s250, %s251
      %p260 = scmp.eq.s32.totalorder %s46, 0
      %p261 = por %p259, %p260
      %p262 = scmp.ne.s32.totalorder %s250, %s251
      %p263 = scmp.eq.s32.totalorder %s47, 1
      %p264 = por %p262, %p263
      %p266 = scmp.ne.s32.totalorder %s251, %s265
      %p267 = scmp.eq.s32.totalorder %s47, 0
      %p268 = por %p266, %p267
      %s270 = sadd.s32 %s269, 1
      %p273 = scmp.eq.s32.totalorder %s41, 1
      %p274 = scmp.ne.s32.totalorder %s269, %s271
      %p275 = scmp.eq.s32.totalorder %s41, 0
      %p276 = por %p274, %p275
      %p277 = scmp.ne.s32.totalorder %s269, %s271
      %p278 = scmp.eq.s32.totalorder %s46, 1
      %p279 = por %p277, %p278
      %p280 = scmp.ne.s32.totalorder %s271, %s272
      %p281 = scmp.eq.s32.totalorder %s46, 0
      %p282 = por %p280, %p281
      %p283 = scmp.ne.s32.totalorder %s271, %s272
      %p284 = scmp.eq.s32.totalorder %s47, 1
      %p285 = por %p283, %p284
      %p287 = scmp.ne.s32.totalorder %s272, %s286
      %p288 = scmp.eq.s32.totalorder %s47, 0
      %p289 = por %p287, %p288
      %s291 = sadd.s32 %s290, 1
      %p294 = scmp.eq.s32.totalorder %s41, 1
      %p295 = scmp.ne.s32.totalorder %s290, %s292
      %p296 = scmp.eq.s32.totalorder %s41, 0
      %p297 = por %p295, %p296
      %p298 = scmp.ne.s32.totalorder %s290, %s292
      %p299 = scmp.eq.s32.totalorder %s46, 1
      %p300 = por %p298, %p299
      %p301 = scmp.ne.s32.totalorder %s292, %s293
      %p302 = scmp.eq.s32.totalorder %s46, 0
      %p303 = por %p301, %p302
      %p304 = scmp.ne.s32.totalorder %s292, %s293
      %p305 = scmp.eq.s32.totalorder %s47, 1
      %p306 = por %p304, %p305
      %p308 = scmp.ne.s32.totalorder %s293, %s307
      %p309 = scmp.eq.s32.totalorder %s47, 0
      %p310 = por %p308, %p309
      %s312 = sadd.s32 %s311, 1
      %p315 = scmp.eq.s32.totalorder %s41, 1
      %p316 = scmp.ne.s32.totalorder %s311, %s313
      %p317 = scmp.eq.s32.totalorder %s41, 0
      %p318 = por %p316, %p317
      %p319 = scmp.ne.s32.totalorder %s311, %s313
      %p320 = scmp.eq.s32.totalorder %s46, 1
      %p321 = por %p319, %p320
      %p322 = scmp.ne.s32.totalorder %s313, %s314
      %p323 = scmp.eq.s32.totalorder %s46, 0
      %p324 = por %p322, %p323
      %p325 = scmp.ne.s32.totalorder %s313, %s314
      %p326 = scmp.eq.s32.totalorder %s47, 1
      %p327 = por %p325, %p326
      %p329 = scmp.ne.s32.totalorder %s314, %s328
      %p330 = scmp.eq.s32.totalorder %s47, 0
      %p331 = por %p329, %p330
      %s333 = sadd.s32 %s332, 1
      %p336 = scmp.eq.s32.totalorder %s41, 1
      %p337 = scmp.ne.s32.totalorder %s332, %s334
      %p338 = scmp.eq.s32.totalorder %s41, 0
      %p339 = por %p337, %p338
      %p340 = scmp.ne.s32.totalorder %s332, %s334
      %p341 = scmp.eq.s32.totalorder %s46, 1
      %p342 = por %p340, %p341
      %p343 = scmp.ne.s32.totalorder %s334, %s335
      %p344 = scmp.eq.s32.totalorder %s46, 0
      %p345 = por %p343, %p344
      %p346 = scmp.ne.s32.totalorder %s334, %s335
      %p347 = scmp.eq.s32.totalorder %s47, 1
      %p348 = por %p346, %p347
      %p350 = scmp.ne.s32.totalorder %s335, %s349
      %p351 = scmp.eq.s32.totalorder %s47, 0
      %p352 = por %p350, %p351
      %s354 = sadd.s32 %s353, 1
      %p357 = scmp.eq.s32.totalorder %s41, 1
      %p358 = scmp.ne.s32.totalorder %s353, %s355
      %p359 = scmp.eq.s32.totalorder %s41, 0
      %p360 = por %p358, %p359
      %p361 = scmp.ne.s32.totalorder %s353, %s355
      %p362 = scmp.eq.s32.totalorder %s46, 1
      %p363 = por %p361, %p362
      %p364 = scmp.ne.s32.totalorder %s355, %s356
      %p365 = scmp.eq.s32.totalorder %s46, 0
      %p366 = por %p364, %p365
      %p367 = scmp.ne.s32.totalorder %s355, %s356
      %p368 = scmp.eq.s32.totalorder %s47, 1
      %p369 = por %p367, %p368
      %p371 = scmp.ne.s32.totalorder %s356, %s370
      %p372 = scmp.eq.s32.totalorder %s47, 0
      %p373 = por %p371, %p372
      %s375 = sadd.s32 %s374, 1
      %p378 = scmp.eq.s32.totalorder %s41, 1
      %p379 = scmp.ne.s32.totalorder %s374, %s376
      %p380 = scmp.eq.s32.totalorder %s41, 0
      %p381 = por %p379, %p380
      %p382 = scmp.ne.s32.totalorder %s374, %s376
      %p383 = scmp.eq.s32.totalorder %s46, 1
      %p384 = por %p382, %p383
      %p385 = scmp.ne.s32.totalorder %s376, %s377
      %p386 = scmp.eq.s32.totalorder %s46, 0
      %p387 = por %p385, %p386
      %p388 = scmp.ne.s32.totalorder %s376, %s377
      %p389 = scmp.eq.s32.totalorder %s47, 1
      %p390 = por %p388, %p389
      %p392 = scmp.ne.s32.totalorder %s377, %s391
      %p393 = scmp.eq.s32.totalorder %s47, 0
      %p394 = por %p392, %p393
      %s396 = sadd.s32 %s395, 1
      %p399 = scmp.eq.s32.totalorder %s41, 1
      %p400 = scmp.ne.s32.totalorder %s395, %s397
      %p401 = scmp.eq.s32.totalorder %s41, 0
      %p402 = por %p400, %p401
      %p403 = scmp.ne.s32.totalorder %s395, %s397
      %p404 = scmp.eq.s32.totalorder %s46, 1
      %p405 = por %p403, %p404
      %p406 = scmp.ne.s32.totalorder %s397, %s398
      %p407 = scmp.eq.s32.totalorder %s46, 0
      %p408 = por %p406, %p407
      %p409 = scmp.ne.s32.totalorder %s397, %s398
      %p410 = scmp.eq.s32.totalorder %s47, 1
      %p411 = por %p409, %p410
      %p413 = scmp.ne.s32.totalorder %s398, %s412
      %p414 = scmp.eq.s32.totalorder %s47, 0
      %p415 = por %p413, %p414
      %s417 = sadd.s32 %s416, 1
      %p420 = scmp.eq.s32.totalorder %s41, 1
      %p421 = scmp.ne.s32.totalorder %s416, %s418
      %p422 = scmp.eq.s32.totalorder %s41, 0
      %p423 = por %p421, %p422
      %p424 = scmp.ne.s32.totalorder %s416, %s418
      %p425 = scmp.eq.s32.totalorder %s46, 1
      %p426 = por %p424, %p425
      %p427 = scmp.ne.s32.totalorder %s418, %s419
      %p428 = scmp.eq.s32.totalorder %s46, 0
      %p429 = por %p427, %p428
      %p430 = scmp.ne.s32.totalorder %s418, %s419
      %p431 = scmp.eq.s32.totalorder %s47, 1
      %p432 = por %p430, %p431
      %p434 = scmp.ne.s32.totalorder %s419, %s433
      %p435 = scmp.eq.s32.totalorder %s47, 0
      %p436 = por %p434, %p435
      %s438 = sadd.s32 %s437, 1
      %p441 = scmp.eq.s32.totalorder %s41, 1
      %p442 = scmp.ne.s32.totalorder %s437, %s439
      %p443 = scmp.eq.s32.totalorder %s41, 0
      %p444 = por %p442, %p443
      %p445 = scmp.ne.s32.totalorder %s437, %s439
      %p446 = scmp.eq.s32.totalorder %s46, 1
      %p447 = por %p445, %p446
      %p448 = scmp.ne.s32.totalorder %s439, %s440
      %p449 = scmp.eq.s32.totalorder %s46, 0
      %p450 = por %p448, %p449
      %p451 = scmp.ne.s32.totalorder %s439, %s440
      %p452 = scmp.eq.s32.totalorder %s47, 1
      %p453 = por %p451, %p452
      %p455 = scmp.ne.s32.totalorder %s440, %s454
      %p456 = scmp.eq.s32.totalorder %s47, 0
      %p457 = por %p455, %p456
      %s459 = sadd.s32 %s458, 1
      %p462 = scmp.eq.s32.totalorder %s41, 1
      %p463 = scmp.ne.s32.totalorder %s458, %s460
      %p464 = scmp.eq.s32.totalorder %s41, 0
      %p465 = por %p463, %p464
      %p466 = scmp.ne.s32.totalorder %s458, %s460
      %p467 = scmp.eq.s32.totalorder %s46, 1
      %p468 = por %p466, %p467
      %p469 = scmp.ne.s32.totalorder %s460, %s461
      %p470 = scmp.eq.s32.totalorder %s46, 0
      %p471 = por %p469, %p470
      %p472 = scmp.ne.s32.totalorder %s460, %s461
      %p473 = scmp.eq.s32.totalorder %s47, 1
      %p474 = por %p472, %p473
      %p476 = scmp.ne.s32.totalorder %s461, %s475
      %p477 = scmp.eq.s32.totalorder %s47, 0
      %p478 = por %p476, %p477
      %s480 = sadd.s32 %s479, 1
      %p483 = scmp.eq.s32.totalorder %s41, 1
      %p484 = scmp.ne.s32.totalorder %s479, %s481
      %p485 = scmp.eq.s32.totalorder %s41, 0
      %p486 = por %p484, %p485
      %p487 = scmp.ne.s32.totalorder %s479, %s481
      %p488 = scmp.eq.s32.totalorder %s46, 1
      %p489 = por %p487, %p488
      %p490 = scmp.ne.s32.totalorder %s481, %s482
      %p491 = scmp.eq.s32.totalorder %s46, 0
      %p492 = por %p490, %p491
      %p493 = scmp.ne.s32.totalorder %s481, %s482
      %p494 = scmp.eq.s32.totalorder %s47, 1
      %p495 = por %p493, %p494
      %p497 = scmp.ne.s32.totalorder %s482, %s496
      %p498 = scmp.eq.s32.totalorder %s47, 0
      %p499 = por %p497, %p498
      %s501 = sadd.s32 %s500, 1
      %p504 = scmp.eq.s32.totalorder %s41, 1
      %p505 = scmp.ne.s32.totalorder %s500, %s502
      %p506 = scmp.eq.s32.totalorder %s41, 0
      %p507 = por %p505, %p506
      %p508 = scmp.ne.s32.totalorder %s500, %s502
      %p509 = scmp.eq.s32.totalorder %s46, 1
      %p510 = por %p508, %p509
      %p511 = scmp.ne.s32.totalorder %s502, %s503
      %p512 = scmp.eq.s32.totalorder %s46, 0
      %p513 = por %p511, %p512
      %p514 = scmp.ne.s32.totalorder %s502, %s503
      %p515 = scmp.eq.s32.totalorder %s47, 1
      %p516 = por %p514, %p515
      %p518 = scmp.ne.s32.totalorder %s503, %s517
      %p519 = scmp.eq.s32.totalorder %s47, 0
      %p520 = por %p518, %p519
      %s521 = ssub.s32 %s41, %s48
      %p522 = scmp.eq.s32.totalorder %s521, 0
      %s524 = sadd.s32 %s523, 1
      %s525 = scalar_select %p522, %s523, %s524
      %p528 = pneg %p522
      %p529 = scmp.eq.s32.totalorder %s41, 1
      %p530 = por %p528, %p529
      %p531 = scmp.ne.s32.totalorder %s523, %s526
      %p532 = scmp.eq.s32.totalorder %s41, 0
      %p533 = por %p531, %p532
      %p534 = scmp.ne.s32.totalorder %s523, %s526
      %p535 = scmp.eq.s32.totalorder %s46, 1
      %p536 = por %p534, %p535
      %p537 = scmp.ne.s32.totalorder %s526, %s527
      %p538 = scmp.eq.s32.totalorder %s46, 0
      %p539 = por %p537, %p538
      %p540 = scmp.ne.s32.totalorder %s526, %s527
      %p541 = scmp.eq.s32.totalorder %s47, 1
      %p542 = por %p540, %p541
      %p544 = scmp.ne.s32.totalorder %s527, %s543
      %p545 = scmp.eq.s32.totalorder %s47, 0
      %p546 = por %p544, %p545
      %p547 = scmp.le.s32.totalorder 1, %s41
      %p548 = scmp.lt.s32.totalorder %s41, 3
      %p549 = pnand %p547, %p548
      %p550 = pneg %p549
      // Predicated region
      $region9: #{run_decoder_layer.1} parent=5 // pred_check
        _
      $region10: #{run_decoder_layer.1} parent=5 // pred_check_branch
        %552 = sbr.rel (%p549) target = $region12
      $region11: #{run_decoder_layer.1} parent=5 // pred_region
        %s553 = ssub.s32 %s41, 1
        // Predicated region
        $region13: #{run_decoder_layer.1} parent=11 // pred_check
          %p554 = pneg %p114
        $region14: #{run_decoder_layer.1} parent=11 // pred_check_branch
          %556 = sbr.rel (%p554) target = $region16
        $region15: #{run_decoder_layer.1} parent=11 // pred_region
          %s558 = ssub.s32 16, 16
          %559 = vsyncadd [#allocation6], %s558
          %s561 = sshll.u32 [#allocation7], 4
          %s562 = int_to_ptr.vmem [resolvable:$true] %s561
          %564 = dma.hbm_to_vmem [thread:$0]  %s2, 16, %s562, [#allocation6]
        $region16: #{run_decoder_layer.1} parent=11 // pred_fallthru
          _
        // Predicated region
        $region17: #{run_decoder_layer.1} parent=11 // pred_check
          %p565 = pneg %p135
        $region18: #{run_decoder_layer.1} parent=11 // pred_check_branch
          %567 = sbr.rel (%p565) target = $region20
        $region19: #{run_decoder_layer.1} parent=11 // pred_region
          _
        $region20: #{run_decoder_layer.1} parent=11 // pred_fallthru
          _
        // Predicated region
        $region21: #{run_decoder_layer.1} parent=11 // pred_check
          %p568 = pneg %p156
        $region22: #{run_decoder_layer.1} parent=11 // pred_check_branch
          %570 = sbr.rel (%p568) target = $region24
        $region23: #{run_decoder_layer.1} parent=11 // pred_region
          %s572 = ssub.s32 3072, 3072
          %573 = vsyncadd [#allocation9], %s572
          %s574 = sshll.u32 [#allocation8], 4
          %s575 = int_to_ptr.vmem [resolvable:$true] %s574
          %580 = dma.hbm_to_vmem [thread:$0]  %s4, 3072, %s575, [#allocation9], 192, 192, 12
        $region24: #{run_decoder_layer.1} parent=11 // pred_fallthru
          _
        // Predicated region
        $region25: #{run_decoder_layer.1} parent=11 // pred_check
          %p581 = pneg %p177
        $region26: #{run_decoder_layer.1} parent=11 // pred_check_branch
          %583 = sbr.rel (%p581) target = $region28
        $region27: #{run_decoder_layer.1} parent=11 // pred_region
          _
        $region28: #{run_decoder_layer.1} parent=11 // pred_fallthru
          _
        // Predicated region
        $region29: #{run_decoder_layer.1} parent=11 // pred_check
          %p584 = pneg %p198
        $region30: #{run_decoder_layer.1} parent=11 // pred_check_branch
          %586 = sbr.rel (%p584) target = $region32
        $region31: #{run_decoder_layer.1} parent=11 // pred_region
          %s588 = ssub.s32 1024, 1024
          %589 = vsyncadd [#allocation9], %s588
          %s590 = sshll.u32 [#allocation10], 4
          %s591 = int_to_ptr.vmem [resolvable:$true] %s590
          %596 = dma.hbm_to_vmem [thread:$0]  %s6, 1024, %s591, [#allocation9], 64, 64, 4
        $region32: #{run_decoder_layer.1} parent=11 // pred_fallthru
          _
        // Predicated region
        $region33: #{run_decoder_layer.1} parent=11 // pred_check
          %p597 = pneg %p219
        $region34: #{run_decoder_layer.1} parent=11 // pred_check_branch
          %599 = sbr.rel (%p597) target = $region36
        $region35: #{run_decoder_layer.1} parent=11 // pred_region
          _
        $region36: #{run_decoder_layer.1} parent=11 // pred_fallthru
          _
        // Predicated region
        $region37: #{run_decoder_layer.1} parent=11 // pred_check
          %p600 = pneg %p240
        $region38: #{run_decoder_layer.1} parent=11 // pred_check_branch
          %602 = sbr.rel (%p600) target = $region40
        $region39: #{run_decoder_layer.1} parent=11 // pred_region
          _
        $region40: #{run_decoder_layer.1} parent=11 // pred_fallthru
          _
        // Predicated region
        $region41: #{run_decoder_layer.1} parent=11 // pred_check
          %p603 = pneg %p261
        $region42: #{run_decoder_layer.1} parent=11 // pred_check_branch
          %605 = sbr.rel (%p603) target = $region44
        $region43: #{run_decoder_layer.1} parent=11 // pred_region
          _
        $region44: #{run_decoder_layer.1} parent=11 // pred_fallthru
          _
        // Predicated region
        $region45: #{run_decoder_layer.1} parent=11 // pred_check
          %p606 = pneg %p282
        $region46: #{run_decoder_layer.1} parent=11 // pred_check_branch
          %608 = sbr.rel (%p606) target = $region48
        $region47: #{run_decoder_layer.1} parent=11 // pred_region
          %s610 = ssub.s32 1024, 1024
          %611 = vsyncadd [#allocation12], %s610
          %s612 = sshll.u32 [#allocation11], 4
          %s613 = int_to_ptr.vmem [resolvable:$true] %s612
          %618 = dma.hbm_to_vmem [thread:$0]  %s10, 1024, %s613, [#allocation12], 64, 64, 4
        $region48: #{run_decoder_layer.1} parent=11 // pred_fallthru
          _
        // Predicated region
        $region49: #{run_decoder_layer.1} parent=11 // pred_check
          %p619 = pneg %p303
        $region50: #{run_decoder_layer.1} parent=11 // pred_check_branch
          %621 = sbr.rel (%p619) target = $region52
        $region51: #{run_decoder_layer.1} parent=11 // pred_region
          _
        $region52: #{run_decoder_layer.1} parent=11 // pred_fallthru
          _
        // Predicated region
        $region53: #{run_decoder_layer.1} parent=11 // pred_check
          %p622 = pneg %p324
        $region54: #{run_decoder_layer.1} parent=11 // pred_check_branch
          %624 = sbr.rel (%p622) target = $region56
        $region55: #{run_decoder_layer.1} parent=11 // pred_region
          %s626 = ssub.s32 2048, 2048
          %627 = vsyncadd [#allocation12], %s626
          %s628 = sshll.u32 [#allocation13], 4
          %s629 = int_to_ptr.vmem [resolvable:$true] %s628
          %634 = dma.hbm_to_vmem [thread:$0]  %s12, 2048, %s629, [#allocation12], 128, 128, 8
        $region56: #{run_decoder_layer.1} parent=11 // pred_fallthru
          _
        // Predicated region
        $region57: #{run_decoder_layer.1} parent=11 // pred_check
          %p635 = pneg %p345
        $region58: #{run_decoder_layer.1} parent=11 // pred_check_branch
          %637 = sbr.rel (%p635) target = $region60
        $region59: #{run_decoder_layer.1} parent=11 // pred_region
          _
        $region60: #{run_decoder_layer.1} parent=11 // pred_fallthru
          _
        // Predicated region
        $region61: #{run_decoder_layer.1} parent=11 // pred_check
          %p638 = pneg %p366
        $region62: #{run_decoder_layer.1} parent=11 // pred_check_branch
          %640 = sbr.rel (%p638) target = $region64
        $region63: #{run_decoder_layer.1} parent=11 // pred_region
          %s642 = ssub.s32 1024, 1024
          %643 = vsyncadd [#allocation15], %s642
          %s644 = sshll.u32 [#allocation14], 4
          %s645 = int_to_ptr.vmem [resolvable:$true] %s644
          %650 = dma.hbm_to_vmem [thread:$0]  %s14, 1024, %s645, [#allocation15], 64, 64, 4
        $region64: #{run_decoder_layer.1} parent=11 // pred_fallthru
          _
        // Predicated region
        $region65: #{run_decoder_layer.1} parent=11 // pred_check
          %p651 = pneg %p387
        $region66: #{run_decoder_layer.1} parent=11 // pred_check_branch
          %653 = sbr.rel (%p651) target = $region68
        $region67: #{run_decoder_layer.1} parent=11 // pred_region
          _
        $region68: #{run_decoder_layer.1} parent=11 // pred_fallthru
          _
        // Predicated region
        $region69: #{run_decoder_layer.1} parent=11 // pred_check
          %p654 = pneg %p408
        $region70: #{run_decoder_layer.1} parent=11 // pred_check_branch
          %656 = sbr.rel (%p654) target = $region72
        $region71: #{run_decoder_layer.1} parent=11 // pred_region
          _
        $region72: #{run_decoder_layer.1} parent=11 // pred_fallthru
          _
        // Predicated region
        $region73: #{run_decoder_layer.1} parent=11 // pred_check
          %p657 = pneg %p429
        $region74: #{run_decoder_layer.1} parent=11 // pred_check_branch
          %659 = sbr.rel (%p657) target = $region76
        $region75: #{run_decoder_layer.1} parent=11 // pred_region
          _
        $region76: #{run_decoder_layer.1} parent=11 // pred_fallthru
          _
        // Predicated region
        $region77: #{run_decoder_layer.1} parent=11 // pred_check
          %p660 = pneg %p450
        $region78: #{run_decoder_layer.1} parent=11 // pred_check_branch
          %662 = sbr.rel (%p660) target = $region80
        $region79: #{run_decoder_layer.1} parent=11 // pred_region
          %s664 = ssub.s32 2048, 2048
          %665 = vsyncadd [#allocation15], %s664
          %s666 = sshll.u32 [#allocation16], 4
          %s667 = int_to_ptr.vmem [resolvable:$true] %s666
          %672 = dma.hbm_to_vmem [thread:$0]  %s18, 2048, %s667, [#allocation15], 128, 128, 8
        $region80: #{run_decoder_layer.1} parent=11 // pred_fallthru
          _
        // Predicated region
        $region81: #{run_decoder_layer.1} parent=11 // pred_check
          %p673 = pneg %p471
        $region82: #{run_decoder_layer.1} parent=11 // pred_check_branch
          %675 = sbr.rel (%p673) target = $region84
        $region83: #{run_decoder_layer.1} parent=11 // pred_region
          _
        $region84: #{run_decoder_layer.1} parent=11 // pred_fallthru
          _
        // Predicated region
        $region85: #{run_decoder_layer.1} parent=11 // pred_check
          %p676 = pneg %p492
        $region86: #{run_decoder_layer.1} parent=11 // pred_check_branch
          %678 = sbr.rel (%p676) target = $region88
        $region87: #{run_decoder_layer.1} parent=11 // pred_region
          %s680 = ssub.s32 2048, 2048
          %681 = vsyncadd [#allocation18], %s680
          %s682 = sshll.u32 [#allocation17], 4
          %s683 = int_to_ptr.vmem [resolvable:$true] %s682
          %688 = dma.hbm_to_vmem [thread:$0]  %s20, 2048, %s683, [#allocation18], 64, 64, 4
        $region88: #{run_decoder_layer.1} parent=11 // pred_fallthru
          _
        // Predicated region
        $region89: #{run_decoder_layer.1} parent=11 // pred_check
          %p689 = pneg %p513
        $region90: #{run_decoder_layer.1} parent=11 // pred_check_branch
          %691 = sbr.rel (%p689) target = $region92
        $region91: #{run_decoder_layer.1} parent=11 // pred_region
          _
        $region92: #{run_decoder_layer.1} parent=11 // pred_fallthru
          _
      $region12: #{run_decoder_layer.1} parent=5 // pred_fallthru
        _
      %p692 = scmp.lt.s32.totalorder %s41, 2
      // Predicated region
      $region93: #{run_decoder_layer.1} parent=5 // pred_check
        %p693 = pneg %p692
      $region94: #{run_decoder_layer.1} parent=5 // pred_check_branch
        %695 = sbr.rel (%p693) target = $region96
      $region95: #{run_decoder_layer.1} parent=5 // pred_region
        // Predicated region
        $region97: #{run_decoder_layer.1} parent=95 // pred_check
          %p696 = pneg %p61
        $region98: #{run_decoder_layer.1} parent=95 // pred_check_branch
          %698 = sbr.rel (%p696) target = $region100
        $region99: #{run_decoder_layer.1} parent=95 // pred_region
          %s699 = sand.u32 %s51, 1
          %s700 = scalar_lea.sflag [#allocation3], %s699
          %s701 = sand.u32 %s51, 1
          %s702 = smul.addr %s701, 16
          %s703 = scalar_lea.vmem [#allocation2], %s702
          %s705 = ssub.s32 256, 256
          %706 = vsyncadd %s700, %s705
          %s707 = smul.addr %s41, 2
          %s708 = smul.addr %s707, 128
          %s709 = scalar_lea.hbm %s0, %s708
          %s710 = sshll.u32 %s703, 4
          %s711 = int_to_ptr.vmem [resolvable:$true] %s710
          %716 = dma.hbm_to_vmem [thread:$0]  %s709, 256, %s711, %s700, 128, 128, 8
        $region100: #{run_decoder_layer.1} parent=95 // pred_fallthru
          _
        // Predicated region
        $region101: #{run_decoder_layer.1} parent=95 // pred_check
          %p717 = pneg %p87
        $region102: #{run_decoder_layer.1} parent=95 // pred_check_branch
          %719 = sbr.rel (%p717) target = $region104
        $region103: #{run_decoder_layer.1} parent=95 // pred_region
          %s720 = sand.u32 %s41, 1
          %s721 = scalar_lea.sflag [#allocation6], %s720
          %s722 = sand.u32 %s77, 1
          %s723 = smul.addr %s722, 32
          %s724 = scalar_lea.vmem [#allocation5], %s723
          %s726 = ssub.s32 512, 512
          %727 = vsyncadd %s721, %s726
          %s728 = smul.addr %s41, 4
          %s729 = smul.addr %s728, 128
          %s730 = scalar_lea.hbm %s1, %s729
          %s731 = sshll.u32 %s724, 4
          %s732 = int_to_ptr.vmem [resolvable:$true] %s731
          %737 = dma.hbm_to_vmem [thread:$0]  %s730, 512, %s732, %s721, 128, 128, 8
        $region104: #{run_decoder_layer.1} parent=95 // pred_fallthru
          _
      $region96: #{run_decoder_layer.1} parent=5 // pred_fallthru
        _
      %p738 = scmp.le.s32.totalorder 1, %s41
      %p739 = scmp.lt.s32.totalorder %s41, 3
      %p740 = pnand %p738, %p739
      %p741 = pneg %p740
      // Predicated region
      $region105: #{run_decoder_layer.1} parent=5 // pred_check
        _
      $region106: #{run_decoder_layer.1} parent=5 // pred_check_branch
        %743 = sbr.rel (%p740) target = $region108
      $region107: #{run_decoder_layer.1} parent=5 // pred_region
        %s744 = ssub.s32 %s41, 1
        %s745 = sand.u32 %s54, 1
        %s746 = scalar_lea.sflag [#allocation3], %s745
        %s747 = sand.u32 %s54, 1
        %s748 = smul.addr %s747, 16
        %s749 = scalar_lea.vmem [#allocation2], %s748
        // Predicated region
        $region109: #{run_decoder_layer.1} parent=107 // pred_check
          %p750 = pneg %p67
        $region110: #{run_decoder_layer.1} parent=107 // pred_check_branch
          %752 = sbr.rel (%p750) target = $region112
        $region111: #{run_decoder_layer.1} parent=107 // pred_region
          %753 = dma.done %s746, 256
        $region112: #{run_decoder_layer.1} parent=107 // pred_fallthru
          _
        %s754 = sand.u32 %s46, 1
        %s755 = scalar_lea.sflag [#allocation6], %s754
        %s756 = sand.u32 %s80, 1
        %s757 = smul.addr %s756, 32
        %s758 = scalar_lea.vmem [#allocation5], %s757
        // Predicated region
        $region113: #{run_decoder_layer.1} parent=107 // pred_check
          %p759 = pneg %p93
        $region114: #{run_decoder_layer.1} parent=107 // pred_check_branch
          %761 = sbr.rel (%p759) target = $region116
        $region115: #{run_decoder_layer.1} parent=107 // pred_region
          %762 = dma.done %s755, 512
        $region116: #{run_decoder_layer.1} parent=107 // pred_fallthru
          _
        // Predicated region
        $region117: #{run_decoder_layer.1} parent=107 // pred_check
          %p763 = pneg %p114
        $region118: #{run_decoder_layer.1} parent=107 // pred_check_branch
          %765 = sbr.rel (%p763) target = $region120
        $region119: #{run_decoder_layer.1} parent=107 // pred_region
          %766 = dma.done [#allocation6], 16
        $region120: #{run_decoder_layer.1} parent=107 // pred_fallthru
          _
        // Predicated region
        $region121: #{run_decoder_layer.1} parent=107 // pred_check
          %p767 = pneg %p156
        $region122: #{run_decoder_layer.1} parent=107 // pred_check_branch
          %769 = sbr.rel (%p767) target = $region124
        $region123: #{run_decoder_layer.1} parent=107 // pred_region
          %770 = dma.done [#allocation9], 3072
        $region124: #{run_decoder_layer.1} parent=107 // pred_fallthru
          _
        // Predicated region
        $region125: #{run_decoder_layer.1} parent=107 // pred_check
          %p771 = pneg %p198
        $region126: #{run_decoder_layer.1} parent=107 // pred_check_branch
          %773 = sbr.rel (%p771) target = $region128
        $region127: #{run_decoder_layer.1} parent=107 // pred_region
          %774 = dma.done [#allocation9], 1024
        $region128: #{run_decoder_layer.1} parent=107 // pred_fallthru
          _
        // Predicated region
        $region129: #{run_decoder_layer.1} parent=107 // pred_check
          %p775 = pneg %p282
        $region130: #{run_decoder_layer.1} parent=107 // pred_check_branch
          %777 = sbr.rel (%p775) target = $region132
        $region131: #{run_decoder_layer.1} parent=107 // pred_region
          %778 = dma.done [#allocation12], 1024
        $region132: #{run_decoder_layer.1} parent=107 // pred_fallthru
          _
        // Predicated region
        $region133: #{run_decoder_layer.1} parent=107 // pred_check
          %p779 = pneg %p324
        $region134: #{run_decoder_layer.1} parent=107 // pred_check_branch
          %781 = sbr.rel (%p779) target = $region136
        $region135: #{run_decoder_layer.1} parent=107 // pred_region
          %782 = dma.done [#allocation12], 2048
        $region136: #{run_decoder_layer.1} parent=107 // pred_fallthru
          _
        // Predicated region
        $region137: #{run_decoder_layer.1} parent=107 // pred_check
          %p783 = pneg %p366
        $region138: #{run_decoder_layer.1} parent=107 // pred_check_branch
          %785 = sbr.rel (%p783) target = $region140
        $region139: #{run_decoder_layer.1} parent=107 // pred_region
          %786 = dma.done [#allocation15], 1024
        $region140: #{run_decoder_layer.1} parent=107 // pred_fallthru
          _
        // Predicated region
        $region141: #{run_decoder_layer.1} parent=107 // pred_check
          %p787 = pneg %p450
        $region142: #{run_decoder_layer.1} parent=107 // pred_check_branch
          %789 = sbr.rel (%p787) target = $region144
        $region143: #{run_decoder_layer.1} parent=107 // pred_region
          %790 = dma.done [#allocation15], 2048
        $region144: #{run_decoder_layer.1} parent=107 // pred_fallthru
          _
        // Predicated region
        $region145: #{run_decoder_layer.1} parent=107 // pred_check
          %p791 = pneg %p492
        $region146: #{run_decoder_layer.1} parent=107 // pred_check_branch
          %793 = sbr.rel (%p791) target = $region148
        $region147: #{run_decoder_layer.1} parent=107 // pred_region
          %794 = dma.done [#allocation18], 2048
        $region148: #{run_decoder_layer.1} parent=107 // pred_fallthru
          _
        %s795 = sand.u32 %s54, 1
        %s796 = scalar_lea.sflag [#allocation3], %s795
        %s797 = sand.u32 %s54, 1
        %s798 = smul.addr %s797, 16
        %s799 = scalar_lea.vmem [#allocation2], %s798
        %p800 = pneg %p67
        %p801 = pneg %p64
        %s802 = sand.u32 %s46, 1
        %s803 = scalar_lea.sflag [#allocation6], %s802
        %s804 = sand.u32 %s80, 1
        %s805 = smul.addr %s804, 32
        %s806 = scalar_lea.vmem [#allocation5], %s805
        %p807 = pneg %p93
        %p808 = pneg %p90
        %p809 = pneg %p114
        %p810 = pneg %p111
        %p811 = pneg %p135
        %p812 = pneg %p132
        %p813 = pneg %p156
        %p814 = pneg %p153
        %p815 = pneg %p177
        %p816 = pneg %p174
        %p817 = pneg %p198
        %p818 = pneg %p195
        %p819 = pneg %p219
        %p820 = pneg %p216
        %p821 = pneg %p240
        %p822 = pneg %p237
        %p823 = pneg %p261
        %p824 = pneg %p258
        %p825 = pneg %p282
        %p826 = pneg %p279
        %p827 = pneg %p303
        %p828 = pneg %p300
        %p829 = pneg %p324
        %p830 = pneg %p321
        %p831 = pneg %p345
        %p832 = pneg %p342
        %p833 = pneg %p366
        %p834 = pneg %p363
        %p835 = pneg %p387
        %p836 = pneg %p384
        %p837 = pneg %p408
        %p838 = pneg %p405
        %p839 = pneg %p429
        %p840 = pneg %p426
        %p841 = pneg %p450
        %p842 = pneg %p447
        %p843 = pneg %p471
        %p844 = pneg %p468
        %p845 = pneg %p492
        %p846 = pneg %p489
        %p847 = pneg %p513
        %p848 = pneg %p510
        %p849 = pneg %p539
        %p850 = pneg %p536
        %s851 = sand.u32 %s526, 1
        %s852 = scalar_lea.sflag [#allocation4], %s851
        %s853 = sand.u32 %s526, 1
        %s854 = smul.addr %s853, 16
        %s855 = scalar_lea.vmem [#allocation19], %s854
        %v857 = vld [vmem:[%s749] sm:$0xff]
        %v858 = vld [vmem:[%s749 + $0x8] sm:$0xff]
        %v859 = vld [vmem:[%s758] sm:$0xff]
        %v860 = vld [vmem:[%s758 + $0x8] sm:$0xff]
        %v861 = vld [vmem:[%s758 + $0x10] sm:$0xff]
        %v862 = vld [vmem:[%s758 + $0x18] sm:$0xff]
        %v863 = vld [vmem:[#allocation7] sm:$0x1]
        %v864 = vld [vmem:[%s3] sm:$0x1]
        %865 = vadd.xlane.f32.xlu0 %v857
        %v866 = vpop.xlane.xlu0 %865
        %867 = vadd.xlane.f32.xlu0 %v858
        %v868 = vpop.xlane.xlu0 %867
        %v869 = vrcp.pop 128.0
        %v870 = vmul.f32 %v866, %v869
        %v871 = vmul.f32 %v868, %v869
        %v872 = vsub.f32 %v857, %v870
        %v873 = vsub.f32 %v858, %v871
        %v874 = vmul.f32 %v872, %v872
        %v875 = vmul.f32 %v873, %v873
        %876 = vadd.xlane.f32.xlu0 %v874
        %v877 = vpop.xlane.xlu0 %876
        %878 = vadd.xlane.f32.xlu0 %v875
        %v879 = vpop.xlane.xlu0 %878
        %v880 = vmul.f32 %v877, %v869
        %v881 = vmul.f32 %v879, %v869
        %v882 = vadd.f32 %v880, 1e-05
        %v883 = vadd.f32 %v881, 1e-05
        %v884 = vrsqrt.pop %v882
        %v885 = vrsqrt.pop %v883
        %v886 = vmul.f32 %v872, %v884
        %v887 = vmul.f32 %v873, %v885
        %v889 = vlaneseq
        %v890 = vshrl.u32 %v889, 7
        %v891 = vsub.s32 0, %v890
        %v892 = vrot.slane %v863, %v891
        %v894 = vmul.f32 %v886, %v892
        %v895 = vmul.f32 %v887, %v892
        %v897 = vlaneseq
        %v898 = vshrl.u32 %v897, 7
        %v899 = vsub.s32 0, %v898
        %v900 = vrot.slane %v864, %v899
        %v902 = vadd.f32 %v894, %v900
        %v903 = vadd.f32 %v895, %v900
        %v904 = vpack.c.bf16 %v903, %v902
        %v905 = vld [vmem:[#allocation8] sm:$0xff]
        %v906 = vld [vmem:[#allocation8 + $0x8] sm:$0xf]
        %v907 = vld [vmem:[#allocation8 + $0xc] sm:$0xff]
        %v908 = vld [vmem:[#allocation8 + $0x14] sm:$0xf]
        %v909 = vld [vmem:[#allocation8 + $0x18] sm:$0xff]
        %v910 = vld [vmem:[#allocation8 + $0x20] sm:$0xf]
        %v911 = vld [vmem:[#allocation8 + $0x24] sm:$0xff]
        %v912 = vld [vmem:[#allocation8 + $0x2c] sm:$0xf]
        %v913 = vld [vmem:[#allocation8 + $0x30] sm:$0xff]
        %v914 = vld [vmem:[#allocation8 + $0x38] sm:$0xf]
        %v915 = vld [vmem:[#allocation8 + $0x3c] sm:$0xff]
        %v916 = vld [vmem:[#allocation8 + $0x44] sm:$0xf]
        %v917 = vld [vmem:[#allocation8 + $0x48] sm:$0xff]
        %v918 = vld [vmem:[#allocation8 + $0x50] sm:$0xf]
        %v919 = vld [vmem:[#allocation8 + $0x54] sm:$0xff]
        %v920 = vld [vmem:[#allocation8 + $0x5c] sm:$0xf]
        %v921 = vld [vmem:[#allocation8 + $0x60] sm:$0xff]
        %v922 = vld [vmem:[#allocation8 + $0x68] sm:$0xf]
        %v923 = vld [vmem:[#allocation8 + $0x6c] sm:$0xff]
        %v924 = vld [vmem:[#allocation8 + $0x74] sm:$0xf]
        %v925 = vld [vmem:[#allocation8 + $0x78] sm:$0xff]
        %v926 = vld [vmem:[#allocation8 + $0x80] sm:$0xf]
        %v927 = vld [vmem:[#allocation8 + $0x84] sm:$0xff]
        %v928 = vld [vmem:[#allocation8 + $0x8c] sm:$0xf]
        %v929 = vld [vmem:[#allocation8 + $0x90] sm:$0xff]
        %v930 = vld [vmem:[#allocation8 + $0x98] sm:$0xf]
        %v931 = vld [vmem:[#allocation8 + $0x9c] sm:$0xff]
        %v932 = vld [vmem:[#allocation8 + $0xa4] sm:$0xf]
        %v933 = vld [vmem:[#allocation8 + $0xa8] sm:$0xff]
        %v934 = vld [vmem:[#allocation8 + $0xb0] sm:$0xf]
        %v935 = vld [vmem:[#allocation8 + $0xb4] sm:$0xff]
        %v936 = vld [vmem:[#allocation8 + $0xbc] sm:$0xf]
        %v937 = vld [vmem:[%s5] sm:$0x7]
        %v939 = vlaneseq
        %v940 = vshrl.u32 %v939, 7
        %v941 = vsub.s32 0, %v940
        %v942 = vrot.slane %v937, %v941
        %v943 = vlaneseq
        %v944 = vshrl.u32 %v943, 7
        %v945 = vsub.s32 1, %v944
        %v946 = vrot.slane %v937, %v945
        %v947 = vlaneseq
        %v948 = vshrl.u32 %v947, 7
        %v949 = vsub.s32 2, %v948
        %v950 = vrot.slane %v937, %v949
        %v986 = vunpack.c.l.b16 %v905
        %v987 = vunpack.c.h.b16 %v905
        %v988 = vunpack.c.l.b16 %v906
        %v989 = vunpack.c.l.b16 %v907
        %v990 = vunpack.c.h.b16 %v907
        %v991 = vunpack.c.l.b16 %v908
        %v992 = vunpack.c.l.b16 %v909
        %v993 = vunpack.c.h.b16 %v909
        %v994 = vunpack.c.l.b16 %v910
        %v995 = vunpack.c.l.b16 %v911
        %v996 = vunpack.c.h.b16 %v911
        %v997 = vunpack.c.l.b16 %v912
        %v998 = vunpack.c.l.b16 %v913
        %v999 = vunpack.c.h.b16 %v913
        %v1000 = vunpack.c.l.b16 %v914
        %v1001 = vunpack.c.l.b16 %v915
        %v1002 = vunpack.c.h.b16 %v915
        %v1003 = vunpack.c.l.b16 %v916
        %v1004 = vunpack.c.l.b16 %v917
        %v1005 = vunpack.c.h.b16 %v917
        %v1006 = vunpack.c.l.b16 %v918
        %v1007 = vunpack.c.l.b16 %v919
        %v1008 = vunpack.c.h.b16 %v919
        %v1009 = vunpack.c.l.b16 %v920
        %v1010 = vunpack.c.l.b16 %v921
        %v1011 = vunpack.c.h.b16 %v921
        %v1012 = vunpack.c.l.b16 %v922
        %v1013 = vunpack.c.l.b16 %v923
        %v1014 = vunpack.c.h.b16 %v923
        %v1015 = vunpack.c.l.b16 %v924
        %v1016 = vunpack.c.l.b16 %v925
        %v1017 = vunpack.c.h.b16 %v925
        %v1018 = vunpack.c.l.b16 %v926
        %v1019 = vunpack.c.l.b16 %v927
        %v1020 = vunpack.c.h.b16 %v927
        %v1021 = vunpack.c.l.b16 %v928
        %v1022 = vunpack.c.l.b16 %v929
        %v1023 = vunpack.c.h.b16 %v929
        %v1024 = vunpack.c.l.b16 %v930
        %v1025 = vunpack.c.l.b16 %v931
        %v1026 = vunpack.c.h.b16 %v931
        %v1027 = vunpack.c.l.b16 %v932
        %v1028 = vunpack.c.l.b16 %v933
        %v1029 = vunpack.c.h.b16 %v933
        %v1030 = vunpack.c.l.b16 %v934
        %v1031 = vunpack.c.l.b16 %v935
        %v1032 = vunpack.c.h.b16 %v935
        %v1033 = vunpack.c.l.b16 %v936
        %v1034 = vpack.c.b16 %v989, %v986
        %v1035 = vpack.c.b16 %v990, %v987
        %v1036 = vpack.c.b16 %v991, %v988
        %v1037 = vpack.c.b16 %v995, %v992
        %v1038 = vpack.c.b16 %v996, %v993
        %v1039 = vpack.c.b16 %v997, %v994
        %v1040 = vpack.c.b16 %v1001, %v998
        %v1041 = vpack.c.b16 %v1002, %v999
        %v1042 = vpack.c.b16 %v1003, %v1000
        %v1043 = vpack.c.b16 %v1007, %v1004
        %v1044 = vpack.c.b16 %v1008, %v1005
        %v1045 = vpack.c.b16 %v1009, %v1006
        %v1046 = vpack.c.b16 %v1013, %v1010
        %v1047 = vpack.c.b16 %v1014, %v1011
        %v1048 = vpack.c.b16 %v1015, %v1012
        %v1049 = vpack.c.b16 %v1019, %v1016
        %v1050 = vpack.c.b16 %v1020, %v1017
        %v1051 = vpack.c.b16 %v1021, %v1018
        %v1052 = vpack.c.b16 %v1025, %v1022
        %v1053 = vpack.c.b16 %v1026, %v1023
        %v1054 = vpack.c.b16 %v1027, %v1024
        %v1055 = vpack.c.b16 %v1031, %v1028
        %v1056 = vpack.c.b16 %v1032, %v1029
        %v1057 = vpack.c.b16 %v1033, %v1030
        %1082 = vmatprep.subr.bf16.mxu0 %v1035
        %1083 = vmatpush1.bf16.msra.mxu0 %v1034
        %1084 = vmatprep.subr.bf16.mxu0 %v1038
        %1085 = vmatpush1.bf16.msra.mxu0 %v1037
        %1086 = vmatprep.subr.bf16.mxu0 %v1041
        %1087 = vmatpush1.bf16.msra.mxu0 %v1040
        %1088 = vmatprep.subr.bf16.mxu0 %v1044
        %1089 = vmatpush1.bf16.msra.mxu0 %v1043
        %1090 = vmatprep.subr.bf16.mxu0 %v1047
        %1091 = vmatpush1.bf16.msra.mxu0 %v1046
        %1092 = vmatprep.subr.bf16.mxu0 %v1050
        %1093 = vmatpush1.bf16.msra.mxu0 %v1049
        %1094 = vmatprep.subr.bf16.mxu0 %v1053
        %1095 = vmatpush1.bf16.msra.mxu0 %v1052
        %1096 = vmatprep.subr.bf16.mxu0 %v1056
        %1097 = vmatpush1.bf16.msra.mxu0 %v1055
        %1098 = vmatprep.subr.bf16.mxu0 0
        %1099 = vmatpush1.bf16.msra.mxu0 0
        %1100 = vmatprep.subr.bf16.mxu0 0
        %1101 = vmatpush1.bf16.msra.mxu0 0
        %1102 = vmatprep.subr.bf16.mxu0 0
        %1103 = vmatpush1.bf16.msra.mxu0 0
        %1104 = vmatprep.subr.bf16.mxu0 0
        %1105 = vmatpush1.bf16.msra.mxu0 0
        %1106 = vmatprep.subr.bf16.mxu0 0
        %1107 = vmatpush1.bf16.msra.mxu0 0
        %1108 = vmatprep.subr.bf16.mxu0 0
        %1109 = vmatpush1.bf16.msra.mxu0 0
        %1110 = vmatprep.subr.bf16.mxu0 0
        %1111 = vmatpush1.bf16.msra.mxu0 0
        %1112 = vmatprep.subr.bf16.mxu0 0
        %1113 = vmatpush1.bf16.msra.mxu0 0
        %1114 = vmatprep.mubr.bf16.mxu0 0
        %1115 = vmatmul.mubr.bf16.gmra.mrb[0].mxu0 %v904
        %v1116 = vpop.f32.mrb[0].mxu0
        %v1117 = vadd.f32 %v942, %v1116
        %v1118 = vpop.f32.mrb[0].mxu0
        %v1119 = vadd.f32 %v946, %v1118
        %v1120 = vpop.f32.mrb[0].mxu0
        %v1121 = vadd.f32 %v942, %v1120
        %v1122 = vpop.f32.mrb[0].mxu0
        %v1123 = vadd.f32 %v946, %v1122
        %1124 = vdwg.mxu0
        %1125 = vmatprep.subr.bf16.mxu0 0
        %1126 = vmatpush1.bf16.msra.mxu0 %v1036
        %1127 = vmatprep.subr.bf16.mxu0 0
        %1128 = vmatpush1.bf16.msra.mxu0 %v1039
        %1129 = vmatprep.subr.bf16.mxu0 0
        %1130 = vmatpush1.bf16.msra.mxu0 %v1042
        %1131 = vmatprep.subr.bf16.mxu0 0
        %1132 = vmatpush1.bf16.msra.mxu0 %v1045
        %1133 = vmatprep.subr.bf16.mxu0 0
        %1134 = vmatpush1.bf16.msra.mxu0 %v1048
        %1135 = vmatprep.subr.bf16.mxu0 0
        %1136 = vmatpush1.bf16.msra.mxu0 %v1051
        %1137 = vmatprep.subr.bf16.mxu0 0
        %1138 = vmatpush1.bf16.msra.mxu0 %v1054
        %1139 = vmatprep.subr.bf16.mxu0 0
        %1140 = vmatpush1.bf16.msra.mxu0 %v1057
        %1141 = vmatprep.subr.bf16.mxu0 0
        %1142 = vmatpush1.bf16.msra.mxu0 0
        %1143 = vmatprep.subr.bf16.mxu0 0
        %1144 = vmatpush1.bf16.msra.mxu0 0
        %1145 = vmatprep.subr.bf16.mxu0 0
        %1146 = vmatpush1.bf16.msra.mxu0 0
        %1147 = vmatprep.subr.bf16.mxu0 0
        %1148 = vmatpush1.bf16.msra.mxu0 0
        %1149 = vmatprep.subr.bf16.mxu0 0
        %1150 = vmatpush1.bf16.msra.mxu0 0
        %1151 = vmatprep.subr.bf16.mxu0 0
        %1152 = vmatpush1.bf16.msra.mxu0 0
        %1153 = vmatprep.subr.bf16.mxu0 0
        %1154 = vmatpush1.bf16.msra.mxu0 0
        %1155 = vmatprep.subr.bf16.mxu0 0
        %1156 = vmatpush1.bf16.msra.mxu0 0
        %1157 = vmatprep.mubr.bf16.mxu0 0
        %1158 = vmatmul.mubr.bf16.gmra.mrb[0].mxu0 %v904
        %v1159 = vpop.f32.mrb[0].mxu0
        %v1160 = vadd.f32 %v950, %v1159
        %v1161 = vpop.f32.mrb[0].mxu0
        %v1162 = vpop.f32.mrb[0].mxu0
        %v1163 = vadd.f32 %v950, %v1162
        %v1164 = vpop.f32.mrb[0].mxu0
        %1165 = vdwg.mxu0
        %v1166 = vpack.c.bf16 %v1121, %v1117
        %v1167 = vpack.c.bf16 %v1123, %v1119
        %v1168 = vpack.c.bf16 %v1163, %v1160
        %v1169 = vld [vmem:[#allocation10] sm:$0xf]
        %v1170 = vld [vmem:[#allocation10 + $0x4] sm:$0xf]
        %v1171 = vld [vmem:[#allocation10 + $0x8] sm:$0xf]
        %v1172 = vld [vmem:[#allocation10 + $0xc] sm:$0xf]
        %v1173 = vld [vmem:[#allocation10 + $0x10] sm:$0xf]
        %v1174 = vld [vmem:[#allocation10 + $0x14] sm:$0xf]
        %v1175 = vld [vmem:[#allocation10 + $0x18] sm:$0xf]
        %v1176 = vld [vmem:[#allocation10 + $0x1c] sm:$0xf]
        %v1177 = vld [vmem:[#allocation10 + $0x20] sm:$0xf]
        %v1178 = vld [vmem:[#allocation10 + $0x24] sm:$0xf]
        %v1179 = vld [vmem:[#allocation10 + $0x28] sm:$0xf]
        %v1180 = vld [vmem:[#allocation10 + $0x2c] sm:$0xf]
        %v1181 = vld [vmem:[#allocation10 + $0x30] sm:$0xf]
        %v1182 = vld [vmem:[#allocation10 + $0x34] sm:$0xf]
        %v1183 = vld [vmem:[#allocation10 + $0x38] sm:$0xf]
        %v1184 = vld [vmem:[#allocation10 + $0x3c] sm:$0xf]
        %v1185 = vld [vmem:[%s7] sm:$0x1]
        %1187 = vrot.lane.b32.xlu0 %v1166, 96
        %v1188 = vpop.permute.xlu0 %1187
        %1189 = vrot.lane.b32.xlu0 %v1166, 64
        %v1190 = vpop.permute.xlu0 %1189
        %1191 = vrot.lane.b32.xlu0 %v1166, 32
        %v1192 = vpop.permute.xlu0 %1191
        %1194 = vrot.lane.b32.xlu0 %v1167, 96
        %v1195 = vpop.permute.xlu0 %1194
        %1196 = vrot.lane.b32.xlu0 %v1167, 64
        %v1197 = vpop.permute.xlu0 %1196
        %1198 = vrot.lane.b32.xlu0 %v1167, 32
        %v1199 = vpop.permute.xlu0 %1198
        %1201 = vrot.lane.b32.xlu0 %v1168, 96
        %v1202 = vpop.permute.xlu0 %1201
        %1204 = vrot.lane.b32.xlu0 %v1168, 64
        %v1205 = vpop.permute.xlu0 %1204
        %1207 = vrot.lane.b32.xlu0 %v1168, 32
        %v1208 = vpop.permute.xlu0 %1207
        %vm1210 = vcmask 261120
        %v1212 = vsel %vm1210, %v1166, 0
        %v1215 = vsel %vm1210, %v1167, 0
        %1217 = vmatprep.subr.bf16.mxu0 0
        %1218 = vmatpush1.bf16.xpose.msra.mxu0 %v1215
        %1219 = vmatprep.subr.bf16.mxu0 0
        %1220 = vmatpush1.bf16.xpose.msra.mxu0 0
        %1221 = vmatprep.subr.bf16.mxu0 0
        %1222 = vmatpush1.bf16.xpose.msra.mxu0 0
        %1223 = vmatprep.subr.bf16.mxu0 0
        %1224 = vmatpush1.bf16.xpose.msra.mxu0 0
        %1225 = vmatprep.subr.bf16.mxu0 0
        %1226 = vmatpush1.bf16.xpose.msra.mxu0 0
        %1227 = vmatprep.subr.bf16.mxu0 0
        %1228 = vmatpush1.bf16.xpose.msra.mxu0 0
        %1229 = vmatprep.subr.bf16.mxu0 0
        %1230 = vmatpush1.bf16.xpose.msra.mxu0 0
        %1231 = vmatprep.subr.bf16.mxu0 0
        %1232 = vmatpush1.bf16.xpose.msra.mxu0 0
        %1233 = vmatprep.subr.bf16.mxu0 0
        %1234 = vmatpush1.bf16.xpose.msra.mxu0 0
        %1235 = vmatprep.subr.bf16.mxu0 0
        %1236 = vmatpush1.bf16.xpose.msra.mxu0 0
        %1237 = vmatprep.subr.bf16.mxu0 0
        %1238 = vmatpush1.bf16.xpose.msra.mxu0 0
        %1239 = vmatprep.subr.bf16.mxu0 0
        %1240 = vmatpush1.bf16.xpose.msra.mxu0 0
        %1241 = vmatprep.subr.bf16.mxu0 0
        %1242 = vmatpush1.bf16.xpose.msra.mxu0 0
        %1243 = vmatprep.subr.bf16.mxu0 0
        %1244 = vmatpush1.bf16.xpose.msra.mxu0 0
        %1245 = vmatprep.subr.bf16.mxu0 0
        %1246 = vmatpush1.bf16.xpose.msra.mxu0 0
        %1247 = vmatprep.subr.bf16.mxu0 0
        %1248 = vmatpush1.bf16.xpose.msra.mxu0 0
        %1249 = vmatprep.mubr.bf16.mxu0 0
        %1250 = vmatmul.mubr.bf16.gmra.mrb[0].mxu0 %v1212
        %v1251 = vpop.f32.mrb[0].mxu0
        %v1252 = vadd.f32 0.0, %v1251
        %v1253 = vpop.f32.mrb[0].mxu0
        %v1254 = vpop.f32.mrb[0].mxu0
        %v1255 = vadd.f32 0.0, %v1254
        %v1256 = vpop.f32.mrb[0].mxu0
        %1257 = vdwg.mxu0
        %v1259 = vsel %vm1210, %v1188, 0
        %v1262 = vsel %vm1210, %v1195, 0
        %1264 = vmatprep.subr.bf16.mxu0 0
        %1265 = vmatpush1.bf16.xpose.msra.mxu0 %v1262
        %1266 = vmatprep.subr.bf16.mxu0 0
        %1267 = vmatpush1.bf16.xpose.msra.mxu0 0
        %1268 = vmatprep.subr.bf16.mxu0 0
        %1269 = vmatpush1.bf16.xpose.msra.mxu0 0
        %1270 = vmatprep.subr.bf16.mxu0 0
        %1271 = vmatpush1.bf16.xpose.msra.mxu0 0
        %1272 = vmatprep.subr.bf16.mxu0 0
        %1273 = vmatpush1.bf16.xpose.msra.mxu0 0
        %1274 = vmatprep.subr.bf16.mxu0 0
        %1275 = vmatpush1.bf16.xpose.msra.mxu0 0
        %1276 = vmatprep.subr.bf16.mxu0 0
        %1277 = vmatpush1.bf16.xpose.msra.mxu0 0
        %1278 = vmatprep.subr.bf16.mxu0 0
        %1279 = vmatpush1.bf16.xpose.msra.mxu0 0
        %1280 = vmatprep.subr.bf16.mxu0 0
        %1281 = vmatpush1.bf16.xpose.msra.mxu0 0
        %1282 = vmatprep.subr.bf16.mxu0 0
        %1283 = vmatpush1.bf16.xpose.msra.mxu0 0
        %1284 = vmatprep.subr.bf16.mxu0 0
        %1285 = vmatpush1.bf16.xpose.msra.mxu0 0
        %1286 = vmatprep.subr.bf16.mxu0 0
        %1287 = vmatpush1.bf16.xpose.msra.mxu0 0
        %1288 = vmatprep.subr.bf16.mxu0 0
        %1289 = vmatpush1.bf16.xpose.msra.mxu0 0
        %1290 = vmatprep.subr.bf16.mxu0 0
        %1291 = vmatpush1.bf16.xpose.msra.mxu0 0
        %1292 = vmatprep.subr.bf16.mxu0 0
        %1293 = vmatpush1.bf16.xpose.msra.mxu0 0
        %1294 = vmatprep.subr.bf16.mxu0 0
        %1295 = vmatpush1.bf16.xpose.msra.mxu0 0
        %1296 = vmatprep.mubr.bf16.mxu0 0
        %1297 = vmatmul.mubr.bf16.gmra.mrb[0].mxu0 %v1259
        %v1298 = vpop.f32.mrb[0].mxu0
        %v1299 = vadd.f32 0.0, %v1298
        %v1300 = vpop.f32.mrb[0].mxu0
        %v1301 = vpop.f32.mrb[0].mxu0
        %v1302 = vadd.f32 0.0, %v1301
        %v1303 = vpop.f32.mrb[0].mxu0
        %1304 = vdwg.mxu0
        %v1306 = vsel %vm1210, %v1190, 0
        %v1309 = vsel %vm1210, %v1197, 0
        %1311 = vmatprep.subr.bf16.mxu0 0
        %1312 = vmatpush1.bf16.xpose.msra.mxu0 %v1309
        %1313 = vmatprep.subr.bf16.mxu0 0
        %1314 = vmatpush1.bf16.xpose.msra.mxu0 0
        %1315 = vmatprep.subr.bf16.mxu0 0
        %1316 = vmatpush1.bf16.xpose.msra.mxu0 0
        %1317 = vmatprep.subr.bf16.mxu0 0
        %1318 = vmatpush1.bf16.xpose.msra.mxu0 0
        %1319 = vmatprep.subr.bf16.mxu0 0
        %1320 = vmatpush1.bf16.xpose.msra.mxu0 0
        %1321 = vmatprep.subr.bf16.mxu0 0
        %1322 = vmatpush1.bf16.xpose.msra.mxu0 0
        %1323 = vmatprep.subr.bf16.mxu0 0
        %1324 = vmatpush1.bf16.xpose.msra.mxu0 0
        %1325 = vmatprep.subr.bf16.mxu0 0
        %1326 = vmatpush1.bf16.xpose.msra.mxu0 0
        %1327 = vmatprep.subr.bf16.mxu0 0
        %1328 = vmatpush1.bf16.xpose.msra.mxu0 0
        %1329 = vmatprep.subr.bf16.mxu0 0
        %1330 = vmatpush1.bf16.xpose.msra.mxu0 0
        %1331 = vmatprep.subr.bf16.mxu0 0
        %1332 = vmatpush1.bf16.xpose.msra.mxu0 0
        %1333 = vmatprep.subr.bf16.mxu0 0
        %1334 = vmatpush1.bf16.xpose.msra.mxu0 0
        %1335 = vmatprep.subr.bf16.mxu0 0
        %1336 = vmatpush1.bf16.xpose.msra.mxu0 0
        %1337 = vmatprep.subr.bf16.mxu0 0
        %1338 = vmatpush1.bf16.xpose.msra.mxu0 0
        %1339 = vmatprep.subr.bf16.mxu0 0
        %1340 = vmatpush1.bf16.xpose.msra.mxu0 0
        %1341 = vmatprep.subr.bf16.mxu0 0
        %1342 = vmatpush1.bf16.xpose.msra.mxu0 0
        %1343 = vmatprep.mubr.bf16.mxu0 0
        %1344 = vmatmul.mubr.bf16.gmra.mrb[0].mxu0 %v1306
        %v1345 = vpop.f32.mrb[0].mxu0
        %v1346 = vadd.f32 0.0, %v1345
        %v1347 = vpop.f32.mrb[0].mxu0
        %v1348 = vpop.f32.mrb[0].mxu0
        %v1349 = vadd.f32 0.0, %v1348
        %v1350 = vpop.f32.mrb[0].mxu0
        %1351 = vdwg.mxu0
        %v1353 = vsel %vm1210, %v1192, 0
        %v1356 = vsel %vm1210, %v1199, 0
        %1358 = vmatprep.subr.bf16.mxu0 0
        %1359 = vmatpush1.bf16.xpose.msra.mxu0 %v1356
        %1360 = vmatprep.subr.bf16.mxu0 0
        %1361 = vmatpush1.bf16.xpose.msra.mxu0 0
        %1362 = vmatprep.subr.bf16.mxu0 0
        %1363 = vmatpush1.bf16.xpose.msra.mxu0 0
        %1364 = vmatprep.subr.bf16.mxu0 0
        %1365 = vmatpush1.bf16.xpose.msra.mxu0 0
        %1366 = vmatprep.subr.bf16.mxu0 0
        %1367 = vmatpush1.bf16.xpose.msra.mxu0 0
        %1368 = vmatprep.subr.bf16.mxu0 0
        %1369 = vmatpush1.bf16.xpose.msra.mxu0 0
        %1370 = vmatprep.subr.bf16.mxu0 0
        %1371 = vmatpush1.bf16.xpose.msra.mxu0 0
        %1372 = vmatprep.subr.bf16.mxu0 0
        %1373 = vmatpush1.bf16.xpose.msra.mxu0 0
        %1374 = vmatprep.subr.bf16.mxu0 0
        %1375 = vmatpush1.bf16.xpose.msra.mxu0 0
        %1376 = vmatprep.subr.bf16.mxu0 0
        %1377 = vmatpush1.bf16.xpose.msra.mxu0 0
        %1378 = vmatprep.subr.bf16.mxu0 0
        %1379 = vmatpush1.bf16.xpose.msra.mxu0 0
        %1380 = vmatprep.subr.bf16.mxu0 0
        %1381 = vmatpush1.bf16.xpose.msra.mxu0 0
        %1382 = vmatprep.subr.bf16.mxu0 0
        %1383 = vmatpush1.bf16.xpose.msra.mxu0 0
        %1384 = vmatprep.subr.bf16.mxu0 0
        %1385 = vmatpush1.bf16.xpose.msra.mxu0 0
        %1386 = vmatprep.subr.bf16.mxu0 0
        %1387 = vmatpush1.bf16.xpose.msra.mxu0 0
        %1388 = vmatprep.subr.bf16.mxu0 0
        %1389 = vmatpush1.bf16.xpose.msra.mxu0 0
        %1390 = vmatprep.mubr.bf16.mxu0 0
        %1391 = vmatmul.mubr.bf16.gmra.mrb[0].mxu0 %v1353
        %v1392 = vpop.f32.mrb[0].mxu0
        %v1393 = vadd.f32 0.0, %v1392
        %v1394 = vpop.f32.mrb[0].mxu0
        %v1395 = vpop.f32.mrb[0].mxu0
        %v1396 = vadd.f32 0.0, %v1395
        %v1397 = vpop.f32.mrb[0].mxu0
        %1398 = vdwg.mxu0
        %vm1399 = vcmask 130048
        %v1400 = vsel %vm1399, %v1252, -inf
        %1401 = vmax.xlane.f32.xlu0 %v1400
        %v1402 = vpop.xlane.xlu0 %1401
        %v1403 = vsel %vm1399, %v1255, -inf
        %1404 = vmax.xlane.f32.xlu0 %v1403
        %v1405 = vpop.xlane.xlu0 %1404
        %v1406 = vsel %vm1399, %v1299, -inf
        %1407 = vmax.xlane.f32.xlu0 %v1406
        %v1408 = vpop.xlane.xlu0 %1407
        %v1409 = vsel %vm1399, %v1302, -inf
        %1410 = vmax.xlane.f32.xlu0 %v1409
        %v1411 = vpop.xlane.xlu0 %1410
        %v1412 = vsel %vm1399, %v1346, -inf
        %1413 = vmax.xlane.f32.xlu0 %v1412
        %v1414 = vpop.xlane.xlu0 %1413
        %v1415 = vsel %vm1399, %v1349, -inf
        %1416 = vmax.xlane.f32.xlu0 %v1415
        %v1417 = vpop.xlane.xlu0 %1416
        %v1418 = vsel %vm1399, %v1393, -inf
        %1419 = vmax.xlane.f32.xlu0 %v1418
        %v1420 = vpop.xlane.xlu0 %1419
        %v1421 = vsel %vm1399, %v1396, -inf
        %1422 = vmax.xlane.f32.xlu0 %v1421
        %v1423 = vpop.xlane.xlu0 %1422
        %v1424 = vsub.f32 %v1252, %v1402
        %v1425 = vsub.f32 %v1255, %v1405
        %v1426 = vsub.f32 %v1299, %v1408
        %v1427 = vsub.f32 %v1302, %v1411
        %v1428 = vsub.f32 %v1346, %v1414
        %v1429 = vsub.f32 %v1349, %v1417
        %v1430 = vsub.f32 %v1393, %v1420
        %v1431 = vsub.f32 %v1396, %v1423
        %v1432 = vmul.f32 %v1424, 1.442695
        %v1433 = vpow.pop %v1432
        %v1434 = vmul.f32 %v1425, 1.442695
        %v1435 = vpow.pop %v1434
        %v1436 = vmul.f32 %v1426, 1.442695
        %v1437 = vpow.pop %v1436
        %v1438 = vmul.f32 %v1427, 1.442695
        %v1439 = vpow.pop %v1438
        %v1440 = vmul.f32 %v1428, 1.442695
        %v1441 = vpow.pop %v1440
        %v1442 = vmul.f32 %v1429, 1.442695
        %v1443 = vpow.pop %v1442
        %v1444 = vmul.f32 %v1430, 1.442695
        %v1445 = vpow.pop %v1444
        %v1446 = vmul.f32 %v1431, 1.442695
        %v1447 = vpow.pop %v1446
        %v1448 = vsel %vm1399, %v1433, 0.0
        %1449 = vadd.xlane.f32.xlu0 %v1448
        %v1450 = vpop.xlane.xlu0 %1449
        %v1451 = vsel %vm1399, %v1435, 0.0
        %1452 = vadd.xlane.f32.xlu0 %v1451
        %v1453 = vpop.xlane.xlu0 %1452
        %v1454 = vsel %vm1399, %v1437, 0.0
        %1455 = vadd.xlane.f32.xlu0 %v1454
        %v1456 = vpop.xlane.xlu0 %1455
        %v1457 = vsel %vm1399, %v1439, 0.0
        %1458 = vadd.xlane.f32.xlu0 %v1457
        %v1459 = vpop.xlane.xlu0 %1458
        %v1460 = vsel %vm1399, %v1441, 0.0
        %1461 = vadd.xlane.f32.xlu0 %v1460
        %v1462 = vpop.xlane.xlu0 %1461
        %v1463 = vsel %vm1399, %v1443, 0.0
        %1464 = vadd.xlane.f32.xlu0 %v1463
        %v1465 = vpop.xlane.xlu0 %1464
        %v1466 = vsel %vm1399, %v1445, 0.0
        %1467 = vadd.xlane.f32.xlu0 %v1466
        %v1468 = vpop.xlane.xlu0 %1467
        %v1469 = vsel %vm1399, %v1447, 0.0
        %1470 = vadd.xlane.f32.xlu0 %v1469
        %v1471 = vpop.xlane.xlu0 %1470
        %v1472 = vrcp.pop %v1450
        %v1473 = vrcp.pop %v1453
        %v1474 = vrcp.pop %v1456
        %v1475 = vrcp.pop %v1459
        %v1476 = vrcp.pop %v1462
        %v1477 = vrcp.pop %v1465
        %v1478 = vrcp.pop %v1468
        %v1479 = vrcp.pop %v1471
        %v1480 = vmul.f32 %v1433, %v1472
        %v1481 = vmul.f32 %v1435, %v1473
        %v1482 = vmul.f32 %v1437, %v1474
        %v1483 = vmul.f32 %v1439, %v1475
        %v1484 = vmul.f32 %v1441, %v1476
        %v1485 = vmul.f32 %v1443, %v1477
        %v1486 = vmul.f32 %v1445, %v1478
        %v1487 = vmul.f32 %v1447, %v1479
        %v1488 = vpack.c.bf16 %v1481, %v1480
        %v1489 = vpack.c.bf16 %v1483, %v1482
        %v1490 = vpack.c.bf16 %v1485, %v1484
        %v1491 = vpack.c.bf16 %v1487, %v1486
        %v1493 = vsel %vm1399, %v1488, 0
        %1495 = vmatprep.subr.bf16.mxu0 0
        %1496 = vmatpush1.bf16.msra.mxu0 %v1168
        %1497 = vmatprep.subr.bf16.mxu0 0
        %1498 = vmatpush1.bf16.msra.mxu0 0
        %1499 = vmatprep.subr.bf16.mxu0 0
        %1500 = vmatpush1.bf16.msra.mxu0 0
        %1501 = vmatprep.subr.bf16.mxu0 0
        %1502 = vmatpush1.bf16.msra.mxu0 0
        %1503 = vmatprep.subr.bf16.mxu0 0
        %1504 = vmatpush1.bf16.msra.mxu0 0
        %1505 = vmatprep.subr.bf16.mxu0 0
        %1506 = vmatpush1.bf16.msra.mxu0 0
        %1507 = vmatprep.subr.bf16.mxu0 0
        %1508 = vmatpush1.bf16.msra.mxu0 0
        %1509 = vmatprep.subr.bf16.mxu0 0
        %1510 = vmatpush1.bf16.msra.mxu0 0
        %1511 = vmatprep.subr.bf16.mxu0 0
        %1512 = vmatpush1.bf16.msra.mxu0 0
        %1513 = vmatprep.subr.bf16.mxu0 0
        %1514 = vmatpush1.bf16.msra.mxu0 0
        %1515 = vmatprep.subr.bf16.mxu0 0
        %1516 = vmatpush1.bf16.msra.mxu0 0
        %1517 = vmatprep.subr.bf16.mxu0 0
        %1518 = vmatpush1.bf16.msra.mxu0 0
        %1519 = vmatprep.subr.bf16.mxu0 0
        %1520 = vmatpush1.bf16.msra.mxu0 0
        %1521 = vmatprep.subr.bf16.mxu0 0
        %1522 = vmatpush1.bf16.msra.mxu0 0
        %1523 = vmatprep.subr.bf16.mxu0 0
        %1524 = vmatpush1.bf16.msra.mxu0 0
        %1525 = vmatprep.subr.bf16.mxu0 0
        %1526 = vmatpush1.bf16.msra.mxu0 0
        %1527 = vmatprep.mubr.bf16.mxu0 0
        %1528 = vmatmul.mubr.bf16.gmra.mrb[0].mxu0 %v1493
        %v1529 = vpop.f32.mrb[0].mxu0
        %v1530 = vadd.f32 0.0, %v1529
        %v1531 = vpop.f32.mrb[0].mxu0
        %v1532 = vpop.f32.mrb[0].mxu0
        %v1533 = vadd.f32 0.0, %v1532
        %v1534 = vpop.f32.mrb[0].mxu0
        %1535 = vdwg.mxu0
        %v1537 = vsel %vm1399, %v1489, 0
        %1539 = vmatprep.subr.bf16.mxu0 0
        %1540 = vmatpush1.bf16.msra.mxu0 %v1202
        %1541 = vmatprep.subr.bf16.mxu0 0
        %1542 = vmatpush1.bf16.msra.mxu0 0
        %1543 = vmatprep.subr.bf16.mxu0 0
        %1544 = vmatpush1.bf16.msra.mxu0 0
        %1545 = vmatprep.subr.bf16.mxu0 0
        %1546 = vmatpush1.bf16.msra.mxu0 0
        %1547 = vmatprep.subr.bf16.mxu0 0
        %1548 = vmatpush1.bf16.msra.mxu0 0
        %1549 = vmatprep.subr.bf16.mxu0 0
        %1550 = vmatpush1.bf16.msra.mxu0 0
        %1551 = vmatprep.subr.bf16.mxu0 0
        %1552 = vmatpush1.bf16.msra.mxu0 0
        %1553 = vmatprep.subr.bf16.mxu0 0
        %1554 = vmatpush1.bf16.msra.mxu0 0
        %1555 = vmatprep.subr.bf16.mxu0 0
        %1556 = vmatpush1.bf16.msra.mxu0 0
        %1557 = vmatprep.subr.bf16.mxu0 0
        %1558 = vmatpush1.bf16.msra.mxu0 0
        %1559 = vmatprep.subr.bf16.mxu0 0
        %1560 = vmatpush1.bf16.msra.mxu0 0
        %1561 = vmatprep.subr.bf16.mxu0 0
        %1562 = vmatpush1.bf16.msra.mxu0 0
        %1563 = vmatprep.subr.bf16.mxu0 0
        %1564 = vmatpush1.bf16.msra.mxu0 0
        %1565 = vmatprep.subr.bf16.mxu0 0
        %1566 = vmatpush1.bf16.msra.mxu0 0
        %1567 = vmatprep.subr.bf16.mxu0 0
        %1568 = vmatpush1.bf16.msra.mxu0 0
        %1569 = vmatprep.subr.bf16.mxu0 0
        %1570 = vmatpush1.bf16.msra.mxu0 0
        %1571 = vmatprep.mubr.bf16.mxu0 0
        %1572 = vmatmul.mubr.bf16.gmra.mrb[0].mxu0 %v1537
        %v1573 = vpop.f32.mrb[0].mxu0
        %v1574 = vadd.f32 0.0, %v1573
        %v1575 = vpop.f32.mrb[0].mxu0
        %v1576 = vpop.f32.mrb[0].mxu0
        %v1577 = vadd.f32 0.0, %v1576
        %v1578 = vpop.f32.mrb[0].mxu0
        %1579 = vdwg.mxu0
        %v1581 = vsel %vm1399, %v1490, 0
        %1583 = vmatprep.subr.bf16.mxu0 0
        %1584 = vmatpush1.bf16.msra.mxu0 %v1205
        %1585 = vmatprep.subr.bf16.mxu0 0
        %1586 = vmatpush1.bf16.msra.mxu0 0
        %1587 = vmatprep.subr.bf16.mxu0 0
        %1588 = vmatpush1.bf16.msra.mxu0 0
        %1589 = vmatprep.subr.bf16.mxu0 0
        %1590 = vmatpush1.bf16.msra.mxu0 0
        %1591 = vmatprep.subr.bf16.mxu0 0
        %1592 = vmatpush1.bf16.msra.mxu0 0
        %1593 = vmatprep.subr.bf16.mxu0 0
        %1594 = vmatpush1.bf16.msra.mxu0 0
        %1595 = vmatprep.subr.bf16.mxu0 0
        %1596 = vmatpush1.bf16.msra.mxu0 0
        %1597 = vmatprep.subr.bf16.mxu0 0
        %1598 = vmatpush1.bf16.msra.mxu0 0
        %1599 = vmatprep.subr.bf16.mxu0 0
        %1600 = vmatpush1.bf16.msra.mxu0 0
        %1601 = vmatprep.subr.bf16.mxu0 0
        %1602 = vmatpush1.bf16.msra.mxu0 0
        %1603 = vmatprep.subr.bf16.mxu0 0
        %1604 = vmatpush1.bf16.msra.mxu0 0
        %1605 = vmatprep.subr.bf16.mxu0 0
        %1606 = vmatpush1.bf16.msra.mxu0 0
        %1607 = vmatprep.subr.bf16.mxu0 0
        %1608 = vmatpush1.bf16.msra.mxu0 0
        %1609 = vmatprep.subr.bf16.mxu0 0
        %1610 = vmatpush1.bf16.msra.mxu0 0
        %1611 = vmatprep.subr.bf16.mxu0 0
        %1612 = vmatpush1.bf16.msra.mxu0 0
        %1613 = vmatprep.subr.bf16.mxu0 0
        %1614 = vmatpush1.bf16.msra.mxu0 0
        %1615 = vmatprep.mubr.bf16.mxu0 0
        %1616 = vmatmul.mubr.bf16.gmra.mrb[0].mxu0 %v1581
        %v1617 = vpop.f32.mrb[0].mxu0
        %v1618 = vadd.f32 0.0, %v1617
        %v1619 = vpop.f32.mrb[0].mxu0
        %v1620 = vpop.f32.mrb[0].mxu0
        %v1621 = vadd.f32 0.0, %v1620
        %v1622 = vpop.f32.mrb[0].mxu0
        %1623 = vdwg.mxu0
        %v1625 = vsel %vm1399, %v1491, 0
        %1627 = vmatprep.subr.bf16.mxu0 0
        %1628 = vmatpush1.bf16.msra.mxu0 %v1208
        %1629 = vmatprep.subr.bf16.mxu0 0
        %1630 = vmatpush1.bf16.msra.mxu0 0
        %1631 = vmatprep.subr.bf16.mxu0 0
        %1632 = vmatpush1.bf16.msra.mxu0 0
        %1633 = vmatprep.subr.bf16.mxu0 0
        %1634 = vmatpush1.bf16.msra.mxu0 0
        %1635 = vmatprep.subr.bf16.mxu0 0
        %1636 = vmatpush1.bf16.msra.mxu0 0
        %1637 = vmatprep.subr.bf16.mxu0 0
        %1638 = vmatpush1.bf16.msra.mxu0 0
        %1639 = vmatprep.subr.bf16.mxu0 0
        %1640 = vmatpush1.bf16.msra.mxu0 0
        %1641 = vmatprep.subr.bf16.mxu0 0
        %1642 = vmatpush1.bf16.msra.mxu0 0
        %1643 = vmatprep.subr.bf16.mxu0 0
        %1644 = vmatpush1.bf16.msra.mxu0 0
        %1645 = vmatprep.subr.bf16.mxu0 0
        %1646 = vmatpush1.bf16.msra.mxu0 0
        %1647 = vmatprep.subr.bf16.mxu0 0
        %1648 = vmatpush1.bf16.msra.mxu0 0
        %1649 = vmatprep.subr.bf16.mxu0 0
        %1650 = vmatpush1.bf16.msra.mxu0 0
        %1651 = vmatprep.subr.bf16.mxu0 0
        %1652 = vmatpush1.bf16.msra.mxu0 0
        %1653 = vmatprep.subr.bf16.mxu0 0
        %1654 = vmatpush1.bf16.msra.mxu0 0
        %1655 = vmatprep.subr.bf16.mxu0 0
        %1656 = vmatpush1.bf16.msra.mxu0 0
        %1657 = vmatprep.subr.bf16.mxu0 0
        %1658 = vmatpush1.bf16.msra.mxu0 0
        %1659 = vmatprep.mubr.bf16.mxu0 0
        %1660 = vmatmul.mubr.bf16.gmra.mrb[0].mxu0 %v1625
        %v1661 = vpop.f32.mrb[0].mxu0
        %v1662 = vadd.f32 0.0, %v1661
        %v1663 = vpop.f32.mrb[0].mxu0
        %v1664 = vpop.f32.mrb[0].mxu0
        %v1665 = vadd.f32 0.0, %v1664
        %v1666 = vpop.f32.mrb[0].mxu0
        %1667 = vdwg.mxu0
        %v1668 = vpack.c.bf16 %v1533, %v1530
        %v1669 = vpack.c.bf16 %v1577, %v1574
        %v1670 = vpack.c.bf16 %v1621, %v1618
        %v1671 = vpack.c.bf16 %v1665, %v1662
        %v1676 = vunpack.c.l.b16 %v1169
        %v1677 = vunpack.c.l.b16 %v1170
        %v1678 = vunpack.c.l.b16 %v1171
        %v1679 = vunpack.c.l.b16 %v1172
        %v1680 = vpack.c.b16 %v1677, %v1676
        %v1681 = vpack.c.b16 %v1679, %v1678
        %v1685 = vsel %vm1210, %v1668, 0
        %1687 = vmatprep.subr.bf16.mxu0 0
        %1688 = vmatpush1.bf16.msra.mxu0 %v1680
        %1689 = vmatprep.subr.bf16.mxu0 0
        %1690 = vmatpush1.bf16.msra.mxu0 %v1681
        %1691 = vmatprep.subr.bf16.mxu0 0
        %1692 = vmatpush1.bf16.msra.mxu0 0
        %1693 = vmatprep.subr.bf16.mxu0 0
        %1694 = vmatpush1.bf16.msra.mxu0 0
        %1695 = vmatprep.subr.bf16.mxu0 0
        %1696 = vmatpush1.bf16.msra.mxu0 0
        %1697 = vmatprep.subr.bf16.mxu0 0
        %1698 = vmatpush1.bf16.msra.mxu0 0
        %1699 = vmatprep.subr.bf16.mxu0 0
        %1700 = vmatpush1.bf16.msra.mxu0 0
        %1701 = vmatprep.subr.bf16.mxu0 0
        %1702 = vmatpush1.bf16.msra.mxu0 0
        %1703 = vmatprep.subr.bf16.mxu0 0
        %1704 = vmatpush1.bf16.msra.mxu0 0
        %1705 = vmatprep.subr.bf16.mxu0 0
        %1706 = vmatpush1.bf16.msra.mxu0 0
        %1707 = vmatprep.subr.bf16.mxu0 0
        %1708 = vmatpush1.bf16.msra.mxu0 0
        %1709 = vmatprep.subr.bf16.mxu0 0
        %1710 = vmatpush1.bf16.msra.mxu0 0
        %1711 = vmatprep.subr.bf16.mxu0 0
        %1712 = vmatpush1.bf16.msra.mxu0 0
        %1713 = vmatprep.subr.bf16.mxu0 0
        %1714 = vmatpush1.bf16.msra.mxu0 0
        %1715 = vmatprep.subr.bf16.mxu0 0
        %1716 = vmatpush1.bf16.msra.mxu0 0
        %1717 = vmatprep.subr.bf16.mxu0 0
        %1718 = vmatpush1.bf16.msra.mxu0 0
        %1719 = vmatprep.mubr.bf16.mxu0 0
        %1720 = vmatmul.mubr.bf16.gmra.mrb[0].mxu0 %v1685
        %v1721 = vpop.f32.mrb[0].mxu0
        %v1722 = vadd.f32 0.0, %v1721
        %v1723 = vpop.f32.mrb[0].mxu0
        %v1724 = vpop.f32.mrb[0].mxu0
        %v1725 = vadd.f32 0.0, %v1724
        %v1726 = vpop.f32.mrb[0].mxu0
        %1727 = vdwg.mxu0
        %v1732 = vunpack.c.l.b16 %v1173
        %v1733 = vunpack.c.l.b16 %v1174
        %v1734 = vunpack.c.l.b16 %v1175
        %v1735 = vunpack.c.l.b16 %v1176
        %v1736 = vpack.c.b16 %v1733, %v1732
        %v1737 = vpack.c.b16 %v1735, %v1734
        %v1741 = vsel %vm1210, %v1669, 0
        %1743 = vmatprep.subr.bf16.mxu0 0
        %1744 = vmatpush1.bf16.msra.mxu0 %v1736
        %1745 = vmatprep.subr.bf16.mxu0 0
        %1746 = vmatpush1.bf16.msra.mxu0 %v1737
        %1747 = vmatprep.subr.bf16.mxu0 0
        %1748 = vmatpush1.bf16.msra.mxu0 0
        %1749 = vmatprep.subr.bf16.mxu0 0
        %1750 = vmatpush1.bf16.msra.mxu0 0
        %1751 = vmatprep.subr.bf16.mxu0 0
        %1752 = vmatpush1.bf16.msra.mxu0 0
        %1753 = vmatprep.subr.bf16.mxu0 0
        %1754 = vmatpush1.bf16.msra.mxu0 0
        %1755 = vmatprep.subr.bf16.mxu0 0
        %1756 = vmatpush1.bf16.msra.mxu0 0
        %1757 = vmatprep.subr.bf16.mxu0 0
        %1758 = vmatpush1.bf16.msra.mxu0 0
        %1759 = vmatprep.subr.bf16.mxu0 0
        %1760 = vmatpush1.bf16.msra.mxu0 0
        %1761 = vmatprep.subr.bf16.mxu0 0
        %1762 = vmatpush1.bf16.msra.mxu0 0
        %1763 = vmatprep.subr.bf16.mxu0 0
        %1764 = vmatpush1.bf16.msra.mxu0 0
        %1765 = vmatprep.subr.bf16.mxu0 0
        %1766 = vmatpush1.bf16.msra.mxu0 0
        %1767 = vmatprep.subr.bf16.mxu0 0
        %1768 = vmatpush1.bf16.msra.mxu0 0
        %1769 = vmatprep.subr.bf16.mxu0 0
        %1770 = vmatpush1.bf16.msra.mxu0 0
        %1771 = vmatprep.subr.bf16.mxu0 0
        %1772 = vmatpush1.bf16.msra.mxu0 0
        %1773 = vmatprep.subr.bf16.mxu0 0
        %1774 = vmatpush1.bf16.msra.mxu0 0
        %1775 = vmatprep.mubr.bf16.mxu0 0
        %1776 = vmatmul.mubr.bf16.gmra.mrb[0].mxu0 %v1741
        %v1777 = vpop.f32.mrb[0].mxu0
        %v1778 = vadd.f32 0.0, %v1777
        %v1779 = vpop.f32.mrb[0].mxu0
        %v1780 = vpop.f32.mrb[0].mxu0
        %v1781 = vadd.f32 0.0, %v1780
        %v1782 = vpop.f32.mrb[0].mxu0
        %1783 = vdwg.mxu0
        %v1788 = vunpack.c.l.b16 %v1177
        %v1789 = vunpack.c.l.b16 %v1178
        %v1790 = vunpack.c.l.b16 %v1179
        %v1791 = vunpack.c.l.b16 %v1180
        %v1792 = vpack.c.b16 %v1789, %v1788
        %v1793 = vpack.c.b16 %v1791, %v1790
        %v1797 = vsel %vm1210, %v1670, 0
        %1799 = vmatprep.subr.bf16.mxu0 0
        %1800 = vmatpush1.bf16.msra.mxu0 %v1792
        %1801 = vmatprep.subr.bf16.mxu0 0
        %1802 = vmatpush1.bf16.msra.mxu0 %v1793
        %1803 = vmatprep.subr.bf16.mxu0 0
        %1804 = vmatpush1.bf16.msra.mxu0 0
        %1805 = vmatprep.subr.bf16.mxu0 0
        %1806 = vmatpush1.bf16.msra.mxu0 0
        %1807 = vmatprep.subr.bf16.mxu0 0
        %1808 = vmatpush1.bf16.msra.mxu0 0
        %1809 = vmatprep.subr.bf16.mxu0 0
        %1810 = vmatpush1.bf16.msra.mxu0 0
        %1811 = vmatprep.subr.bf16.mxu0 0
        %1812 = vmatpush1.bf16.msra.mxu0 0
        %1813 = vmatprep.subr.bf16.mxu0 0
        %1814 = vmatpush1.bf16.msra.mxu0 0
        %1815 = vmatprep.subr.bf16.mxu0 0
        %1816 = vmatpush1.bf16.msra.mxu0 0
        %1817 = vmatprep.subr.bf16.mxu0 0
        %1818 = vmatpush1.bf16.msra.mxu0 0
        %1819 = vmatprep.subr.bf16.mxu0 0
        %1820 = vmatpush1.bf16.msra.mxu0 0
        %1821 = vmatprep.subr.bf16.mxu0 0
        %1822 = vmatpush1.bf16.msra.mxu0 0
        %1823 = vmatprep.subr.bf16.mxu0 0
        %1824 = vmatpush1.bf16.msra.mxu0 0
        %1825 = vmatprep.subr.bf16.mxu0 0
        %1826 = vmatpush1.bf16.msra.mxu0 0
        %1827 = vmatprep.subr.bf16.mxu0 0
        %1828 = vmatpush1.bf16.msra.mxu0 0
        %1829 = vmatprep.subr.bf16.mxu0 0
        %1830 = vmatpush1.bf16.msra.mxu0 0
        %1831 = vmatprep.mubr.bf16.mxu0 0
        %1832 = vmatmul.mubr.bf16.gmra.mrb[0].mxu0 %v1797
        %v1833 = vpop.f32.mrb[0].mxu0
        %v1834 = vadd.f32 0.0, %v1833
        %v1835 = vpop.f32.mrb[0].mxu0
        %v1836 = vpop.f32.mrb[0].mxu0
        %v1837 = vadd.f32 0.0, %v1836
        %v1838 = vpop.f32.mrb[0].mxu0
        %1839 = vdwg.mxu0
        %v1844 = vunpack.c.l.b16 %v1181
        %v1845 = vunpack.c.l.b16 %v1182
        %v1846 = vunpack.c.l.b16 %v1183
        %v1847 = vunpack.c.l.b16 %v1184
        %v1848 = vpack.c.b16 %v1845, %v1844
        %v1849 = vpack.c.b16 %v1847, %v1846
        %v1853 = vsel %vm1210, %v1671, 0
        %1855 = vmatprep.subr.bf16.mxu0 0
        %1856 = vmatpush1.bf16.msra.mxu0 %v1848
        %1857 = vmatprep.subr.bf16.mxu0 0
        %1858 = vmatpush1.bf16.msra.mxu0 %v1849
        %1859 = vmatprep.subr.bf16.mxu0 0
        %1860 = vmatpush1.bf16.msra.mxu0 0
        %1861 = vmatprep.subr.bf16.mxu0 0
        %1862 = vmatpush1.bf16.msra.mxu0 0
        %1863 = vmatprep.subr.bf16.mxu0 0
        %1864 = vmatpush1.bf16.msra.mxu0 0
        %1865 = vmatprep.subr.bf16.mxu0 0
        %1866 = vmatpush1.bf16.msra.mxu0 0
        %1867 = vmatprep.subr.bf16.mxu0 0
        %1868 = vmatpush1.bf16.msra.mxu0 0
        %1869 = vmatprep.subr.bf16.mxu0 0
        %1870 = vmatpush1.bf16.msra.mxu0 0
        %1871 = vmatprep.subr.bf16.mxu0 0
        %1872 = vmatpush1.bf16.msra.mxu0 0
        %1873 = vmatprep.subr.bf16.mxu0 0
        %1874 = vmatpush1.bf16.msra.mxu0 0
        %1875 = vmatprep.subr.bf16.mxu0 0
        %1876 = vmatpush1.bf16.msra.mxu0 0
        %1877 = vmatprep.subr.bf16.mxu0 0
        %1878 = vmatpush1.bf16.msra.mxu0 0
        %1879 = vmatprep.subr.bf16.mxu0 0
        %1880 = vmatpush1.bf16.msra.mxu0 0
        %1881 = vmatprep.subr.bf16.mxu0 0
        %1882 = vmatpush1.bf16.msra.mxu0 0
        %1883 = vmatprep.subr.bf16.mxu0 0
        %1884 = vmatpush1.bf16.msra.mxu0 0
        %1885 = vmatprep.subr.bf16.mxu0 0
        %1886 = vmatpush1.bf16.msra.mxu0 0
        %1887 = vmatprep.mubr.bf16.mxu0 0
        %1888 = vmatmul.mubr.bf16.gmra.mrb[0].mxu0 %v1853
        %v1889 = vpop.f32.mrb[0].mxu0
        %v1890 = vadd.f32 0.0, %v1889
        %v1891 = vpop.f32.mrb[0].mxu0
        %v1892 = vpop.f32.mrb[0].mxu0
        %v1893 = vadd.f32 0.0, %v1892
        %v1894 = vpop.f32.mrb[0].mxu0
        %1895 = vdwg.mxu0
        %v1896 = vadd.f32 %v1722, %v1778
        %v1897 = vadd.f32 %v1896, %v1834
        %v1898 = vadd.f32 %v1897, %v1890
        %v1899 = vadd.f32 %v1725, %v1781
        %v1900 = vadd.f32 %v1899, %v1837
        %v1901 = vadd.f32 %v1900, %v1893
        %v1903 = vlaneseq
        %v1904 = vshrl.u32 %v1903, 7
        %v1905 = vsub.s32 0, %v1904
        %v1906 = vrot.slane %v1185, %v1905
        %v1908 = vadd.f32 %v1898, %v1906
        %v1909 = vadd.f32 %v1901, %v1906
        %v1910 = vadd.f32 %v857, %v1908
        %v1911 = vadd.f32 %v858, %v1909
        %v1912 = vld [vmem:[%s8] sm:$0x1]
        %v1913 = vld [vmem:[%s9] sm:$0x1]
        %1914 = vadd.xlane.f32.xlu0 %v1910
        %v1915 = vpop.xlane.xlu0 %1914
        %1916 = vadd.xlane.f32.xlu0 %v1911
        %v1917 = vpop.xlane.xlu0 %1916
        %v1918 = vmul.f32 %v1915, %v869
        %v1919 = vmul.f32 %v1917, %v869
        %v1920 = vsub.f32 %v1910, %v1918
        %v1921 = vsub.f32 %v1911, %v1919
        %v1922 = vmul.f32 %v1920, %v1920
        %v1923 = vmul.f32 %v1921, %v1921
        %1924 = vadd.xlane.f32.xlu0 %v1922
        %v1925 = vpop.xlane.xlu0 %1924
        %1926 = vadd.xlane.f32.xlu0 %v1923
        %v1927 = vpop.xlane.xlu0 %1926
        %v1928 = vmul.f32 %v1925, %v869
        %v1929 = vmul.f32 %v1927, %v869
        %v1930 = vadd.f32 %v1928, 1e-05
        %v1931 = vadd.f32 %v1929, 1e-05
        %v1932 = vrsqrt.pop %v1930
        %v1933 = vrsqrt.pop %v1931
        %v1934 = vmul.f32 %v1920, %v1932
        %v1935 = vmul.f32 %v1921, %v1933
        %v1937 = vlaneseq
        %v1938 = vshrl.u32 %v1937, 7
        %v1939 = vsub.s32 0, %v1938
        %v1940 = vrot.slane %v1912, %v1939
        %v1942 = vmul.f32 %v1934, %v1940
        %v1943 = vmul.f32 %v1935, %v1940
        %v1945 = vlaneseq
        %v1946 = vshrl.u32 %v1945, 7
        %v1947 = vsub.s32 0, %v1946
        %v1948 = vrot.slane %v1913, %v1947
        %v1950 = vadd.f32 %v1942, %v1948
        %v1951 = vadd.f32 %v1943, %v1948
        %v1952 = vpack.c.bf16 %v1951, %v1950
        %v1953 = vld [vmem:[#allocation11] sm:$0xf]
        %v1954 = vld [vmem:[#allocation11 + $0x4] sm:$0xf]
        %v1955 = vld [vmem:[#allocation11 + $0x8] sm:$0xf]
        %v1956 = vld [vmem:[#allocation11 + $0xc] sm:$0xf]
        %v1957 = vld [vmem:[#allocation11 + $0x10] sm:$0xf]
        %v1958 = vld [vmem:[#allocation11 + $0x14] sm:$0xf]
        %v1959 = vld [vmem:[#allocation11 + $0x18] sm:$0xf]
        %v1960 = vld [vmem:[#allocation11 + $0x1c] sm:$0xf]
        %v1961 = vld [vmem:[#allocation11 + $0x20] sm:$0xf]
        %v1962 = vld [vmem:[#allocation11 + $0x24] sm:$0xf]
        %v1963 = vld [vmem:[#allocation11 + $0x28] sm:$0xf]
        %v1964 = vld [vmem:[#allocation11 + $0x2c] sm:$0xf]
        %v1965 = vld [vmem:[#allocation11 + $0x30] sm:$0xf]
        %v1966 = vld [vmem:[#allocation11 + $0x34] sm:$0xf]
        %v1967 = vld [vmem:[#allocation11 + $0x38] sm:$0xf]
        %v1968 = vld [vmem:[#allocation11 + $0x3c] sm:$0xf]
        %v1969 = vld [vmem:[%s11] sm:$0x1]
        %v1971 = vlaneseq
        %v1972 = vshrl.u32 %v1971, 7
        %v1973 = vsub.s32 0, %v1972
        %v1974 = vrot.slane %v1969, %v1973
        %v1992 = vunpack.c.l.b16 %v1953
        %v1993 = vunpack.c.l.b16 %v1954
        %v1994 = vunpack.c.l.b16 %v1955
        %v1995 = vunpack.c.l.b16 %v1956
        %v1996 = vunpack.c.l.b16 %v1957
        %v1997 = vunpack.c.l.b16 %v1958
        %v1998 = vunpack.c.l.b16 %v1959
        %v1999 = vunpack.c.l.b16 %v1960
        %v2000 = vunpack.c.l.b16 %v1961
        %v2001 = vunpack.c.l.b16 %v1962
        %v2002 = vunpack.c.l.b16 %v1963
        %v2003 = vunpack.c.l.b16 %v1964
        %v2004 = vunpack.c.l.b16 %v1965
        %v2005 = vunpack.c.l.b16 %v1966
        %v2006 = vunpack.c.l.b16 %v1967
        %v2007 = vunpack.c.l.b16 %v1968
        %v2008 = vpack.c.b16 %v1993, %v1992
        %v2009 = vpack.c.b16 %v1995, %v1994
        %v2010 = vpack.c.b16 %v1997, %v1996
        %v2011 = vpack.c.b16 %v1999, %v1998
        %v2012 = vpack.c.b16 %v2001, %v2000
        %v2013 = vpack.c.b16 %v2003, %v2002
        %v2014 = vpack.c.b16 %v2005, %v2004
        %v2015 = vpack.c.b16 %v2007, %v2006
        %2024 = vmatprep.subr.bf16.mxu0 0
        %2025 = vmatpush1.bf16.msra.mxu0 %v2008
        %2026 = vmatprep.subr.bf16.mxu0 0
        %2027 = vmatpush1.bf16.msra.mxu0 %v2009
        %2028 = vmatprep.subr.bf16.mxu0 0
        %2029 = vmatpush1.bf16.msra.mxu0 %v2010
        %2030 = vmatprep.subr.bf16.mxu0 0
        %2031 = vmatpush1.bf16.msra.mxu0 %v2011
        %2032 = vmatprep.subr.bf16.mxu0 0
        %2033 = vmatpush1.bf16.msra.mxu0 %v2012
        %2034 = vmatprep.subr.bf16.mxu0 0
        %2035 = vmatpush1.bf16.msra.mxu0 %v2013
        %2036 = vmatprep.subr.bf16.mxu0 0
        %2037 = vmatpush1.bf16.msra.mxu0 %v2014
        %2038 = vmatprep.subr.bf16.mxu0 0
        %2039 = vmatpush1.bf16.msra.mxu0 %v2015
        %2040 = vmatprep.subr.bf16.mxu0 0
        %2041 = vmatpush1.bf16.msra.mxu0 0
        %2042 = vmatprep.subr.bf16.mxu0 0
        %2043 = vmatpush1.bf16.msra.mxu0 0
        %2044 = vmatprep.subr.bf16.mxu0 0
        %2045 = vmatpush1.bf16.msra.mxu0 0
        %2046 = vmatprep.subr.bf16.mxu0 0
        %2047 = vmatpush1.bf16.msra.mxu0 0
        %2048 = vmatprep.subr.bf16.mxu0 0
        %2049 = vmatpush1.bf16.msra.mxu0 0
        %2050 = vmatprep.subr.bf16.mxu0 0
        %2051 = vmatpush1.bf16.msra.mxu0 0
        %2052 = vmatprep.subr.bf16.mxu0 0
        %2053 = vmatpush1.bf16.msra.mxu0 0
        %2054 = vmatprep.subr.bf16.mxu0 0
        %2055 = vmatpush1.bf16.msra.mxu0 0
        %2056 = vmatprep.mubr.bf16.mxu0 0
        %2057 = vmatmul.mubr.bf16.gmra.mrb[0].mxu0 %v1952
        %v2058 = vpop.f32.mrb[0].mxu0
        %v2059 = vadd.f32 %v1974, %v2058
        %v2060 = vpop.f32.mrb[0].mxu0
        %v2061 = vpop.f32.mrb[0].mxu0
        %v2062 = vadd.f32 %v1974, %v2061
        %v2063 = vpop.f32.mrb[0].mxu0
        %2064 = vdwg.mxu0
        %v2065 = vpack.c.bf16 %v2062, %v2059
        %v2066 = vpack.c.bf16 %v860, %v859
        %v2067 = vpack.c.bf16 %v862, %v861
        %v2068 = vld [vmem:[#allocation13] sm:$0xff]
        %v2069 = vld [vmem:[#allocation13 + $0x8] sm:$0xff]
        %v2070 = vld [vmem:[#allocation13 + $0x10] sm:$0xff]
        %v2071 = vld [vmem:[#allocation13 + $0x18] sm:$0xff]
        %v2072 = vld [vmem:[#allocation13 + $0x20] sm:$0xff]
        %v2073 = vld [vmem:[#allocation13 + $0x28] sm:$0xff]
        %v2074 = vld [vmem:[#allocation13 + $0x30] sm:$0xff]
        %v2075 = vld [vmem:[#allocation13 + $0x38] sm:$0xff]
        %v2076 = vld [vmem:[#allocation13 + $0x40] sm:$0xff]
        %v2077 = vld [vmem:[#allocation13 + $0x48] sm:$0xff]
        %v2078 = vld [vmem:[#allocation13 + $0x50] sm:$0xff]
        %v2079 = vld [vmem:[#allocation13 + $0x58] sm:$0xff]
        %v2080 = vld [vmem:[#allocation13 + $0x60] sm:$0xff]
        %v2081 = vld [vmem:[#allocation13 + $0x68] sm:$0xff]
        %v2082 = vld [vmem:[#allocation13 + $0x70] sm:$0xff]
        %v2083 = vld [vmem:[#allocation13 + $0x78] sm:$0xff]
        %v2084 = vld [vmem:[%s13] sm:$0x3]
        %v2086 = vlaneseq
        %v2087 = vshrl.u32 %v2086, 7
        %v2088 = vsub.s32 0, %v2087
        %v2089 = vrot.slane %v2084, %v2088
        %v2090 = vlaneseq
        %v2091 = vshrl.u32 %v2090, 7
        %v2092 = vsub.s32 1, %v2091
        %v2093 = vrot.slane %v2084, %v2092
        %v2112 = vunpack.c.l.b16 %v2068
        %v2113 = vunpack.c.h.b16 %v2068
        %v2114 = vunpack.c.l.b16 %v2069
        %v2115 = vunpack.c.h.b16 %v2069
        %v2116 = vunpack.c.l.b16 %v2070
        %v2117 = vunpack.c.h.b16 %v2070
        %v2118 = vunpack.c.l.b16 %v2071
        %v2119 = vunpack.c.h.b16 %v2071
        %v2120 = vunpack.c.l.b16 %v2072
        %v2121 = vunpack.c.h.b16 %v2072
        %v2122 = vunpack.c.l.b16 %v2073
        %v2123 = vunpack.c.h.b16 %v2073
        %v2124 = vunpack.c.l.b16 %v2074
        %v2125 = vunpack.c.h.b16 %v2074
        %v2126 = vunpack.c.l.b16 %v2075
        %v2127 = vunpack.c.h.b16 %v2075
        %v2128 = vunpack.c.l.b16 %v2076
        %v2129 = vunpack.c.h.b16 %v2076
        %v2130 = vunpack.c.l.b16 %v2077
        %v2131 = vunpack.c.h.b16 %v2077
        %v2132 = vunpack.c.l.b16 %v2078
        %v2133 = vunpack.c.h.b16 %v2078
        %v2134 = vunpack.c.l.b16 %v2079
        %v2135 = vunpack.c.h.b16 %v2079
        %v2136 = vunpack.c.l.b16 %v2080
        %v2137 = vunpack.c.h.b16 %v2080
        %v2138 = vunpack.c.l.b16 %v2081
        %v2139 = vunpack.c.h.b16 %v2081
        %v2140 = vunpack.c.l.b16 %v2082
        %v2141 = vunpack.c.h.b16 %v2082
        %v2142 = vunpack.c.l.b16 %v2083
        %v2143 = vunpack.c.h.b16 %v2083
        %v2144 = vpack.c.b16 %v2114, %v2112
        %v2145 = vpack.c.b16 %v2115, %v2113
        %v2146 = vpack.c.b16 %v2118, %v2116
        %v2147 = vpack.c.b16 %v2119, %v2117
        %v2148 = vpack.c.b16 %v2122, %v2120
        %v2149 = vpack.c.b16 %v2123, %v2121
        %v2150 = vpack.c.b16 %v2126, %v2124
        %v2151 = vpack.c.b16 %v2127, %v2125
        %v2152 = vpack.c.b16 %v2130, %v2128
        %v2153 = vpack.c.b16 %v2131, %v2129
        %v2154 = vpack.c.b16 %v2134, %v2132
        %v2155 = vpack.c.b16 %v2135, %v2133
        %v2156 = vpack.c.b16 %v2138, %v2136
        %v2157 = vpack.c.b16 %v2139, %v2137
        %v2158 = vpack.c.b16 %v2142, %v2140
        %v2159 = vpack.c.b16 %v2143, %v2141
        %2176 = vmatprep.subr.bf16.mxu0 %v2145
        %2177 = vmatpush1.bf16.msra.mxu0 %v2144
        %2178 = vmatprep.subr.bf16.mxu0 %v2147
        %2179 = vmatpush1.bf16.msra.mxu0 %v2146
        %2180 = vmatprep.subr.bf16.mxu0 %v2149
        %2181 = vmatpush1.bf16.msra.mxu0 %v2148
        %2182 = vmatprep.subr.bf16.mxu0 %v2151
        %2183 = vmatpush1.bf16.msra.mxu0 %v2150
        %2184 = vmatprep.subr.bf16.mxu0 %v2153
        %2185 = vmatpush1.bf16.msra.mxu0 %v2152
        %2186 = vmatprep.subr.bf16.mxu0 %v2155
        %2187 = vmatpush1.bf16.msra.mxu0 %v2154
        %2188 = vmatprep.subr.bf16.mxu0 %v2157
        %2189 = vmatpush1.bf16.msra.mxu0 %v2156
        %2190 = vmatprep.subr.bf16.mxu0 %v2159
        %2191 = vmatpush1.bf16.msra.mxu0 %v2158
        %2192 = vmatprep.subr.bf16.mxu0 0
        %2193 = vmatpush1.bf16.msra.mxu0 0
        %2194 = vmatprep.subr.bf16.mxu0 0
        %2195 = vmatpush1.bf16.msra.mxu0 0
        %2196 = vmatprep.subr.bf16.mxu0 0
        %2197 = vmatpush1.bf16.msra.mxu0 0
        %2198 = vmatprep.subr.bf16.mxu0 0
        %2199 = vmatpush1.bf16.msra.mxu0 0
        %2200 = vmatprep.subr.bf16.mxu0 0
        %2201 = vmatpush1.bf16.msra.mxu0 0
        %2202 = vmatprep.subr.bf16.mxu0 0
        %2203 = vmatpush1.bf16.msra.mxu0 0
        %2204 = vmatprep.subr.bf16.mxu0 0
        %2205 = vmatpush1.bf16.msra.mxu0 0
        %2206 = vmatprep.subr.bf16.mxu0 0
        %2207 = vmatpush1.bf16.msra.mxu0 0
        %2208 = vmatprep.mubr.bf16.mxu0 0
        %2209 = vmatmul.mubr.bf16.gmra.mrb[0].mxu0 %v2066
        %v2210 = vpop.f32.mrb[0].mxu0
        %v2211 = vadd.f32 %v2089, %v2210
        %v2212 = vpop.f32.mrb[0].mxu0
        %v2213 = vadd.f32 %v2093, %v2212
        %v2214 = vpop.f32.mrb[0].mxu0
        %v2215 = vadd.f32 %v2089, %v2214
        %v2216 = vpop.f32.mrb[0].mxu0
        %v2217 = vadd.f32 %v2093, %v2216
        %2218 = vmatprep.mubr.bf16.mxu0 0
        %2219 = vmatmul.mubr.bf16.gmra.mrb[0].mxu0 %v2067
        %v2220 = vpop.f32.mrb[0].mxu0
        %v2221 = vadd.f32 %v2089, %v2220
        %v2222 = vpop.f32.mrb[0].mxu0
        %v2223 = vadd.f32 %v2093, %v2222
        %v2224 = vpop.f32.mrb[0].mxu0
        %v2225 = vadd.f32 %v2089, %v2224
        %v2226 = vpop.f32.mrb[0].mxu0
        %v2227 = vadd.f32 %v2093, %v2226
        %2228 = vdwg.mxu0
        %v2229 = vpack.c.bf16 %v2215, %v2211
        %v2230 = vpack.c.bf16 %v2217, %v2213
        %v2231 = vpack.c.bf16 %v2225, %v2221
        %v2232 = vpack.c.bf16 %v2227, %v2223
        %v2233 = vld [vmem:[#allocation14] sm:$0xf]
        %v2234 = vld [vmem:[#allocation14 + $0x4] sm:$0xf]
        %v2235 = vld [vmem:[#allocation14 + $0x8] sm:$0xf]
        %v2236 = vld [vmem:[#allocation14 + $0xc] sm:$0xf]
        %v2237 = vld [vmem:[#allocation14 + $0x10] sm:$0xf]
        %v2238 = vld [vmem:[#allocation14 + $0x14] sm:$0xf]
        %v2239 = vld [vmem:[#allocation14 + $0x18] sm:$0xf]
        %v2240 = vld [vmem:[#allocation14 + $0x1c] sm:$0xf]
        %v2241 = vld [vmem:[#allocation14 + $0x20] sm:$0xf]
        %v2242 = vld [vmem:[#allocation14 + $0x24] sm:$0xf]
        %v2243 = vld [vmem:[#allocation14 + $0x28] sm:$0xf]
        %v2244 = vld [vmem:[#allocation14 + $0x2c] sm:$0xf]
        %v2245 = vld [vmem:[#allocation14 + $0x30] sm:$0xf]
        %v2246 = vld [vmem:[#allocation14 + $0x34] sm:$0xf]
        %v2247 = vld [vmem:[#allocation14 + $0x38] sm:$0xf]
        %v2248 = vld [vmem:[#allocation14 + $0x3c] sm:$0xf]
        %v2249 = vld [vmem:[%s15] sm:$0x1]
        %2251 = vrot.lane.b32.xlu0 %v2065, 96
        %v2252 = vpop.permute.xlu0 %2251
        %2253 = vrot.lane.b32.xlu0 %v2065, 64
        %v2254 = vpop.permute.xlu0 %2253
        %2255 = vrot.lane.b32.xlu0 %v2065, 32
        %v2256 = vpop.permute.xlu0 %2255
        %2259 = vrot.lane.b32.xlu0 %v2229, 96
        %v2260 = vpop.permute.xlu0 %2259
        %2261 = vrot.lane.b32.xlu0 %v2231, 96
        %v2262 = vpop.permute.xlu0 %2261
        %2263 = vrot.lane.b32.xlu0 %v2229, 64
        %v2264 = vpop.permute.xlu0 %2263
        %2265 = vrot.lane.b32.xlu0 %v2231, 64
        %v2266 = vpop.permute.xlu0 %2265
        %2267 = vrot.lane.b32.xlu0 %v2229, 32
        %v2268 = vpop.permute.xlu0 %2267
        %2269 = vrot.lane.b32.xlu0 %v2231, 32
        %v2270 = vpop.permute.xlu0 %2269
        %2273 = vrot.lane.b32.xlu0 %v2230, 96
        %v2274 = vpop.permute.xlu0 %2273
        %2275 = vrot.lane.b32.xlu0 %v2232, 96
        %v2276 = vpop.permute.xlu0 %2275
        %2279 = vrot.lane.b32.xlu0 %v2230, 64
        %v2280 = vpop.permute.xlu0 %2279
        %2281 = vrot.lane.b32.xlu0 %v2232, 64
        %v2282 = vpop.permute.xlu0 %2281
        %2285 = vrot.lane.b32.xlu0 %v2230, 32
        %v2286 = vpop.permute.xlu0 %2285
        %2287 = vrot.lane.b32.xlu0 %v2232, 32
        %v2288 = vpop.permute.xlu0 %2287
        %v2292 = vsel %vm1210, %v2065, 0
        %v2295 = vsel %vm1210, %v2229, 0
        %v2298 = vsel %vm1210, %v2231, 0
        %2300 = vmatprep.subr.bf16.mxu0 0
        %2301 = vmatpush1.bf16.xpose.msra.mxu0 %v2295
        %2302 = vmatprep.subr.bf16.mxu0 0
        %2303 = vmatpush1.bf16.xpose.msra.mxu0 %v2298
        %2304 = vmatprep.subr.bf16.mxu0 0
        %2305 = vmatpush1.bf16.xpose.msra.mxu0 0
        %2306 = vmatprep.subr.bf16.mxu0 0
        %2307 = vmatpush1.bf16.xpose.msra.mxu0 0
        %2308 = vmatprep.subr.bf16.mxu0 0
        %2309 = vmatpush1.bf16.xpose.msra.mxu0 0
        %2310 = vmatprep.subr.bf16.mxu0 0
        %2311 = vmatpush1.bf16.xpose.msra.mxu0 0
        %2312 = vmatprep.subr.bf16.mxu0 0
        %2313 = vmatpush1.bf16.xpose.msra.mxu0 0
        %2314 = vmatprep.subr.bf16.mxu0 0
        %2315 = vmatpush1.bf16.xpose.msra.mxu0 0
        %2316 = vmatprep.subr.bf16.mxu0 0
        %2317 = vmatpush1.bf16.xpose.msra.mxu0 0
        %2318 = vmatprep.subr.bf16.mxu0 0
        %2319 = vmatpush1.bf16.xpose.msra.mxu0 0
        %2320 = vmatprep.subr.bf16.mxu0 0
        %2321 = vmatpush1.bf16.xpose.msra.mxu0 0
        %2322 = vmatprep.subr.bf16.mxu0 0
        %2323 = vmatpush1.bf16.xpose.msra.mxu0 0
        %2324 = vmatprep.subr.bf16.mxu0 0
        %2325 = vmatpush1.bf16.xpose.msra.mxu0 0
        %2326 = vmatprep.subr.bf16.mxu0 0
        %2327 = vmatpush1.bf16.xpose.msra.mxu0 0
        %2328 = vmatprep.subr.bf16.mxu0 0
        %2329 = vmatpush1.bf16.xpose.msra.mxu0 0
        %2330 = vmatprep.subr.bf16.mxu0 0
        %2331 = vmatpush1.bf16.xpose.msra.mxu0 0
        %2332 = vmatprep.mubr.bf16.mxu0 0
        %2333 = vmatmul.mubr.bf16.gmra.mrb[0].mxu0 %v2292
        %v2334 = vpop.f32.mrb[0].mxu0
        %v2335 = vadd.f32 0.0, %v2334
        %v2336 = vpop.f32.mrb[0].mxu0
        %v2337 = vpop.f32.mrb[0].mxu0
        %v2338 = vadd.f32 0.0, %v2337
        %v2339 = vpop.f32.mrb[0].mxu0
        %2340 = vdwg.mxu0
        %v2342 = vsel %vm1210, %v2252, 0
        %v2345 = vsel %vm1210, %v2260, 0
        %v2348 = vsel %vm1210, %v2262, 0
        %2350 = vmatprep.subr.bf16.mxu0 0
        %2351 = vmatpush1.bf16.xpose.msra.mxu0 %v2345
        %2352 = vmatprep.subr.bf16.mxu0 0
        %2353 = vmatpush1.bf16.xpose.msra.mxu0 %v2348
        %2354 = vmatprep.subr.bf16.mxu0 0
        %2355 = vmatpush1.bf16.xpose.msra.mxu0 0
        %2356 = vmatprep.subr.bf16.mxu0 0
        %2357 = vmatpush1.bf16.xpose.msra.mxu0 0
        %2358 = vmatprep.subr.bf16.mxu0 0
        %2359 = vmatpush1.bf16.xpose.msra.mxu0 0
        %2360 = vmatprep.subr.bf16.mxu0 0
        %2361 = vmatpush1.bf16.xpose.msra.mxu0 0
        %2362 = vmatprep.subr.bf16.mxu0 0
        %2363 = vmatpush1.bf16.xpose.msra.mxu0 0
        %2364 = vmatprep.subr.bf16.mxu0 0
        %2365 = vmatpush1.bf16.xpose.msra.mxu0 0
        %2366 = vmatprep.subr.bf16.mxu0 0
        %2367 = vmatpush1.bf16.xpose.msra.mxu0 0
        %2368 = vmatprep.subr.bf16.mxu0 0
        %2369 = vmatpush1.bf16.xpose.msra.mxu0 0
        %2370 = vmatprep.subr.bf16.mxu0 0
        %2371 = vmatpush1.bf16.xpose.msra.mxu0 0
        %2372 = vmatprep.subr.bf16.mxu0 0
        %2373 = vmatpush1.bf16.xpose.msra.mxu0 0
        %2374 = vmatprep.subr.bf16.mxu0 0
        %2375 = vmatpush1.bf16.xpose.msra.mxu0 0
        %2376 = vmatprep.subr.bf16.mxu0 0
        %2377 = vmatpush1.bf16.xpose.msra.mxu0 0
        %2378 = vmatprep.subr.bf16.mxu0 0
        %2379 = vmatpush1.bf16.xpose.msra.mxu0 0
        %2380 = vmatprep.subr.bf16.mxu0 0
        %2381 = vmatpush1.bf16.xpose.msra.mxu0 0
        %2382 = vmatprep.mubr.bf16.mxu0 0
        %2383 = vmatmul.mubr.bf16.gmra.mrb[0].mxu0 %v2342
        %v2384 = vpop.f32.mrb[0].mxu0
        %v2385 = vadd.f32 0.0, %v2384
        %v2386 = vpop.f32.mrb[0].mxu0
        %v2387 = vpop.f32.mrb[0].mxu0
        %v2388 = vadd.f32 0.0, %v2387
        %v2389 = vpop.f32.mrb[0].mxu0
        %2390 = vdwg.mxu0
        %v2392 = vsel %vm1210, %v2254, 0
        %v2395 = vsel %vm1210, %v2264, 0
        %v2398 = vsel %vm1210, %v2266, 0
        %2400 = vmatprep.subr.bf16.mxu0 0
        %2401 = vmatpush1.bf16.xpose.msra.mxu0 %v2395
        %2402 = vmatprep.subr.bf16.mxu0 0
        %2403 = vmatpush1.bf16.xpose.msra.mxu0 %v2398
        %2404 = vmatprep.subr.bf16.mxu0 0
        %2405 = vmatpush1.bf16.xpose.msra.mxu0 0
        %2406 = vmatprep.subr.bf16.mxu0 0
        %2407 = vmatpush1.bf16.xpose.msra.mxu0 0
        %2408 = vmatprep.subr.bf16.mxu0 0
        %2409 = vmatpush1.bf16.xpose.msra.mxu0 0
        %2410 = vmatprep.subr.bf16.mxu0 0
        %2411 = vmatpush1.bf16.xpose.msra.mxu0 0
        %2412 = vmatprep.subr.bf16.mxu0 0
        %2413 = vmatpush1.bf16.xpose.msra.mxu0 0
        %2414 = vmatprep.subr.bf16.mxu0 0
        %2415 = vmatpush1.bf16.xpose.msra.mxu0 0
        %2416 = vmatprep.subr.bf16.mxu0 0
        %2417 = vmatpush1.bf16.xpose.msra.mxu0 0
        %2418 = vmatprep.subr.bf16.mxu0 0
        %2419 = vmatpush1.bf16.xpose.msra.mxu0 0
        %2420 = vmatprep.subr.bf16.mxu0 0
        %2421 = vmatpush1.bf16.xpose.msra.mxu0 0
        %2422 = vmatprep.subr.bf16.mxu0 0
        %2423 = vmatpush1.bf16.xpose.msra.mxu0 0
        %2424 = vmatprep.subr.bf16.mxu0 0
        %2425 = vmatpush1.bf16.xpose.msra.mxu0 0
        %2426 = vmatprep.subr.bf16.mxu0 0
        %2427 = vmatpush1.bf16.xpose.msra.mxu0 0
        %2428 = vmatprep.subr.bf16.mxu0 0
        %2429 = vmatpush1.bf16.xpose.msra.mxu0 0
        %2430 = vmatprep.subr.bf16.mxu0 0
        %2431 = vmatpush1.bf16.xpose.msra.mxu0 0
        %2432 = vmatprep.mubr.bf16.mxu0 0
        %2433 = vmatmul.mubr.bf16.gmra.mrb[0].mxu0 %v2392
        %v2434 = vpop.f32.mrb[0].mxu0
        %v2435 = vadd.f32 0.0, %v2434
        %v2436 = vpop.f32.mrb[0].mxu0
        %v2437 = vpop.f32.mrb[0].mxu0
        %v2438 = vadd.f32 0.0, %v2437
        %v2439 = vpop.f32.mrb[0].mxu0
        %2440 = vdwg.mxu0
        %v2442 = vsel %vm1210, %v2256, 0
        %v2445 = vsel %vm1210, %v2268, 0
        %v2448 = vsel %vm1210, %v2270, 0
        %2450 = vmatprep.subr.bf16.mxu0 0
        %2451 = vmatpush1.bf16.xpose.msra.mxu0 %v2445
        %2452 = vmatprep.subr.bf16.mxu0 0
        %2453 = vmatpush1.bf16.xpose.msra.mxu0 %v2448
        %2454 = vmatprep.subr.bf16.mxu0 0
        %2455 = vmatpush1.bf16.xpose.msra.mxu0 0
        %2456 = vmatprep.subr.bf16.mxu0 0
        %2457 = vmatpush1.bf16.xpose.msra.mxu0 0
        %2458 = vmatprep.subr.bf16.mxu0 0
        %2459 = vmatpush1.bf16.xpose.msra.mxu0 0
        %2460 = vmatprep.subr.bf16.mxu0 0
        %2461 = vmatpush1.bf16.xpose.msra.mxu0 0
        %2462 = vmatprep.subr.bf16.mxu0 0
        %2463 = vmatpush1.bf16.xpose.msra.mxu0 0
        %2464 = vmatprep.subr.bf16.mxu0 0
        %2465 = vmatpush1.bf16.xpose.msra.mxu0 0
        %2466 = vmatprep.subr.bf16.mxu0 0
        %2467 = vmatpush1.bf16.xpose.msra.mxu0 0
        %2468 = vmatprep.subr.bf16.mxu0 0
        %2469 = vmatpush1.bf16.xpose.msra.mxu0 0
        %2470 = vmatprep.subr.bf16.mxu0 0
        %2471 = vmatpush1.bf16.xpose.msra.mxu0 0
        %2472 = vmatprep.subr.bf16.mxu0 0
        %2473 = vmatpush1.bf16.xpose.msra.mxu0 0
        %2474 = vmatprep.subr.bf16.mxu0 0
        %2475 = vmatpush1.bf16.xpose.msra.mxu0 0
        %2476 = vmatprep.subr.bf16.mxu0 0
        %2477 = vmatpush1.bf16.xpose.msra.mxu0 0
        %2478 = vmatprep.subr.bf16.mxu0 0
        %2479 = vmatpush1.bf16.xpose.msra.mxu0 0
        %2480 = vmatprep.subr.bf16.mxu0 0
        %2481 = vmatpush1.bf16.xpose.msra.mxu0 0
        %2482 = vmatprep.mubr.bf16.mxu0 0
        %2483 = vmatmul.mubr.bf16.gmra.mrb[0].mxu0 %v2442
        %v2484 = vpop.f32.mrb[0].mxu0
        %v2485 = vadd.f32 0.0, %v2484
        %v2486 = vpop.f32.mrb[0].mxu0
        %v2487 = vpop.f32.mrb[0].mxu0
        %v2488 = vadd.f32 0.0, %v2487
        %v2489 = vpop.f32.mrb[0].mxu0
        %2490 = vdwg.mxu0
        %v2491 = vsel %vm1210, %v2335, -inf
        %2492 = vmax.xlane.f32.xlu0 %v2491
        %v2493 = vpop.xlane.xlu0 %2492
        %v2494 = vsel %vm1210, %v2338, -inf
        %2495 = vmax.xlane.f32.xlu0 %v2494
        %v2496 = vpop.xlane.xlu0 %2495
        %v2497 = vsel %vm1210, %v2385, -inf
        %2498 = vmax.xlane.f32.xlu0 %v2497
        %v2499 = vpop.xlane.xlu0 %2498
        %v2500 = vsel %vm1210, %v2388, -inf
        %2501 = vmax.xlane.f32.xlu0 %v2500
        %v2502 = vpop.xlane.xlu0 %2501
        %v2503 = vsel %vm1210, %v2435, -inf
        %2504 = vmax.xlane.f32.xlu0 %v2503
        %v2505 = vpop.xlane.xlu0 %2504
        %v2506 = vsel %vm1210, %v2438, -inf
        %2507 = vmax.xlane.f32.xlu0 %v2506
        %v2508 = vpop.xlane.xlu0 %2507
        %v2509 = vsel %vm1210, %v2485, -inf
        %2510 = vmax.xlane.f32.xlu0 %v2509
        %v2511 = vpop.xlane.xlu0 %2510
        %v2512 = vsel %vm1210, %v2488, -inf
        %2513 = vmax.xlane.f32.xlu0 %v2512
        %v2514 = vpop.xlane.xlu0 %2513
        %v2515 = vsub.f32 %v2335, %v2493
        %v2516 = vsub.f32 %v2338, %v2496
        %v2517 = vsub.f32 %v2385, %v2499
        %v2518 = vsub.f32 %v2388, %v2502
        %v2519 = vsub.f32 %v2435, %v2505
        %v2520 = vsub.f32 %v2438, %v2508
        %v2521 = vsub.f32 %v2485, %v2511
        %v2522 = vsub.f32 %v2488, %v2514
        %v2523 = vmul.f32 %v2515, 1.442695
        %v2524 = vpow.pop %v2523
        %v2525 = vmul.f32 %v2516, 1.442695
        %v2526 = vpow.pop %v2525
        %v2527 = vmul.f32 %v2517, 1.442695
        %v2528 = vpow.pop %v2527
        %v2529 = vmul.f32 %v2518, 1.442695
        %v2530 = vpow.pop %v2529
        %v2531 = vmul.f32 %v2519, 1.442695
        %v2532 = vpow.pop %v2531
        %v2533 = vmul.f32 %v2520, 1.442695
        %v2534 = vpow.pop %v2533
        %v2535 = vmul.f32 %v2521, 1.442695
        %v2536 = vpow.pop %v2535
        %v2537 = vmul.f32 %v2522, 1.442695
        %v2538 = vpow.pop %v2537
        %v2539 = vsel %vm1210, %v2524, 0.0
        %2540 = vadd.xlane.f32.xlu0 %v2539
        %v2541 = vpop.xlane.xlu0 %2540
        %v2542 = vsel %vm1210, %v2526, 0.0
        %2543 = vadd.xlane.f32.xlu0 %v2542
        %v2544 = vpop.xlane.xlu0 %2543
        %v2545 = vsel %vm1210, %v2528, 0.0
        %2546 = vadd.xlane.f32.xlu0 %v2545
        %v2547 = vpop.xlane.xlu0 %2546
        %v2548 = vsel %vm1210, %v2530, 0.0
        %2549 = vadd.xlane.f32.xlu0 %v2548
        %v2550 = vpop.xlane.xlu0 %2549
        %v2551 = vsel %vm1210, %v2532, 0.0
        %2552 = vadd.xlane.f32.xlu0 %v2551
        %v2553 = vpop.xlane.xlu0 %2552
        %v2554 = vsel %vm1210, %v2534, 0.0
        %2555 = vadd.xlane.f32.xlu0 %v2554
        %v2556 = vpop.xlane.xlu0 %2555
        %v2557 = vsel %vm1210, %v2536, 0.0
        %2558 = vadd.xlane.f32.xlu0 %v2557
        %v2559 = vpop.xlane.xlu0 %2558
        %v2560 = vsel %vm1210, %v2538, 0.0
        %2561 = vadd.xlane.f32.xlu0 %v2560
        %v2562 = vpop.xlane.xlu0 %2561
        %v2563 = vrcp.pop %v2541
        %v2564 = vrcp.pop %v2544
        %v2565 = vrcp.pop %v2547
        %v2566 = vrcp.pop %v2550
        %v2567 = vrcp.pop %v2553
        %v2568 = vrcp.pop %v2556
        %v2569 = vrcp.pop %v2559
        %v2570 = vrcp.pop %v2562
        %v2571 = vmul.f32 %v2524, %v2563
        %v2572 = vmul.f32 %v2526, %v2564
        %v2573 = vmul.f32 %v2528, %v2565
        %v2574 = vmul.f32 %v2530, %v2566
        %v2575 = vmul.f32 %v2532, %v2567
        %v2576 = vmul.f32 %v2534, %v2568
        %v2577 = vmul.f32 %v2536, %v2569
        %v2578 = vmul.f32 %v2538, %v2570
        %v2579 = vpack.c.bf16 %v2572, %v2571
        %v2580 = vpack.c.bf16 %v2574, %v2573
        %v2581 = vpack.c.bf16 %v2576, %v2575
        %v2582 = vpack.c.bf16 %v2578, %v2577
        %v2584 = vsel %vm1210, %v2579, 0
        %2586 = vmatprep.subr.bf16.mxu0 0
        %2587 = vmatpush1.bf16.msra.mxu0 %v2230
        %2588 = vmatprep.subr.bf16.mxu0 0
        %2589 = vmatpush1.bf16.msra.mxu0 %v2232
        %2590 = vmatprep.subr.bf16.mxu0 0
        %2591 = vmatpush1.bf16.msra.mxu0 0
        %2592 = vmatprep.subr.bf16.mxu0 0
        %2593 = vmatpush1.bf16.msra.mxu0 0
        %2594 = vmatprep.subr.bf16.mxu0 0
        %2595 = vmatpush1.bf16.msra.mxu0 0
        %2596 = vmatprep.subr.bf16.mxu0 0
        %2597 = vmatpush1.bf16.msra.mxu0 0
        %2598 = vmatprep.subr.bf16.mxu0 0
        %2599 = vmatpush1.bf16.msra.mxu0 0
        %2600 = vmatprep.subr.bf16.mxu0 0
        %2601 = vmatpush1.bf16.msra.mxu0 0
        %2602 = vmatprep.subr.bf16.mxu0 0
        %2603 = vmatpush1.bf16.msra.mxu0 0
        %2604 = vmatprep.subr.bf16.mxu0 0
        %2605 = vmatpush1.bf16.msra.mxu0 0
        %2606 = vmatprep.subr.bf16.mxu0 0
        %2607 = vmatpush1.bf16.msra.mxu0 0
        %2608 = vmatprep.subr.bf16.mxu0 0
        %2609 = vmatpush1.bf16.msra.mxu0 0
        %2610 = vmatprep.subr.bf16.mxu0 0
        %2611 = vmatpush1.bf16.msra.mxu0 0
        %2612 = vmatprep.subr.bf16.mxu0 0
        %2613 = vmatpush1.bf16.msra.mxu0 0
        %2614 = vmatprep.subr.bf16.mxu0 0
        %2615 = vmatpush1.bf16.msra.mxu0 0
        %2616 = vmatprep.subr.bf16.mxu0 0
        %2617 = vmatpush1.bf16.msra.mxu0 0
        %2618 = vmatprep.mubr.bf16.mxu0 0
        %2619 = vmatmul.mubr.bf16.gmra.mrb[0].mxu0 %v2584
        %v2620 = vpop.f32.mrb[0].mxu0
        %v2621 = vadd.f32 0.0, %v2620
        %v2622 = vpop.f32.mrb[0].mxu0
        %v2623 = vpop.f32.mrb[0].mxu0
        %v2624 = vadd.f32 0.0, %v2623
        %v2625 = vpop.f32.mrb[0].mxu0
        %2626 = vdwg.mxu0
        %v2628 = vsel %vm1210, %v2580, 0
        %2630 = vmatprep.subr.bf16.mxu0 0
        %2631 = vmatpush1.bf16.msra.mxu0 %v2274
        %2632 = vmatprep.subr.bf16.mxu0 0
        %2633 = vmatpush1.bf16.msra.mxu0 %v2276
        %2634 = vmatprep.subr.bf16.mxu0 0
        %2635 = vmatpush1.bf16.msra.mxu0 0
        %2636 = vmatprep.subr.bf16.mxu0 0
        %2637 = vmatpush1.bf16.msra.mxu0 0
        %2638 = vmatprep.subr.bf16.mxu0 0
        %2639 = vmatpush1.bf16.msra.mxu0 0
        %2640 = vmatprep.subr.bf16.mxu0 0
        %2641 = vmatpush1.bf16.msra.mxu0 0
        %2642 = vmatprep.subr.bf16.mxu0 0
        %2643 = vmatpush1.bf16.msra.mxu0 0
        %2644 = vmatprep.subr.bf16.mxu0 0
        %2645 = vmatpush1.bf16.msra.mxu0 0
        %2646 = vmatprep.subr.bf16.mxu0 0
        %2647 = vmatpush1.bf16.msra.mxu0 0
        %2648 = vmatprep.subr.bf16.mxu0 0
        %2649 = vmatpush1.bf16.msra.mxu0 0
        %2650 = vmatprep.subr.bf16.mxu0 0
        %2651 = vmatpush1.bf16.msra.mxu0 0
        %2652 = vmatprep.subr.bf16.mxu0 0
        %2653 = vmatpush1.bf16.msra.mxu0 0
        %2654 = vmatprep.subr.bf16.mxu0 0
        %2655 = vmatpush1.bf16.msra.mxu0 0
        %2656 = vmatprep.subr.bf16.mxu0 0
        %2657 = vmatpush1.bf16.msra.mxu0 0
        %2658 = vmatprep.subr.bf16.mxu0 0
        %2659 = vmatpush1.bf16.msra.mxu0 0
        %2660 = vmatprep.subr.bf16.mxu0 0
        %2661 = vmatpush1.bf16.msra.mxu0 0
        %2662 = vmatprep.mubr.bf16.mxu0 0
        %2663 = vmatmul.mubr.bf16.gmra.mrb[0].mxu0 %v2628
        %v2664 = vpop.f32.mrb[0].mxu0
        %v2665 = vadd.f32 0.0, %v2664
        %v2666 = vpop.f32.mrb[0].mxu0
        %v2667 = vpop.f32.mrb[0].mxu0
        %v2668 = vadd.f32 0.0, %v2667
        %v2669 = vpop.f32.mrb[0].mxu0
        %2670 = vdwg.mxu0
        %v2672 = vsel %vm1210, %v2581, 0
        %2674 = vmatprep.subr.bf16.mxu0 0
        %2675 = vmatpush1.bf16.msra.mxu0 %v2280
        %2676 = vmatprep.subr.bf16.mxu0 0
        %2677 = vmatpush1.bf16.msra.mxu0 %v2282
        %2678 = vmatprep.subr.bf16.mxu0 0
        %2679 = vmatpush1.bf16.msra.mxu0 0
        %2680 = vmatprep.subr.bf16.mxu0 0
        %2681 = vmatpush1.bf16.msra.mxu0 0
        %2682 = vmatprep.subr.bf16.mxu0 0
        %2683 = vmatpush1.bf16.msra.mxu0 0
        %2684 = vmatprep.subr.bf16.mxu0 0
        %2685 = vmatpush1.bf16.msra.mxu0 0
        %2686 = vmatprep.subr.bf16.mxu0 0
        %2687 = vmatpush1.bf16.msra.mxu0 0
        %2688 = vmatprep.subr.bf16.mxu0 0
        %2689 = vmatpush1.bf16.msra.mxu0 0
        %2690 = vmatprep.subr.bf16.mxu0 0
        %2691 = vmatpush1.bf16.msra.mxu0 0
        %2692 = vmatprep.subr.bf16.mxu0 0
        %2693 = vmatpush1.bf16.msra.mxu0 0
        %2694 = vmatprep.subr.bf16.mxu0 0
        %2695 = vmatpush1.bf16.msra.mxu0 0
        %2696 = vmatprep.subr.bf16.mxu0 0
        %2697 = vmatpush1.bf16.msra.mxu0 0
        %2698 = vmatprep.subr.bf16.mxu0 0
        %2699 = vmatpush1.bf16.msra.mxu0 0
        %2700 = vmatprep.subr.bf16.mxu0 0
        %2701 = vmatpush1.bf16.msra.mxu0 0
        %2702 = vmatprep.subr.bf16.mxu0 0
        %2703 = vmatpush1.bf16.msra.mxu0 0
        %2704 = vmatprep.subr.bf16.mxu0 0
        %2705 = vmatpush1.bf16.msra.mxu0 0
        %2706 = vmatprep.mubr.bf16.mxu0 0
        %2707 = vmatmul.mubr.bf16.gmra.mrb[0].mxu0 %v2672
        %v2708 = vpop.f32.mrb[0].mxu0
        %v2709 = vadd.f32 0.0, %v2708
        %v2710 = vpop.f32.mrb[0].mxu0
        %v2711 = vpop.f32.mrb[0].mxu0
        %v2712 = vadd.f32 0.0, %v2711
        %v2713 = vpop.f32.mrb[0].mxu0
        %2714 = vdwg.mxu0
        %v2716 = vsel %vm1210, %v2582, 0
        %2718 = vmatprep.subr.bf16.mxu0 0
        %2719 = vmatpush1.bf16.msra.mxu0 %v2286
        %2720 = vmatprep.subr.bf16.mxu0 0
        %2721 = vmatpush1.bf16.msra.mxu0 %v2288
        %2722 = vmatprep.subr.bf16.mxu0 0
        %2723 = vmatpush1.bf16.msra.mxu0 0
        %2724 = vmatprep.subr.bf16.mxu0 0
        %2725 = vmatpush1.bf16.msra.mxu0 0
        %2726 = vmatprep.subr.bf16.mxu0 0
        %2727 = vmatpush1.bf16.msra.mxu0 0
        %2728 = vmatprep.subr.bf16.mxu0 0
        %2729 = vmatpush1.bf16.msra.mxu0 0
        %2730 = vmatprep.subr.bf16.mxu0 0
        %2731 = vmatpush1.bf16.msra.mxu0 0
        %2732 = vmatprep.subr.bf16.mxu0 0
        %2733 = vmatpush1.bf16.msra.mxu0 0
        %2734 = vmatprep.subr.bf16.mxu0 0
        %2735 = vmatpush1.bf16.msra.mxu0 0
        %2736 = vmatprep.subr.bf16.mxu0 0
        %2737 = vmatpush1.bf16.msra.mxu0 0
        %2738 = vmatprep.subr.bf16.mxu0 0
        %2739 = vmatpush1.bf16.msra.mxu0 0
        %2740 = vmatprep.subr.bf16.mxu0 0
        %2741 = vmatpush1.bf16.msra.mxu0 0
        %2742 = vmatprep.subr.bf16.mxu0 0
        %2743 = vmatpush1.bf16.msra.mxu0 0
        %2744 = vmatprep.subr.bf16.mxu0 0
        %2745 = vmatpush1.bf16.msra.mxu0 0
        %2746 = vmatprep.subr.bf16.mxu0 0
        %2747 = vmatpush1.bf16.msra.mxu0 0
        %2748 = vmatprep.subr.bf16.mxu0 0
        %2749 = vmatpush1.bf16.msra.mxu0 0
        %2750 = vmatprep.mubr.bf16.mxu0 0
        %2751 = vmatmul.mubr.bf16.gmra.mrb[0].mxu0 %v2716
        %v2752 = vpop.f32.mrb[0].mxu0
        %v2753 = vadd.f32 0.0, %v2752
        %v2754 = vpop.f32.mrb[0].mxu0
        %v2755 = vpop.f32.mrb[0].mxu0
        %v2756 = vadd.f32 0.0, %v2755
        %v2757 = vpop.f32.mrb[0].mxu0
        %2758 = vdwg.mxu0
        %v2759 = vpack.c.bf16 %v2624, %v2621
        %v2760 = vpack.c.bf16 %v2668, %v2665
        %v2761 = vpack.c.bf16 %v2712, %v2709
        %v2762 = vpack.c.bf16 %v2756, %v2753
        %v2767 = vunpack.c.l.b16 %v2233
        %v2768 = vunpack.c.l.b16 %v2234
        %v2769 = vunpack.c.l.b16 %v2235
        %v2770 = vunpack.c.l.b16 %v2236
        %v2771 = vpack.c.b16 %v2768, %v2767
        %v2772 = vpack.c.b16 %v2770, %v2769
        %v2776 = vsel %vm1210, %v2759, 0
        %2778 = vmatprep.subr.bf16.mxu0 0
        %2779 = vmatpush1.bf16.msra.mxu0 %v2771
        %2780 = vmatprep.subr.bf16.mxu0 0
        %2781 = vmatpush1.bf16.msra.mxu0 %v2772
        %2782 = vmatprep.subr.bf16.mxu0 0
        %2783 = vmatpush1.bf16.msra.mxu0 0
        %2784 = vmatprep.subr.bf16.mxu0 0
        %2785 = vmatpush1.bf16.msra.mxu0 0
        %2786 = vmatprep.subr.bf16.mxu0 0
        %2787 = vmatpush1.bf16.msra.mxu0 0
        %2788 = vmatprep.subr.bf16.mxu0 0
        %2789 = vmatpush1.bf16.msra.mxu0 0
        %2790 = vmatprep.subr.bf16.mxu0 0
        %2791 = vmatpush1.bf16.msra.mxu0 0
        %2792 = vmatprep.subr.bf16.mxu0 0
        %2793 = vmatpush1.bf16.msra.mxu0 0
        %2794 = vmatprep.subr.bf16.mxu0 0
        %2795 = vmatpush1.bf16.msra.mxu0 0
        %2796 = vmatprep.subr.bf16.mxu0 0
        %2797 = vmatpush1.bf16.msra.mxu0 0
        %2798 = vmatprep.subr.bf16.mxu0 0
        %2799 = vmatpush1.bf16.msra.mxu0 0
        %2800 = vmatprep.subr.bf16.mxu0 0
        %2801 = vmatpush1.bf16.msra.mxu0 0
        %2802 = vmatprep.subr.bf16.mxu0 0
        %2803 = vmatpush1.bf16.msra.mxu0 0
        %2804 = vmatprep.subr.bf16.mxu0 0
        %2805 = vmatpush1.bf16.msra.mxu0 0
        %2806 = vmatprep.subr.bf16.mxu0 0
        %2807 = vmatpush1.bf16.msra.mxu0 0
        %2808 = vmatprep.subr.bf16.mxu0 0
        %2809 = vmatpush1.bf16.msra.mxu0 0
        %2810 = vmatprep.mubr.bf16.mxu0 0
        %2811 = vmatmul.mubr.bf16.gmra.mrb[0].mxu0 %v2776
        %v2812 = vpop.f32.mrb[0].mxu0
        %v2813 = vadd.f32 0.0, %v2812
        %v2814 = vpop.f32.mrb[0].mxu0
        %v2815 = vpop.f32.mrb[0].mxu0
        %v2816 = vadd.f32 0.0, %v2815
        %v2817 = vpop.f32.mrb[0].mxu0
        %2818 = vdwg.mxu0
        %v2823 = vunpack.c.l.b16 %v2237
        %v2824 = vunpack.c.l.b16 %v2238
        %v2825 = vunpack.c.l.b16 %v2239
        %v2826 = vunpack.c.l.b16 %v2240
        %v2827 = vpack.c.b16 %v2824, %v2823
        %v2828 = vpack.c.b16 %v2826, %v2825
        %v2832 = vsel %vm1210, %v2760, 0
        %2834 = vmatprep.subr.bf16.mxu0 0
        %2835 = vmatpush1.bf16.msra.mxu0 %v2827
        %2836 = vmatprep.subr.bf16.mxu0 0
        %2837 = vmatpush1.bf16.msra.mxu0 %v2828
        %2838 = vmatprep.subr.bf16.mxu0 0
        %2839 = vmatpush1.bf16.msra.mxu0 0
        %2840 = vmatprep.subr.bf16.mxu0 0
        %2841 = vmatpush1.bf16.msra.mxu0 0
        %2842 = vmatprep.subr.bf16.mxu0 0
        %2843 = vmatpush1.bf16.msra.mxu0 0
        %2844 = vmatprep.subr.bf16.mxu0 0
        %2845 = vmatpush1.bf16.msra.mxu0 0
        %2846 = vmatprep.subr.bf16.mxu0 0
        %2847 = vmatpush1.bf16.msra.mxu0 0
        %2848 = vmatprep.subr.bf16.mxu0 0
        %2849 = vmatpush1.bf16.msra.mxu0 0
        %2850 = vmatprep.subr.bf16.mxu0 0
        %2851 = vmatpush1.bf16.msra.mxu0 0
        %2852 = vmatprep.subr.bf16.mxu0 0
        %2853 = vmatpush1.bf16.msra.mxu0 0
        %2854 = vmatprep.subr.bf16.mxu0 0
        %2855 = vmatpush1.bf16.msra.mxu0 0
        %2856 = vmatprep.subr.bf16.mxu0 0
        %2857 = vmatpush1.bf16.msra.mxu0 0
        %2858 = vmatprep.subr.bf16.mxu0 0
        %2859 = vmatpush1.bf16.msra.mxu0 0
        %2860 = vmatprep.subr.bf16.mxu0 0
        %2861 = vmatpush1.bf16.msra.mxu0 0
        %2862 = vmatprep.subr.bf16.mxu0 0
        %2863 = vmatpush1.bf16.msra.mxu0 0
        %2864 = vmatprep.subr.bf16.mxu0 0
        %2865 = vmatpush1.bf16.msra.mxu0 0
        %2866 = vmatprep.mubr.bf16.mxu0 0
        %2867 = vmatmul.mubr.bf16.gmra.mrb[0].mxu0 %v2832
        %v2868 = vpop.f32.mrb[0].mxu0
        %v2869 = vadd.f32 0.0, %v2868
        %v2870 = vpop.f32.mrb[0].mxu0
        %v2871 = vpop.f32.mrb[0].mxu0
        %v2872 = vadd.f32 0.0, %v2871
        %v2873 = vpop.f32.mrb[0].mxu0
        %2874 = vdwg.mxu0
        %v2879 = vunpack.c.l.b16 %v2241
        %v2880 = vunpack.c.l.b16 %v2242
        %v2881 = vunpack.c.l.b16 %v2243
        %v2882 = vunpack.c.l.b16 %v2244
        %v2883 = vpack.c.b16 %v2880, %v2879
        %v2884 = vpack.c.b16 %v2882, %v2881
        %v2888 = vsel %vm1210, %v2761, 0
        %2890 = vmatprep.subr.bf16.mxu0 0
        %2891 = vmatpush1.bf16.msra.mxu0 %v2883
        %2892 = vmatprep.subr.bf16.mxu0 0
        %2893 = vmatpush1.bf16.msra.mxu0 %v2884
        %2894 = vmatprep.subr.bf16.mxu0 0
        %2895 = vmatpush1.bf16.msra.mxu0 0
        %2896 = vmatprep.subr.bf16.mxu0 0
        %2897 = vmatpush1.bf16.msra.mxu0 0
        %2898 = vmatprep.subr.bf16.mxu0 0
        %2899 = vmatpush1.bf16.msra.mxu0 0
        %2900 = vmatprep.subr.bf16.mxu0 0
        %2901 = vmatpush1.bf16.msra.mxu0 0
        %2902 = vmatprep.subr.bf16.mxu0 0
        %2903 = vmatpush1.bf16.msra.mxu0 0
        %2904 = vmatprep.subr.bf16.mxu0 0
        %2905 = vmatpush1.bf16.msra.mxu0 0
        %2906 = vmatprep.subr.bf16.mxu0 0
        %2907 = vmatpush1.bf16.msra.mxu0 0
        %2908 = vmatprep.subr.bf16.mxu0 0
        %2909 = vmatpush1.bf16.msra.mxu0 0
        %2910 = vmatprep.subr.bf16.mxu0 0
        %2911 = vmatpush1.bf16.msra.mxu0 0
        %2912 = vmatprep.subr.bf16.mxu0 0
        %2913 = vmatpush1.bf16.msra.mxu0 0
        %2914 = vmatprep.subr.bf16.mxu0 0
        %2915 = vmatpush1.bf16.msra.mxu0 0
        %2916 = vmatprep.subr.bf16.mxu0 0
        %2917 = vmatpush1.bf16.msra.mxu0 0
        %2918 = vmatprep.subr.bf16.mxu0 0
        %2919 = vmatpush1.bf16.msra.mxu0 0
        %2920 = vmatprep.subr.bf16.mxu0 0
        %2921 = vmatpush1.bf16.msra.mxu0 0
        %2922 = vmatprep.mubr.bf16.mxu0 0
        %2923 = vmatmul.mubr.bf16.gmra.mrb[0].mxu0 %v2888
        %v2924 = vpop.f32.mrb[0].mxu0
        %v2925 = vadd.f32 0.0, %v2924
        %v2926 = vpop.f32.mrb[0].mxu0
        %v2927 = vpop.f32.mrb[0].mxu0
        %v2928 = vadd.f32 0.0, %v2927
        %v2929 = vpop.f32.mrb[0].mxu0
        %2930 = vdwg.mxu0
        %v2935 = vunpack.c.l.b16 %v2245
        %v2936 = vunpack.c.l.b16 %v2246
        %v2937 = vunpack.c.l.b16 %v2247
        %v2938 = vunpack.c.l.b16 %v2248
        %v2939 = vpack.c.b16 %v2936, %v2935
        %v2940 = vpack.c.b16 %v2938, %v2937
        %v2944 = vsel %vm1210, %v2762, 0
        %2946 = vmatprep.subr.bf16.mxu0 0
        %2947 = vmatpush1.bf16.msra.mxu0 %v2939
        %2948 = vmatprep.subr.bf16.mxu0 0
        %2949 = vmatpush1.bf16.msra.mxu0 %v2940
        %2950 = vmatprep.subr.bf16.mxu0 0
        %2951 = vmatpush1.bf16.msra.mxu0 0
        %2952 = vmatprep.subr.bf16.mxu0 0
        %2953 = vmatpush1.bf16.msra.mxu0 0
        %2954 = vmatprep.subr.bf16.mxu0 0
        %2955 = vmatpush1.bf16.msra.mxu0 0
        %2956 = vmatprep.subr.bf16.mxu0 0
        %2957 = vmatpush1.bf16.msra.mxu0 0
        %2958 = vmatprep.subr.bf16.mxu0 0
        %2959 = vmatpush1.bf16.msra.mxu0 0
        %2960 = vmatprep.subr.bf16.mxu0 0
        %2961 = vmatpush1.bf16.msra.mxu0 0
        %2962 = vmatprep.subr.bf16.mxu0 0
        %2963 = vmatpush1.bf16.msra.mxu0 0
        %2964 = vmatprep.subr.bf16.mxu0 0
        %2965 = vmatpush1.bf16.msra.mxu0 0
        %2966 = vmatprep.subr.bf16.mxu0 0
        %2967 = vmatpush1.bf16.msra.mxu0 0
        %2968 = vmatprep.subr.bf16.mxu0 0
        %2969 = vmatpush1.bf16.msra.mxu0 0
        %2970 = vmatprep.subr.bf16.mxu0 0
        %2971 = vmatpush1.bf16.msra.mxu0 0
        %2972 = vmatprep.subr.bf16.mxu0 0
        %2973 = vmatpush1.bf16.msra.mxu0 0
        %2974 = vmatprep.subr.bf16.mxu0 0
        %2975 = vmatpush1.bf16.msra.mxu0 0
        %2976 = vmatprep.subr.bf16.mxu0 0
        %2977 = vmatpush1.bf16.msra.mxu0 0
        %2978 = vmatprep.mubr.bf16.mxu0 0
        %2979 = vmatmul.mubr.bf16.gmra.mrb[0].mxu0 %v2944
        %v2980 = vpop.f32.mrb[0].mxu0
        %v2981 = vadd.f32 0.0, %v2980
        %v2982 = vpop.f32.mrb[0].mxu0
        %v2983 = vpop.f32.mrb[0].mxu0
        %v2984 = vadd.f32 0.0, %v2983
        %v2985 = vpop.f32.mrb[0].mxu0
        %2986 = vdwg.mxu0
        %v2987 = vadd.f32 %v2813, %v2869
        %v2988 = vadd.f32 %v2987, %v2925
        %v2989 = vadd.f32 %v2988, %v2981
        %v2990 = vadd.f32 %v2816, %v2872
        %v2991 = vadd.f32 %v2990, %v2928
        %v2992 = vadd.f32 %v2991, %v2984
        %v2994 = vlaneseq
        %v2995 = vshrl.u32 %v2994, 7
        %v2996 = vsub.s32 0, %v2995
        %v2997 = vrot.slane %v2249, %v2996
        %v2999 = vadd.f32 %v2989, %v2997
        %v3000 = vadd.f32 %v2992, %v2997
        %v3001 = vadd.f32 %v1910, %v2999
        %v3002 = vadd.f32 %v1911, %v3000
        %v3003 = vld [vmem:[%s16] sm:$0x1]
        %v3004 = vld [vmem:[%s17] sm:$0x1]
        %3005 = vadd.xlane.f32.xlu0 %v3001
        %v3006 = vpop.xlane.xlu0 %3005
        %3007 = vadd.xlane.f32.xlu0 %v3002
        %v3008 = vpop.xlane.xlu0 %3007
        %v3009 = vmul.f32 %v3006, %v869
        %v3010 = vmul.f32 %v3008, %v869
        %v3011 = vsub.f32 %v3001, %v3009
        %v3012 = vsub.f32 %v3002, %v3010
        %v3013 = vmul.f32 %v3011, %v3011
        %v3014 = vmul.f32 %v3012, %v3012
        %3015 = vadd.xlane.f32.xlu0 %v3013
        %v3016 = vpop.xlane.xlu0 %3015
        %3017 = vadd.xlane.f32.xlu0 %v3014
        %v3018 = vpop.xlane.xlu0 %3017
        %v3019 = vmul.f32 %v3016, %v869
        %v3020 = vmul.f32 %v3018, %v869
        %v3021 = vadd.f32 %v3019, 1e-05
        %v3022 = vadd.f32 %v3020, 1e-05
        %v3023 = vrsqrt.pop %v3021
        %v3024 = vrsqrt.pop %v3022
        %v3025 = vmul.f32 %v3011, %v3023
        %v3026 = vmul.f32 %v3012, %v3024
        %v3028 = vlaneseq
        %v3029 = vshrl.u32 %v3028, 7
        %v3030 = vsub.s32 0, %v3029
        %v3031 = vrot.slane %v3003, %v3030
        %v3033 = vmul.f32 %v3025, %v3031
        %v3034 = vmul.f32 %v3026, %v3031
        %v3036 = vlaneseq
        %v3037 = vshrl.u32 %v3036, 7
        %v3038 = vsub.s32 0, %v3037
        %v3039 = vrot.slane %v3004, %v3038
        %v3041 = vadd.f32 %v3033, %v3039
        %v3042 = vadd.f32 %v3034, %v3039
        %v3043 = vpack.c.bf16 %v3042, %v3041
        %v3044 = vld [vmem:[#allocation16] sm:$0xff]
        %v3045 = vld [vmem:[#allocation16 + $0x8] sm:$0xff]
        %v3046 = vld [vmem:[#allocation16 + $0x10] sm:$0xff]
        %v3047 = vld [vmem:[#allocation16 + $0x18] sm:$0xff]
        %v3048 = vld [vmem:[#allocation16 + $0x20] sm:$0xff]
        %v3049 = vld [vmem:[#allocation16 + $0x28] sm:$0xff]
        %v3050 = vld [vmem:[#allocation16 + $0x30] sm:$0xff]
        %v3051 = vld [vmem:[#allocation16 + $0x38] sm:$0xff]
        %v3052 = vld [vmem:[#allocation16 + $0x40] sm:$0xff]
        %v3053 = vld [vmem:[#allocation16 + $0x48] sm:$0xff]
        %v3054 = vld [vmem:[#allocation16 + $0x50] sm:$0xff]
        %v3055 = vld [vmem:[#allocation16 + $0x58] sm:$0xff]
        %v3056 = vld [vmem:[#allocation16 + $0x60] sm:$0xff]
        %v3057 = vld [vmem:[#allocation16 + $0x68] sm:$0xff]
        %v3058 = vld [vmem:[#allocation16 + $0x70] sm:$0xff]
        %v3059 = vld [vmem:[#allocation16 + $0x78] sm:$0xff]
        %v3060 = vld [vmem:[%s19] sm:$0x3]
        %v3062 = vlaneseq
        %v3063 = vshrl.u32 %v3062, 7
        %v3064 = vsub.s32 0, %v3063
        %v3065 = vrot.slane %v3060, %v3064
        %v3066 = vlaneseq
        %v3067 = vshrl.u32 %v3066, 7
        %v3068 = vsub.s32 1, %v3067
        %v3069 = vrot.slane %v3060, %v3068
        %v3088 = vunpack.c.l.b16 %v3044
        %v3089 = vunpack.c.h.b16 %v3044
        %v3090 = vunpack.c.l.b16 %v3045
        %v3091 = vunpack.c.h.b16 %v3045
        %v3092 = vunpack.c.l.b16 %v3046
        %v3093 = vunpack.c.h.b16 %v3046
        %v3094 = vunpack.c.l.b16 %v3047
        %v3095 = vunpack.c.h.b16 %v3047
        %v3096 = vunpack.c.l.b16 %v3048
        %v3097 = vunpack.c.h.b16 %v3048
        %v3098 = vunpack.c.l.b16 %v3049
        %v3099 = vunpack.c.h.b16 %v3049
        %v3100 = vunpack.c.l.b16 %v3050
        %v3101 = vunpack.c.h.b16 %v3050
        %v3102 = vunpack.c.l.b16 %v3051
        %v3103 = vunpack.c.h.b16 %v3051
        %v3104 = vunpack.c.l.b16 %v3052
        %v3105 = vunpack.c.h.b16 %v3052
        %v3106 = vunpack.c.l.b16 %v3053
        %v3107 = vunpack.c.h.b16 %v3053
        %v3108 = vunpack.c.l.b16 %v3054
        %v3109 = vunpack.c.h.b16 %v3054
        %v3110 = vunpack.c.l.b16 %v3055
        %v3111 = vunpack.c.h.b16 %v3055
        %v3112 = vunpack.c.l.b16 %v3056
        %v3113 = vunpack.c.h.b16 %v3056
        %v3114 = vunpack.c.l.b16 %v3057
        %v3115 = vunpack.c.h.b16 %v3057
        %v3116 = vunpack.c.l.b16 %v3058
        %v3117 = vunpack.c.h.b16 %v3058
        %v3118 = vunpack.c.l.b16 %v3059
        %v3119 = vunpack.c.h.b16 %v3059
        %v3120 = vpack.c.b16 %v3090, %v3088
        %v3121 = vpack.c.b16 %v3091, %v3089
        %v3122 = vpack.c.b16 %v3094, %v3092
        %v3123 = vpack.c.b16 %v3095, %v3093
        %v3124 = vpack.c.b16 %v3098, %v3096
        %v3125 = vpack.c.b16 %v3099, %v3097
        %v3126 = vpack.c.b16 %v3102, %v3100
        %v3127 = vpack.c.b16 %v3103, %v3101
        %v3128 = vpack.c.b16 %v3106, %v3104
        %v3129 = vpack.c.b16 %v3107, %v3105
        %v3130 = vpack.c.b16 %v3110, %v3108
        %v3131 = vpack.c.b16 %v3111, %v3109
        %v3132 = vpack.c.b16 %v3114, %v3112
        %v3133 = vpack.c.b16 %v3115, %v3113
        %v3134 = vpack.c.b16 %v3118, %v3116
        %v3135 = vpack.c.b16 %v3119, %v3117
        %3152 = vmatprep.subr.bf16.mxu0 %v3121
        %3153 = vmatpush1.bf16.msra.mxu0 %v3120
        %3154 = vmatprep.subr.bf16.mxu0 %v3123
        %3155 = vmatpush1.bf16.msra.mxu0 %v3122
        %3156 = vmatprep.subr.bf16.mxu0 %v3125
        %3157 = vmatpush1.bf16.msra.mxu0 %v3124
        %3158 = vmatprep.subr.bf16.mxu0 %v3127
        %3159 = vmatpush1.bf16.msra.mxu0 %v3126
        %3160 = vmatprep.subr.bf16.mxu0 %v3129
        %3161 = vmatpush1.bf16.msra.mxu0 %v3128
        %3162 = vmatprep.subr.bf16.mxu0 %v3131
        %3163 = vmatpush1.bf16.msra.mxu0 %v3130
        %3164 = vmatprep.subr.bf16.mxu0 %v3133
        %3165 = vmatpush1.bf16.msra.mxu0 %v3132
        %3166 = vmatprep.subr.bf16.mxu0 %v3135
        %3167 = vmatpush1.bf16.msra.mxu0 %v3134
        %3168 = vmatprep.subr.bf16.mxu0 0
        %3169 = vmatpush1.bf16.msra.mxu0 0
        %3170 = vmatprep.subr.bf16.mxu0 0
        %3171 = vmatpush1.bf16.msra.mxu0 0
        %3172 = vmatprep.subr.bf16.mxu0 0
        %3173 = vmatpush1.bf16.msra.mxu0 0
        %3174 = vmatprep.subr.bf16.mxu0 0
        %3175 = vmatpush1.bf16.msra.mxu0 0
        %3176 = vmatprep.subr.bf16.mxu0 0
        %3177 = vmatpush1.bf16.msra.mxu0 0
        %3178 = vmatprep.subr.bf16.mxu0 0
        %3179 = vmatpush1.bf16.msra.mxu0 0
        %3180 = vmatprep.subr.bf16.mxu0 0
        %3181 = vmatpush1.bf16.msra.mxu0 0
        %3182 = vmatprep.subr.bf16.mxu0 0
        %3183 = vmatpush1.bf16.msra.mxu0 0
        %3184 = vmatprep.mubr.bf16.mxu0 0
        %3185 = vmatmul.mubr.bf16.gmra.mrb[0].mxu0 %v3043
        %v3186 = vpop.f32.mrb[0].mxu0
        %v3187 = vadd.f32 %v3065, %v3186
        %v3188 = vpop.f32.mrb[0].mxu0
        %v3189 = vadd.f32 %v3069, %v3188
        %v3190 = vpop.f32.mrb[0].mxu0
        %v3191 = vadd.f32 %v3065, %v3190
        %v3192 = vpop.f32.mrb[0].mxu0
        %v3193 = vadd.f32 %v3069, %v3192
        %3194 = vdwg.mxu0
        %v3195 = vmax.f32 %v3187, 0.0
        %v3196 = vmax.f32 %v3189, 0.0
        %v3197 = vmax.f32 %v3191, 0.0
        %v3198 = vmax.f32 %v3193, 0.0
        %v3199 = vpack.c.bf16 %v3197, %v3195
        %v3200 = vpack.c.bf16 %v3198, %v3196
        %v3201 = vld [vmem:[#allocation17] sm:$0xf]
        %v3202 = vld [vmem:[#allocation17 + $0x4] sm:$0xf]
        %v3203 = vld [vmem:[#allocation17 + $0x8] sm:$0xf]
        %v3204 = vld [vmem:[#allocation17 + $0xc] sm:$0xf]
        %v3205 = vld [vmem:[#allocation17 + $0x10] sm:$0xf]
        %v3206 = vld [vmem:[#allocation17 + $0x14] sm:$0xf]
        %v3207 = vld [vmem:[#allocation17 + $0x18] sm:$0xf]
        %v3208 = vld [vmem:[#allocation17 + $0x1c] sm:$0xf]
        %v3209 = vld [vmem:[#allocation17 + $0x20] sm:$0xf]
        %v3210 = vld [vmem:[#allocation17 + $0x24] sm:$0xf]
        %v3211 = vld [vmem:[#allocation17 + $0x28] sm:$0xf]
        %v3212 = vld [vmem:[#allocation17 + $0x2c] sm:$0xf]
        %v3213 = vld [vmem:[#allocation17 + $0x30] sm:$0xf]
        %v3214 = vld [vmem:[#allocation17 + $0x34] sm:$0xf]
        %v3215 = vld [vmem:[#allocation17 + $0x38] sm:$0xf]
        %v3216 = vld [vmem:[#allocation17 + $0x3c] sm:$0xf]
        %v3217 = vld [vmem:[#allocation17 + $0x40] sm:$0xf]
        %v3218 = vld [vmem:[#allocation17 + $0x44] sm:$0xf]
        %v3219 = vld [vmem:[#allocation17 + $0x48] sm:$0xf]
        %v3220 = vld [vmem:[#allocation17 + $0x4c] sm:$0xf]
        %v3221 = vld [vmem:[#allocation17 + $0x50] sm:$0xf]
        %v3222 = vld [vmem:[#allocation17 + $0x54] sm:$0xf]
        %v3223 = vld [vmem:[#allocation17 + $0x58] sm:$0xf]
        %v3224 = vld [vmem:[#allocation17 + $0x5c] sm:$0xf]
        %v3225 = vld [vmem:[#allocation17 + $0x60] sm:$0xf]
        %v3226 = vld [vmem:[#allocation17 + $0x64] sm:$0xf]
        %v3227 = vld [vmem:[#allocation17 + $0x68] sm:$0xf]
        %v3228 = vld [vmem:[#allocation17 + $0x6c] sm:$0xf]
        %v3229 = vld [vmem:[#allocation17 + $0x70] sm:$0xf]
        %v3230 = vld [vmem:[#allocation17 + $0x74] sm:$0xf]
        %v3231 = vld [vmem:[#allocation17 + $0x78] sm:$0xf]
        %v3232 = vld [vmem:[#allocation17 + $0x7c] sm:$0xf]
        %v3233 = vld [vmem:[%s21] sm:$0x1]
        %v3235 = vlaneseq
        %v3236 = vshrl.u32 %v3235, 7
        %v3237 = vsub.s32 0, %v3236
        %v3238 = vrot.slane %v3233, %v3237
        %v3272 = vunpack.c.l.b16 %v3201
        %v3273 = vunpack.c.l.b16 %v3202
        %v3274 = vunpack.c.l.b16 %v3203
        %v3275 = vunpack.c.l.b16 %v3204
        %v3276 = vunpack.c.l.b16 %v3205
        %v3277 = vunpack.c.l.b16 %v3206
        %v3278 = vunpack.c.l.b16 %v3207
        %v3279 = vunpack.c.l.b16 %v3208
        %v3280 = vunpack.c.l.b16 %v3209
        %v3281 = vunpack.c.l.b16 %v3210
        %v3282 = vunpack.c.l.b16 %v3211
        %v3283 = vunpack.c.l.b16 %v3212
        %v3284 = vunpack.c.l.b16 %v3213
        %v3285 = vunpack.c.l.b16 %v3214
        %v3286 = vunpack.c.l.b16 %v3215
        %v3287 = vunpack.c.l.b16 %v3216
        %v3288 = vunpack.c.l.b16 %v3217
        %v3289 = vunpack.c.l.b16 %v3218
        %v3290 = vunpack.c.l.b16 %v3219
        %v3291 = vunpack.c.l.b16 %v3220
        %v3292 = vunpack.c.l.b16 %v3221
        %v3293 = vunpack.c.l.b16 %v3222
        %v3294 = vunpack.c.l.b16 %v3223
        %v3295 = vunpack.c.l.b16 %v3224
        %v3296 = vunpack.c.l.b16 %v3225
        %v3297 = vunpack.c.l.b16 %v3226
        %v3298 = vunpack.c.l.b16 %v3227
        %v3299 = vunpack.c.l.b16 %v3228
        %v3300 = vunpack.c.l.b16 %v3229
        %v3301 = vunpack.c.l.b16 %v3230
        %v3302 = vunpack.c.l.b16 %v3231
        %v3303 = vunpack.c.l.b16 %v3232
        %v3304 = vpack.c.b16 %v3273, %v3272
        %v3305 = vpack.c.b16 %v3275, %v3274
        %v3306 = vpack.c.b16 %v3277, %v3276
        %v3307 = vpack.c.b16 %v3279, %v3278
        %v3308 = vpack.c.b16 %v3281, %v3280
        %v3309 = vpack.c.b16 %v3283, %v3282
        %v3310 = vpack.c.b16 %v3285, %v3284
        %v3311 = vpack.c.b16 %v3287, %v3286
        %v3312 = vpack.c.b16 %v3289, %v3288
        %v3313 = vpack.c.b16 %v3291, %v3290
        %v3314 = vpack.c.b16 %v3293, %v3292
        %v3315 = vpack.c.b16 %v3295, %v3294
        %v3316 = vpack.c.b16 %v3297, %v3296
        %v3317 = vpack.c.b16 %v3299, %v3298
        %v3318 = vpack.c.b16 %v3301, %v3300
        %v3319 = vpack.c.b16 %v3303, %v3302
        %3336 = vmatprep.subr.bf16.mxu0 0
        %3337 = vmatpush1.bf16.msra.mxu0 %v3304
        %3338 = vmatprep.subr.bf16.mxu0 0
        %3339 = vmatpush1.bf16.msra.mxu0 %v3305
        %3340 = vmatprep.subr.bf16.mxu0 0
        %3341 = vmatpush1.bf16.msra.mxu0 %v3306
        %3342 = vmatprep.subr.bf16.mxu0 0
        %3343 = vmatpush1.bf16.msra.mxu0 %v3307
        %3344 = vmatprep.subr.bf16.mxu0 0
        %3345 = vmatpush1.bf16.msra.mxu0 %v3308
        %3346 = vmatprep.subr.bf16.mxu0 0
        %3347 = vmatpush1.bf16.msra.mxu0 %v3309
        %3348 = vmatprep.subr.bf16.mxu0 0
        %3349 = vmatpush1.bf16.msra.mxu0 %v3310
        %3350 = vmatprep.subr.bf16.mxu0 0
        %3351 = vmatpush1.bf16.msra.mxu0 %v3311
        %3352 = vmatprep.subr.bf16.mxu0 0
        %3353 = vmatpush1.bf16.msra.mxu0 %v3312
        %3354 = vmatprep.subr.bf16.mxu0 0
        %3355 = vmatpush1.bf16.msra.mxu0 %v3313
        %3356 = vmatprep.subr.bf16.mxu0 0
        %3357 = vmatpush1.bf16.msra.mxu0 %v3314
        %3358 = vmatprep.subr.bf16.mxu0 0
        %3359 = vmatpush1.bf16.msra.mxu0 %v3315
        %3360 = vmatprep.subr.bf16.mxu0 0
        %3361 = vmatpush1.bf16.msra.mxu0 %v3316
        %3362 = vmatprep.subr.bf16.mxu0 0
        %3363 = vmatpush1.bf16.msra.mxu0 %v3317
        %3364 = vmatprep.subr.bf16.mxu0 0
        %3365 = vmatpush1.bf16.msra.mxu0 %v3318
        %3366 = vmatprep.subr.bf16.mxu0 0
        %3367 = vmatpush1.bf16.msra.mxu0 %v3319
        %3368 = vmatprep.mubr.bf16.mxu0 %v3200
        %3369 = vmatmul.mubr.bf16.gmra.mrb[0].mxu0 %v3199
        %v3370 = vpop.f32.mrb[0].mxu0
        %v3371 = vadd.f32 %v3238, %v3370
        %v3372 = vpop.f32.mrb[0].mxu0
        %v3373 = vpop.f32.mrb[0].mxu0
        %v3374 = vadd.f32 %v3238, %v3373
        %v3375 = vpop.f32.mrb[0].mxu0
        %3376 = vdwg.mxu0
        %v3377 = vadd.f32 %v3001, %v3371
        %v3378 = vadd.f32 %v3002, %v3374
        %3379 = vst [vmem:[%s855] sm:$0xff] %v3377
        %3380 = vst [vmem:[%s855 + $0x8] sm:$0xff] %v3378
        %s3381 = sand.u32 %s526, 1
        %s3382 = scalar_lea.sflag [#allocation4], %s3381
        %s3383 = sand.u32 %s526, 1
        %s3384 = smul.addr %s3383, 16
        %s3385 = scalar_lea.vmem [#allocation19], %s3384
        // Predicated region
        $region149: #{run_decoder_layer.1} parent=107 // pred_check
          %p3386 = pneg %p536
        $region150: #{run_decoder_layer.1} parent=107 // pred_check_branch
          %3388 = sbr.rel (%p3386) target = $region152
        $region151: #{run_decoder_layer.1} parent=107 // pred_region
          %s3390 = ssub.s32 256, 256
          %3391 = vsyncadd %s3382, %s3390
          %s3392 = smul.addr %s46, 2
          %s3393 = smul.addr %s3392, 128
          %s3394 = scalar_lea.hbm %s22, %s3393
          %s3395 = sshll.u32 %s3385, 4
          %s3396 = int_to_ptr.vmem [resolvable:$true] %s3395
          %3401 = dma.vmem_to_hbm [thread:$0]  %s3396, 256, %s3394, %s3382, 128, 128, 8
        $region152: #{run_decoder_layer.1} parent=107 // pred_fallthru
          _
      $region108: #{run_decoder_layer.1} parent=5 // pred_fallthru
        _
      %p3402 = scmp.le.s32.totalorder 2, %s41
      // Predicated region
      $region153: #{run_decoder_layer.1} parent=5 // pred_check
        %p3403 = pneg %p3402
      $region154: #{run_decoder_layer.1} parent=5 // pred_check_branch
        %3405 = sbr.rel (%p3403) target = $region156
      $region155: #{run_decoder_layer.1} parent=5 // pred_region
        %s3406 = ssub.s32 %s41, 2
        // Predicated region
        $region157: #{run_decoder_layer.1} parent=155 // pred_check
          %p3407 = pneg %p542
        $region158: #{run_decoder_layer.1} parent=155 // pred_check_branch
          %3409 = sbr.rel (%p3407) target = $region160
        $region159: #{run_decoder_layer.1} parent=155 // pred_region
          %s3410 = sand.u32 %s527, 1
          %s3411 = scalar_lea.sflag [#allocation4], %s3410
          %s3412 = sand.u32 %s527, 1
          %s3413 = smul.addr %s3412, 16
          %s3414 = scalar_lea.vmem [#allocation19], %s3413
          %3415 = dma.done %s3411, 256
        $region160: #{run_decoder_layer.1} parent=155 // pred_fallthru
          _
      $region156: #{run_decoder_layer.1} parent=5 // pred_fallthru
        _
    $region6: #{run_decoder_layer.1} parent=1 // loop_footer
      %s45 = sadd.s32 1, %s41
    $region7: #{run_decoder_layer.1} parent=1 // loop_footer_branch
      %40 = sbr.rel target = $region3
    $region8: #{run_decoder_layer.1} parent=1 // loop_exit
      _
    %3416 = vsyncpa [#allocation3], 1
    %s3417 = scalar_lea.sflag [#allocation3], 1
    %3418 = vsyncpa %s3417, 1
    %3419 = vsyncpa [#allocation6], 1
    %s3420 = scalar_lea.sflag [#allocation6], 1
    %3421 = vsyncpa %s3420, 1
    %3422 = vsyncpa [#allocation9], 1
    %3423 = vsyncpa [#allocation12], 1
    %3424 = vsyncpa [#allocation15], 1
    %3425 = vsyncpa [#allocation18], 1
    %3426 = vsyncpa [#allocation4], 1
    %s3427 = scalar_lea.sflag [#allocation4], 1
    %3428 = vsyncpa %s3427, 1

</llo_original>
